<compile_context>
chip_gen: v7x
topology: tpu7x:2x2x1
jax: 0.10.0
libtpu: 0.0.40
codegen_flags: <defaults>
</compile_context>

<pallas_src>
import functools

import numpy as np
import jax
import jax.numpy as jnp
from jax.experimental import pallas as pl
from jax.experimental.pallas import tpu as pltpu


# ----------------------------------------------------------------------------
# Device heuristics + feature probes
# ----------------------------------------------------------------------------
def _device_kind():
    try:
        return jax.devices()[0].device_kind.lower()
    except Exception:
        return ""


def _min_grid_steps():
    """Keep >= 2 'parallel' grid steps only on chips with 2 TensorCores (v7x/v4/v5p);
    single-core v5e/v6e amortize best with one big step."""
    kind = _device_kind()
    single_core = any(t in kind for t in ("v5e", "v5 lite", "v6", "lite"))
    return 1 if single_core else 2


def _vmem_limit_bytes():
    kind = _device_kind()
    if "v7" in kind:
        return 48 * 2 ** 20      # 64 MiB physical / 2 TCs: leave headroom
    if any(t in kind for t in ("v5e", "v5 lite", "v6")):
        return 100 * 2 ** 20     # 128 MiB physical, default scoped limit is much lower
    return None                  # unknown chip: keep the compiler default


@functools.lru_cache(maxsize=None)
def _single_buffer_supported():
    """Feature-probe: can grid-invariant operands be single-buffered via
    pipeline_mode=pl.Buffered(1)?  Falls back to plain (double-buffered) specs."""
    try:
        try:
            mode = pl.Buffered(1)
        except TypeError:
            mode = pl.Buffered(buffer_count=1)
        spec = pl.BlockSpec((8, 128), lambda i: (0, 0), pipeline_mode=mode)

        def _probe_kernel(x_ref, o_ref):
            o_ref[...] = x_ref[...] + 1.0

        fn = pl.pallas_call(
            _probe_kernel,
            out_shape=jax.ShapeDtypeStruct((16, 128), jnp.float32),
            grid_spec=pltpu.PrefetchScalarGridSpec(
                num_scalar_prefetch=0, grid=(2,),
                in_specs=[spec],
                out_specs=pl.BlockSpec((8, 128), lambda i: (i, 0))))
        out = jax.block_until_ready(fn(jnp.zeros((8, 128), jnp.float32)))
        return bool(jnp.all(out == 1.0))
    except Exception:
        return False


def _const_spec(shape):
    """BlockSpec for a grid-invariant operand (fetched once; single-buffered if possible)."""
    nd = len(shape)
    index_map = lambda i: (0,) * nd
    if _single_buffer_supported():
        return pl.BlockSpec(shape, index_map, pipeline_mode=pl.Buffered(1))
    return pl.BlockSpec(shape, index_map)


# ----------------------------------------------------------------------------
# Pallas kernel: window attention over a block of `bw` windows per grid step
# ----------------------------------------------------------------------------
def _window_attn_kernel(x_ref, wqkv_ref, bqkv_ref, seg2_ref, segx2_ref, scale2_ref,
                        bias_ref, wproj_ref, bproj_ref, o_ref):
    bw, n, c = x_ref.shape              # windows/step, tokens/window, channels
    heads, n_w = bias_ref.shape[0], bias_ref.shape[1]
    d = c // heads
    m = bw * n                          # fused token count (MXU M dimension)
    r = bw // n_w                       # mask repetitions inside the step
    f32 = jnp.float32
    bf16 = jnp.bfloat16

    # ---- QKV projection: one big (m, c) @ (c, 3c) matmul (bf16 in, f32 acc).
    #      x arrives in f32 and is cast on the VPU (no host-side bf16 copy). ----
    x = x_ref[...].astype(bf16).reshape(m, c)
    qkv = jnp.dot(x, wqkv_ref[...], preferred_element_type=f32) + bqkv_ref[...]

    # ---- cosine attention: fused per-head L2 normalization for q and k.
    #      One sum-of-squares matmul (m, 2c)@(2c, 2*heads) and one expansion matmul
    #      (m, 2*heads)@(2*heads, 2c), both with bf16 operands / f32 accumulation.
    #      exp(clamped logit_scale) is folded into the q half via a (1, 2c) lane
    #      vector (k half multiplied by 1). ----
    qk = qkv[:, :2 * c]                                                 # (m, 2c) f32
    ssq = jnp.dot((qk * qk).astype(bf16), seg2_ref[...],
                  preferred_element_type=f32)                           # (m, 2*heads)
    inv = jax.lax.rsqrt(jnp.maximum(ssq, 1e-24)).astype(bf16)           # 1/max(||.||,1e-12)
    inv_exp = jnp.dot(inv, segx2_ref[...], preferred_element_type=f32)  # (m, 2c)
    qk_n = (qk * inv_exp * scale2_ref[...]).astype(bf16)                # (m, 2c) bf16
    qn = qk_n[:, :c].reshape(bw, n, c)
    kn = qk_n[:, c:].reshape(bw, n, c)
    vb = qkv[:, 2 * c:].astype(bf16).reshape(bw, n, c)

    # ---- attention core: static head loop, every op batched over the bw windows.
    #      Softmax math stays in f32 (v5e-friendly); exp/reciprocal hit the EUP.
    #      Each head's output is folded straight into the output projection and
    #      accumulated in f32 (no (m, c) VMEM slab, no d-wide masked stores). ----
    wproj = wproj_ref[...]                                              # (c, c) bf16
    out = None
    for h in range(heads):
        qh = qn[:, :, h * d:(h + 1) * d]                                # (bw, n, d)
        kh = kn[:, :, h * d:(h + 1) * d]
        vh = vb[:, :, h * d:(h + 1) * d]
        s = jnp.einsum('wqd,wkd->wqk', qh, kh,
                       preferred_element_type=f32)                      # (bw, n, n)
        # single fused cpb+mask bias add (free leading-dim reshape, broadcast over r)
        s = (s.reshape(r, n_w, n, n) + bias_ref[h][None]).reshape(bw, n, n)
        s = s - jnp.max(s, axis=-1, keepdims=True)
        p = jnp.exp(s)
        # approx reciprocal (EUP): rows sum to 1 within ~1e-3; use approx=False for
        # exact parity with the reference.
        p = p * pl.reciprocal(jnp.sum(p, axis=-1, keepdims=True), approx=True)
        oh = jnp.einsum('wqk,wkd->wqd', p.astype(bf16), vh,
                        preferred_element_type=f32)                     # (bw, n, d)
        contrib = jnp.dot(oh.reshape(m, d).astype(bf16),
                          wproj[h * d:(h + 1) * d, :],
                          preferred_element_type=f32)                   # (m, c)
        out = contrib if out is None else out + contrib

    out = out + bproj_ref[...]
    o_ref[...] = out.reshape(bw, n, c).astype(o_ref.dtype)              # bf16 writeback


# ----------------------------------------------------------------------------
# Wrapper
# ----------------------------------------------------------------------------
def _pick_block_windows(total, n, unit, target_tokens=256, min_steps=1):
    """Windows per grid step: a multiple of `unit` (attention-mask period) dividing
    `total`, grown until the fused token count reaches `target_tokens` (MXU M dim;
    256 fills the 256-wide v6e/v7x MXU) while keeping at least `min_steps` grid steps
    (2 on dual-TensorCore chips, 1 on single-core v5e/v6e)."""
    best = unit
    for w in range(unit, total + 1, unit):
        if total % w:
            continue
        if total // w < min_steps:
            break
        best = w
        if w * n >= target_tokens:
            break
    return best


def window_attention_pallas(x, params, heads, cpb_bias, mask=None):
    """Swin-v2 WindowAttention forward.  x: (num_windows*batch, n, c) float32.
    mask: optional (n_w, n, n) additive attention mask (shifted windows).
    Returns bf16 (the consumer LayerNorm recomputes statistics in f32)."""
    b, n, c = x.shape
    d = c // heads
    f32 = jnp.float32
    bf16 = jnp.bfloat16

    n_w = 1 if mask is None else int(mask.shape[0])
    assert b % n_w == 0, "window count must be a multiple of the mask period"
    bw = _pick_block_windows(b, n, n_w, target_tokens=256, min_steps=_min_grid_steps())
    grid = (b // bw,)

    # Parameter-only preprocessing (tiny, host side). bf16 weights halve weight DMA /
    # VMEM traffic; biases and the combined cpb+mask bias stay f32.
    wqkv_t = params['wqkv'].T.astype(bf16)                               # (c, 3c)
    wproj_t = params['wproj'].T.astype(bf16)                             # (c, c)
    bqkv = jnp.concatenate([params['q_bias'],
                            jnp.zeros_like(params['v_bias']),
                            params['v_bias']])[None, :].astype(f32)      # (1, 3c)
    bproj = params['bproj'][None, :].astype(f32)                         # (1, c)
    scale = jnp.exp(jnp.minimum(params['logit_scale'].reshape(-1),
                                jnp.log(1.0 / 0.01)))                    # (heads,)
    scale2 = jnp.concatenate([jnp.repeat(scale, d),
                              jnp.ones((c,), f32)])[None, :]             # (1, 2c)
    seg = np.repeat(np.eye(heads, dtype=np.float32), d, axis=0)          # (c, heads)
    seg2_np = np.zeros((2 * c, 2 * heads), np.float32)
    seg2_np[:c, :heads] = seg
    seg2_np[c:, heads:] = seg
    seg2 = jnp.asarray(seg2_np, bf16)                                    # (2c, 2*heads)
    segx2 = jnp.asarray(seg2_np.T, bf16)                                 # (2*heads, 2c)
    # cpb + shifted-window mask pre-added into one (heads, n_w, n, n) bias.
    # NOTE: for production layers with many mask windows (large n_w) pass cpb and mask
    # separately instead to keep the constant block small.
    bias = cpb_bias.astype(f32)[:, None]                                 # (heads, 1, n, n)
    if mask is not None:
        bias = bias + mask.astype(f32)[None]                             # (heads, n_w, n, n)

    in_specs = [
        pl.BlockSpec((bw, n, c), lambda i: (i, 0, 0)),                   # x (f32): bw windows/step
        _const_spec((c, 3 * c)),                                         # Wqkv^T   (bf16)
        _const_spec((1, 3 * c)),                                         # fused qkv bias
        _const_spec((2 * c, 2 * heads)),                                 # head-segment reduce
        _const_spec((2 * heads, 2 * c)),                                 # head-segment expand
        _const_spec((1, 2 * c)),                                         # logit-scale lane vector
        _const_spec((heads, n_w, n, n)),                                 # cpb (+ mask) bias
        _const_spec((c, c)),                                             # Wproj^T  (bf16)
        _const_spec((1, c)),                                             # proj bias
    ]

    # NOTE: production ws=7 (n=49) should be padded to 56/64 tokens per window before
    # this call so the (n, n) score tiles stay sublane-aligned; toy n=16 already is.
    return pl.pallas_call(
        _window_attn_kernel,
        out_shape=jax.ShapeDtypeStruct((b, n, c), bf16),
        grid_spec=pltpu.PrefetchScalarGridSpec(
            num_scalar_prefetch=0,
            grid=grid,
            in_specs=in_specs,
            out_specs=pl.BlockSpec((bw, n, c), lambda i: (i, 0, 0)),
        ),
        compiler_params=pltpu.CompilerParams(
            dimension_semantics=("parallel",),
            vmem_limit_bytes=_vmem_limit_bytes()),
    )(x, wqkv_t, bqkv, seg2, segx2, scale2, bias, wproj_t, bproj)


# ----------------------------------------------------------------------------
# Buffers from WindowAttention.__init__ (coords table / relative position index)
# ----------------------------------------------------------------------------
def make_relative_coords_table(wh, ww):
    ch = np.arange(-(wh - 1), wh, dtype=np.float32)
    cw = np.arange(-(ww - 1), ww, dtype=np.float32)
    gh, gw = np.meshgrid(ch, cw, indexing='ij')
    table = np.stack([gh, gw], axis=-1)                  # (2wh-1, 2ww-1, 2)
    table[..., 0] /= (wh - 1)
    table[..., 1] /= (ww - 1)
    table *= 8.0
    table = np.sign(table) * np.log2(np.abs(table) + 1.0) / np.log2(8.0)
    return table.astype(np.float32)


def make_relative_position_index(wh, ww):
    gh, gw = np.meshgrid(np.arange(wh), np.arange(ww), indexing='ij')
    coords = np.stack([gh.reshape(-1), gw.reshape(-1)])  # (2, n)
    rel = coords[:, :, None] - coords[:, None, :]        # (2, n, n)
    rel = rel.transpose(1, 2, 0).copy()                  # (n, n, 2)
    rel[..., 0] += wh - 1
    rel[..., 1] += ww - 1
    rel[..., 0] *= 2 * ww - 1
    return rel.sum(-1).astype(np.int32)                  # (n, n)


def make_attn_mask(hh, ww, ws, shift):
    """Shifted-window additive attention mask, (n_w, n, n) with 0 / -100 entries."""
    if shift == 0:
        return None
    img = np.zeros((hh, ww), np.float32)
    slices = (slice(0, -ws), slice(-ws, -shift), slice(-shift, None))
    cnt = 0
    for hs in slices:
        for wsl in slices:
            img[hs, wsl] = cnt
            cnt += 1
    mw = img.reshape(hh // ws, ws, ww // ws, ws).transpose(0, 2, 1, 3).reshape(-1, ws * ws)
    diff = mw[:, None, :] - mw[:, :, None]
    return jnp.asarray(np.where(diff != 0, -100.0, 0.0).astype(np.float32))


def compute_cpb_bias(params, table, rel_idx, heads):
    # Tiny CPB MLP + gather (parameter-only precompute) -> (heads, n, n).
    t = table.reshape(-1, 2)
    h1 = jnp.maximum(t @ params['cpb_w1'].T + params['cpb_b1'], 0.0)
    tab = h1 @ params['cpb_w2'].T                        # (T, heads)
    n = rel_idx.shape[0]
    cpb = tab[rel_idx.reshape(-1)].reshape(n, n, heads)
    cpb = jnp.transpose(cpb, (2, 0, 1))                  # (heads, n, n)
    return 16.0 * jax.nn.sigmoid(cpb)


# ----------------------------------------------------------------------------
# Pure-JAX reference attention (mirrors the PyTorch forward, dropout=0)
# ----------------------------------------------------------------------------
def window_attention_ref(x, params, heads, cpb_bias, mask=None):
    b, n, c = x.shape
    d = c // heads
    qkv_bias = jnp.concatenate(
        [params['q_bias'], jnp.zeros_like(params['v_bias']), params['v_bias']])
    qkv = x @ params['wqkv'].T + qkv_bias
    q, k, v = jnp.split(qkv, 3, axis=-1)
    to_h = lambda t: t.reshape(b, n, heads, d).transpose(0, 2, 1, 3)
    q, k, v = map(to_h, (q, k, v))
    q = q / jnp.maximum(jnp.linalg.norm(q, axis=-1, keepdims=True), 1e-12)
    k = k / jnp.maximum(jnp.linalg.norm(k, axis=-1, keepdims=True), 1e-12)
    attn = jnp.einsum('bhqd,bhkd->bhqk', q, k)
    scale = jnp.exp(jnp.minimum(params['logit_scale'], jnp.log(1.0 / 0.01)))
    attn = attn * scale[None] + cpb_bias[None]
    if mask is not None:
        n_w = mask.shape[0]
        attn = attn.reshape(b // n_w, n_w, heads, n, n) + mask[None, :, None]
        attn = attn.reshape(b, heads, n, n)
    attn = jax.nn.softmax(attn, axis=-1)
    out = jnp.einsum('bhqk,bhkd->bhqd', attn, v)
    out = out.transpose(0, 2, 1, 3).reshape(b, n, c)
    return out @ params['wproj'].T + params['bproj']


# ----------------------------------------------------------------------------
# Plain-JAX glue: LayerNorm / FFN / window (un)partition / SwinBlock / BasicLayer
# ----------------------------------------------------------------------------
def layer_norm(x, gamma, beta, eps=1e-5):
    x = x.astype(jnp.float32)                            # stats in f32 (input may be bf16)
    mu = jnp.mean(x, axis=-1, keepdims=True)
    var = jnp.mean(jnp.square(x - mu), axis=-1, keepdims=True)
    return (x - mu) * jax.lax.rsqrt(var + eps) * gamma + beta


def feed_forward(x, p):
    h = x @ p['ff_w1'].T + p['ff_b1']
    h = jax.nn.gelu(h, approximate=False)                # nn.GELU() default (erf form)
    return h @ p['ff_w2'].T + p['ff_b2']


def window_partition(x, ws):
    b, hh, ww, c = x.shape
    x = x.reshape(b, hh // ws, ws, ww // ws, ws, c)
    return x.transpose(0, 1, 3, 2, 4, 5).reshape(-1, ws, ws, c)


def window_reverse(windows, ws, hh, ww):
    b = windows.shape[0] // ((hh // ws) * (ww // ws))
    x = windows.reshape(b, hh // ws, ww // ws, ws, ws, -1)
    return x.transpose(0, 1, 3, 2, 4, 5).reshape(b, hh, ww, -1)


def swin_block_forward(x, p, *, input_resolution, heads, window_size, shift_size,
                       table, rel_idx, attn_mask, use_pallas):
    hh, ww = input_resolution
    b, n_tok, c = x.shape
    ws = window_size
    shortcut = x

    xg = x.reshape(b, hh, ww, c)
    if shift_size > 0:
        xg = jnp.roll(xg, shift=(-shift_size, -shift_size), axis=(1, 2))
    xw = window_partition(xg, ws).reshape(-1, ws * ws, c)

    cpb = compute_cpb_bias(p['attn'], table, rel_idx, heads)    # parameter-only precompute
    attn_fn = window_attention_pallas if use_pallas else window_attention_ref
    aw = attn_fn(xw, p['attn'], heads, cpb, mask=attn_mask)

    aw = aw.reshape(-1, ws, ws, c)
    xg = window_reverse(aw, ws, hh, ww)
    if shift_size > 0:
        xg = jnp.roll(xg, shift=(shift_size, shift_size), axis=(1, 2))
    xa = xg.reshape(b, n_tok, c)

    # res-post-norm (Swin v2); Dropout / DropPath are identity at p=0 / eval.
    x = shortcut + layer_norm(xa, p['norm1_g'], p['norm1_b'])
    return x + layer_norm(feed_forward(x, p), p['norm2_g'], p['norm2_b'])


def basic_layer_forward(x, blocks_params, *, input_resolution, heads, window_size,
                        use_pallas=True):
    hh, ww = input_resolution
    ws = window_size
    shift_base = window_size // 2
    if min(input_resolution) <= window_size:                 # SwinTransformerBlock rule
        ws = min(input_resolution)
        shift_base = 0
    table = jnp.asarray(make_relative_coords_table(ws, ws))
    rel_idx = jnp.asarray(make_relative_position_index(ws, ws))
    attn_mask = make_attn_mask(hh, ww, ws, shift_base) if shift_base > 0 else None
    for i, p in enumerate(blocks_params):
        shift = 0 if i % 2 == 0 else shift_base
        x = swin_block_forward(
            x, p, input_resolution=input_resolution, heads=heads, window_size=ws,
            shift_size=shift, table=table, rel_idx=rel_idx,
            attn_mask=attn_mask if shift > 0 else None, use_pallas=use_pallas)
    # TODO(synk): downsample (PatchMerging) is None in this configuration and is not implemented.
    return x


# ----------------------------------------------------------------------------
# Deterministic synthetic parameter init (shapes from the module's __init__)
# ----------------------------------------------------------------------------
def init_attention_params(key, dim, heads):
    ks = jax.random.split(key, 8)
    nrm = lambda k, s: 0.02 * jax.random.normal(k, s, jnp.float32)
    return {
        'wqkv': nrm(ks[0], (3 * dim, dim)),
        'q_bias': nrm(ks[1], (dim,)),
        'v_bias': nrm(ks[2], (dim,)),
        'logit_scale': jnp.full((heads, 1, 1), jnp.log(10.0), jnp.float32),
        'cpb_w1': nrm(ks[3], (512, 2)),
        'cpb_b1': nrm(ks[4], (512,)),
        'cpb_w2': nrm(ks[5], (heads, 512)),
        'wproj': nrm(ks[6], (dim, dim)),
        'bproj': nrm(ks[7], (dim,)),
    }


def init_block_params(key, dim, heads, hidden):
    ka, k1, k2, k3, k4 = jax.random.split(key, 5)
    nrm = lambda k, s: 0.02 * jax.random.normal(k, s, jnp.float32)
    return {
        'attn': init_attention_params(ka, dim, heads),
        'norm1_g': jnp.ones((dim,), jnp.float32),
        'norm1_b': jnp.zeros((dim,), jnp.float32),
        'norm2_g': jnp.ones((dim,), jnp.float32),
        'norm2_b': jnp.zeros((dim,), jnp.float32),
        'ff_w1': nrm(k1, (hidden, dim)),
        'ff_b1': nrm(k2, (hidden,)),
        'ff_w2': nrm(k3, (dim, hidden)),
        'ff_b2': nrm(k4, (dim,)),
    }


# ----------------------------------------------------------------------------
if __name__ == "__main__":
    dim, heads, window_size, depth = 32, 4, 4, 2
    input_resolution = (8, 8)
    batch = 4
    n = window_size * window_size                      # 16 tokens / window
    n_tokens = input_resolution[0] * input_resolution[1]

    key = jax.random.PRNGKey(0)
    kx, kw, kp = jax.random.split(key, 3)
    x = jax.random.normal(kx, (batch, n_tokens, dim), jnp.float32)
    blocks = [init_block_params(k, dim, heads, int(dim * 4.0))
              for k in jax.random.split(kp, depth)]

    # ---- 1) unit checks: Pallas window attention vs all-f32 reference --------
    xw = jax.random.normal(kw, (batch * 4, n, dim), jnp.float32)   # 16 windows
    table = jnp.asarray(make_relative_coords_table(window_size, window_size))
    rel_idx = jnp.asarray(make_relative_position_index(window_size, window_size))
    cpb = compute_cpb_bias(blocks[0]['attn'], table, rel_idx, heads)
    mask = make_attn_mask(input_resolution[0], input_resolution[1],
                          window_size, window_size // 2)

    for msk in (None, mask):                           # regular and shifted-window paths
        got = jax.block_until_ready(
            window_attention_pallas(xw, blocks[0]['attn'], heads, cpb, mask=msk))
        want = window_attention_ref(xw, blocks[0]['attn'], heads, cpb, mask=msk)
        err = float(jnp.max(jnp.abs(got.astype(jnp.float32) - want)))
        # Kernel uses bf16 MXU operands (QKV/norm/PV/proj) with f32 accumulation, an
        # approx softmax reciprocal, and a bf16 output -> a few-1e-3 level diffs.
        assert err < 2e-2, f"window attention mismatch (mask={msk is not None}): {err}"

    # ---- 2) end-to-end BasicLayer (depth=2: regular block + shifted block) ----
    run = functools.partial(basic_layer_forward, input_resolution=input_resolution,
                            heads=heads, window_size=window_size)
    out = jax.block_until_ready(jax.jit(functools.partial(run, use_pallas=True))(x, blocks))
    ref = jax.block_until_ready(jax.jit(functools.partial(run, use_pallas=False))(x, blocks))

    assert out.shape == (batch, n_tokens, dim)
    assert bool(jnp.all(jnp.isfinite(out)))
    # The kernel uses bf16 matmul operands / bf16 output while the reference is all-f32;
    # the two res-post-norm LayerNorms divide by the small (~2e-2) attention/FFN output
    # scale and amplify that operand-rounding difference across the two blocks, so the
    # end-to-end check is normalized to the output magnitude. Per-call kernel accuracy
    # is asserted tightly (2e-2 abs) above.
    err = float(jnp.max(jnp.abs(out - ref)))
    tol = 0.1 * float(jnp.max(jnp.abs(ref))) + 1e-2
    assert err < tol, f"BasicLayer mismatch: max err {err} vs tol {tol}"

    print("KERNEL_OK")
</pallas_src>

<mosaic_0001>
module attributes {stable_mosaic.version = 11 : i64} {
  func.func @_probe_kernel(%arg0: i32, %arg1: memref<8x128xf32, #tpu.memory_space<vmem>>, %arg2: memref<8x128xf32, #tpu.memory_space<vmem>>) attributes {dimension_semantics = [#tpu.dimension_semantics<arbitrary>], iteration_bounds = array<i64: 2>, scalar_prefetch = 0 : i64, scratch_operands = 0 : i64, tpu.core_type = #tpu.core_type<tc>, window_params = [{pipeline_mode = #tpu.pipeline_mode<synchronous>, transform_indices = @transform_0, window_bounds = array<i64: 8, 128>}, {transform_indices = @transform_1, window_bounds = array<i64: 8, 128>}]} {
    %c0 = arith.constant 0 : index
    %c0_0 = arith.constant 0 : index
    %0 = vector.load %arg1[%c0, %c0_0] : memref<8x128xf32, #tpu.memory_space<vmem>>, vector<8x128xf32>
    %cst = arith.constant 1.000000e+00 : f32
    %1 = vector.broadcast %cst : f32 to vector<8x128xf32>
    %2 = arith.addf %0, %1 : vector<8x128xf32>
    %c0_1 = arith.constant 0 : index
    %c0_2 = arith.constant 0 : index
    %3 = vector.load %arg2[%c0_1, %c0_2] : memref<8x128xf32, #tpu.memory_space<vmem>>, vector<8x128xf32>
    tpu.vector_store %arg2[%c0_1, %c0_2], %2 {strides = array<i32>} : memref<8x128xf32, #tpu.memory_space<vmem>>, vector<8x128xf32>,
    return
  }
  func.func @transform_0(%arg0: i32) -> (i32, i32) {
    %c0_i32 = arith.constant 0 : i32
    %c0_i32_0 = arith.constant 0 : i32
    %c0_i32_1 = arith.constant 0 : i32
    return %c0_i32, %c0_i32_0 : i32, i32
  }
  func.func @transform_1(%arg0: i32) -> (i32, i32) {
    %c0_i32 = arith.constant 0 : i32
    %c0_i32_0 = arith.constant 0 : i32
    return %arg0, %c0_i32 : i32, i32
  }
}

module attributes {stable_mosaic.version = 11 : i64} {
  func.func @_window_attn_kernel(%arg0: i32, %arg1: memref<8x16x32xf32, #tpu.memory_space<vmem>>, %arg2: memref<32x96xbf16, #tpu.memory_space<vmem>>, %arg3: memref<1x96xf32, #tpu.memory_space<vmem>>, %arg4: memref<64x8xbf16, #tpu.memory_space<vmem>>, %arg5: memref<8x64xbf16, #tpu.memory_space<vmem>>, %arg6: memref<1x64xf32, #tpu.memory_space<vmem>>, %arg7: memref<4x1x16x16xf32, #tpu.memory_space<vmem>>, %arg8: memref<32x32xbf16, #tpu.memory_space<vmem>>, %arg9: memref<1x32xf32, #tpu.memory_space<vmem>>, %arg10: memref<8x16x32xbf16, #tpu.memory_space<vmem>>) attributes {dimension_semantics = [#tpu.dimension_semantics<parallel>], iteration_bounds = array<i64: 2>, scalar_prefetch = 0 : i64, scratch_operands = 0 : i64, tpu.core_type = #tpu.core_type<tc>, window_params = [{transform_indices = @transform_0, window_bounds = array<i64: 8, 16, 32>}, {pipeline_mode = #tpu.pipeline_mode<synchronous>, transform_indices = @transform_1, window_bounds = array<i64: 32, 96>}, {pipeline_mode = #tpu.pipeline_mode<synchronous>, transform_indices = @transform_2, window_bounds = array<i64: 1, 96>}, {pipeline_mode = #tpu.pipeline_mode<synchronous>, transform_indices = @transform_3, window_bounds = array<i64: 64, 8>}, {pipeline_mode = #tpu.pipeline_mode<synchronous>, transform_indices = @transform_4, window_bounds = array<i64: 8, 64>}, {pipeline_mode = #tpu.pipeline_mode<synchronous>, transform_indices = @transform_5, window_bounds = array<i64: 1, 64>}, {pipeline_mode = #tpu.pipeline_mode<synchronous>, transform_indices = @transform_6, window_bounds = array<i64: 4, 1, 16, 16>}, {pipeline_mode = #tpu.pipeline_mode<synchronous>, transform_indices = @transform_7, window_bounds = array<i64: 32, 32>}, {pipeline_mode = #tpu.pipeline_mode<synchronous>, transform_indices = @transform_8, window_bounds = array<i64: 1, 32>}, {transform_indices = @transform_9, window_bounds = array<i64: 8, 16, 32>}]} {
    %c0 = arith.constant 0 : index
    %c0_0 = arith.constant 0 : index
    %c0_1 = arith.constant 0 : index
    %0 = vector.load %arg1[%c0, %c0_0, %c0_1] : memref<8x16x32xf32, #tpu.memory_space<vmem>>, vector<8x16x32xf32>
    %1 = arith.truncf %0 : vector<8x16x32xf32> to vector<8x16x32xbf16>
    %2 = vector.shape_cast %1 : vector<8x16x32xbf16> to vector<128x32xbf16>
    %c0_2 = arith.constant 0 : index
    %c0_3 = arith.constant 0 : index
    %3 = vector.load %arg2[%c0_2, %c0_3] : memref<32x96xbf16, #tpu.memory_space<vmem>>, vector<32x96xbf16>
    %cst = arith.constant dense<0.000000e+00> : vector<128x96xf32>
    %4 = tpu.matmul %2, %3, %cst {dimension_numbers = #tpu.dot_dimension_numbers<[1], [0], [0], [1], [0, 0, 1, 1], [], []>} : vector<128x32xbf16>, vector<32x96xbf16>, vector<128x96xf32> -> vector<128x96xf32>
    %c0_4 = arith.constant 0 : index
    %c0_5 = arith.constant 0 : index
    %5 = vector.load %arg3[%c0_4, %c0_5] : memref<1x96xf32, #tpu.memory_space<vmem>>, vector<1x96xf32>
    %6 = vector.broadcast %5 : vector<1x96xf32> to vector<128x96xf32>
    %7 = arith.addf %4, %6 : vector<128x96xf32>
    %8 = vector.extract_strided_slice %7 {offsets = [0, 0], sizes = [128, 64], strides = [1, 1]} : vector<128x96xf32> to vector<128x64xf32>
    %9 = arith.mulf %8, %8 : vector<128x64xf32>
    %10 = arith.truncf %9 : vector<128x64xf32> to vector<128x64xbf16>
    %c0_6 = arith.constant 0 : index
    %c0_7 = arith.constant 0 : index
    %11 = vector.load %arg4[%c0_6, %c0_7] : memref<64x8xbf16, #tpu.memory_space<vmem>>, vector<64x8xbf16>
    %cst_8 = arith.constant dense<0.000000e+00> : vector<128x8xf32>
    %12 = tpu.matmul %10, %11, %cst_8 {dimension_numbers = #tpu.dot_dimension_numbers<[1], [0], [0], [1], [0, 0, 1, 1], [], []>} : vector<128x64xbf16>, vector<64x8xbf16>, vector<128x8xf32> -> vector<128x8xf32>
    %cst_9 = arith.constant 1.000000e-24 : f32
    %13 = vector.broadcast %cst_9 : f32 to vector<128x8xf32>
    %14 = arith.maximumf %12, %13 : vector<128x8xf32>
    %15 = math.rsqrt %14 : vector<128x8xf32>
    %16 = arith.truncf %15 : vector<128x8xf32> to vector<128x8xbf16>
    %c0_10 = arith.constant 0 : index
    %c0_11 = arith.constant 0 : index
    %17 = vector.load %arg5[%c0_10, %c0_11] : memref<8x64xbf16, #tpu.memory_space<vmem>>, vector<8x64xbf16>
    %cst_12 = arith.constant dense<0.000000e+00> : vector<128x64xf32>
    %18 = tpu.matmul %16, %17, %cst_12 {dimension_numbers = #tpu.dot_dimension_numbers<[1], [0], [0], [1], [0, 0, 1, 1], [], []>} : vector<128x8xbf16>, vector<8x64xbf16>, vector<128x64xf32> -> vector<128x64xf32>
    %19 = arith.mulf %8, %18 : vector<128x64xf32>
    %c0_13 = arith.constant 0 : index
    %c0_14 = arith.constant 0 : index
    %20 = vector.load %arg6[%c0_13, %c0_14] : memref<1x64xf32, #tpu.memory_space<vmem>>, vector<1x64xf32>
    %21 = vector.broadcast %20 : vector<1x64xf32> to vector<128x64xf32>
    %22 = arith.mulf %19, %21 : vector<128x64xf32>
    %23 = arith.truncf %22 : vector<128x64xf32> to vector<128x64xbf16>
    %24 = vector.extract_strided_slice %23 {offsets = [0, 0], sizes = [128, 32], strides = [1, 1]} : vector<128x64xbf16> to vector<128x32xbf16>
    %25 = vector.shape_cast %24 : vector<128x32xbf16> to vector<8x16x32xbf16>
    %26 = vector.extract_strided_slice %23 {offsets = [0, 32], sizes = [128, 32], strides = [1, 1]} : vector<128x64xbf16> to vector<128x32xbf16>
    %27 = vector.shape_cast %26 : vector<128x32xbf16> to vector<8x16x32xbf16>
    %28 = vector.extract_strided_slice %7 {offsets = [0, 64], sizes = [128, 32], strides = [1, 1]} : vector<128x96xf32> to vector<128x32xf32>
    %29 = arith.truncf %28 : vector<128x32xf32> to vector<128x32xbf16>
    %30 = vector.shape_cast %29 : vector<128x32xbf16> to vector<8x16x32xbf16>
    %c0_15 = arith.constant 0 : index
    %c0_16 = arith.constant 0 : index
    %31 = vector.load %arg8[%c0_15, %c0_16] : memref<32x32xbf16, #tpu.memory_space<vmem>>, vector<32x32xbf16>
    %32 = vector.extract_strided_slice %25 {offsets = [0, 0, 0], sizes = [8, 16, 8], strides = [1, 1, 1]} : vector<8x16x32xbf16> to vector<8x16x8xbf16>
    %33 = vector.extract_strided_slice %27 {offsets = [0, 0, 0], sizes = [8, 16, 8], strides = [1, 1, 1]} : vector<8x16x32xbf16> to vector<8x16x8xbf16>
    %34 = vector.extract_strided_slice %30 {offsets = [0, 0, 0], sizes = [8, 16, 8], strides = [1, 1, 1]} : vector<8x16x32xbf16> to vector<8x16x8xbf16>
    "tpu.trace_start"() <{level = 10 : i32, message = "wqd,wkd->wqk"}> : () -> ()
    %cst_17 = arith.constant dense<0.000000e+00> : vector<8x16x16xf32>
    %35 = tpu.matmul %32, %33, %cst_17 {dimension_numbers = #tpu.dot_dimension_numbers<[2], [2], [1], [1], [0, 0, 0, 1, 1, 1], [0], [0]>} : vector<8x16x8xbf16>, vector<8x16x8xbf16>, vector<8x16x16xf32> -> vector<8x16x16xf32>
    "tpu.trace_stop"() : () -> ()
    %36 = vector.shape_cast %35 : vector<8x16x16xf32> to vector<8x1x16x16xf32>
    %c0_18 = arith.constant 0 : index
    %c0_19 = arith.constant 0 : index
    %c0_20 = arith.constant 0 : index
    %c0_21 = arith.constant 0 : index
    %37 = vector.load %arg7[%c0_18, %c0_19, %c0_20, %c0_21] : memref<4x1x16x16xf32, #tpu.memory_space<vmem>>, vector<1x1x16x16xf32>
    %38 = vector.shape_cast %37 : vector<1x1x16x16xf32> to vector<1x16x16xf32>
    %39 = vector.shape_cast %38 : vector<1x16x16xf32> to vector<1x1x16x16xf32>
    %40 = vector.broadcast %39 : vector<1x1x16x16xf32> to vector<8x1x16x16xf32>
    %41 = arith.addf %36, %40 : vector<8x1x16x16xf32>
    %42 = vector.shape_cast %41 : vector<8x1x16x16xf32> to vector<8x16x16xf32>
    %cst_22 = arith.constant dense<0xFF800000> : vector<8x16xf32>
    %43 = vector.multi_reduction <maximumf>, %42, %cst_22 [2] : vector<8x16x16xf32> to vector<8x16xf32>
    %44 = vector.shape_cast %43 : vector<8x16xf32> to vector<8x16x1xf32>
    %45 = vector.broadcast %44 : vector<8x16x1xf32> to vector<8x16x16xf32>
    %46 = arith.subf %42, %45 : vector<8x16x16xf32>
    %47 = math.exp %46 : vector<8x16x16xf32>
    %cst_23 = arith.constant dense<0.000000e+00> : vector<8x16xf32>
    %48 = vector.multi_reduction <add>, %47, %cst_23 [2] : vector<8x16x16xf32> to vector<8x16xf32>
    %49 = vector.shape_cast %48 : vector<8x16xf32> to vector<8x16x1xf32>
    %50 = tpu.reciprocal %49 {approx = true} : vector<8x16x1xf32> -> vector<8x16x1xf32>
    %51 = vector.broadcast %50 : vector<8x16x1xf32> to vector<8x16x16xf32>
    %52 = arith.mulf %47, %51 : vector<8x16x16xf32>
    %53 = arith.truncf %52 : vector<8x16x16xf32> to vector<8x16x16xbf16>
    "tpu.trace_start"() <{level = 10 : i32, message = "wqk,wkd->wqd"}> : () -> ()
    %cst_24 = arith.constant dense<0.000000e+00> : vector<8x16x8xf32>
    %54 = tpu.matmul %53, %34, %cst_24 {dimension_numbers = #tpu.dot_dimension_numbers<[2], [1], [1], [2], [0, 0, 0, 1, 1, 2], [0], [0]>} : vector<8x16x16xbf16>, vector<8x16x8xbf16>, vector<8x16x8xf32> -> vector<8x16x8xf32>
    "tpu.trace_stop"() : () -> ()
    %55 = vector.shape_cast %54 : vector<8x16x8xf32> to vector<128x8xf32>
    %56 = arith.truncf %55 : vector<128x8xf32> to vector<128x8xbf16>
    %57 = vector.extract_strided_slice %31 {offsets = [0, 0], sizes = [8, 32], strides = [1, 1]} : vector<32x32xbf16> to vector<8x32xbf16>
    %cst_25 = arith.constant dense<0.000000e+00> : vector<128x32xf32>
    %58 = tpu.matmul %56, %57, %cst_25 {dimension_numbers = #tpu.dot_dimension_numbers<[1], [0], [0], [1], [0, 0, 1, 1], [], []>} : vector<128x8xbf16>, vector<8x32xbf16>, vector<128x32xf32> -> vector<128x32xf32>
    %59 = vector.extract_strided_slice %25 {offsets = [0, 0, 8], sizes = [8, 16, 8], strides = [1, 1, 1]} : vector<8x16x32xbf16> to vector<8x16x8xbf16>
    %60 = vector.extract_strided_slice %27 {offsets = [0, 0, 8], sizes = [8, 16, 8], strides = [1, 1, 1]} : vector<8x16x32xbf16> to vector<8x16x8xbf16>
    %61 = vector.extract_strided_slice %30 {offsets = [0, 0, 8], sizes = [8, 16, 8], strides = [1, 1, 1]} : vector<8x16x32xbf16> to vector<8x16x8xbf16>
    "tpu.trace_start"() <{level = 10 : i32, message = "wqd,wkd->wqk"}> : () -> ()
    %cst_26 = arith.constant dense<0.000000e+00> : vector<8x16x16xf32>
    %62 = tpu.matmul %59, %60, %cst_26 {dimension_numbers = #tpu.dot_dimension_numbers<[2], [2], [1], [1], [0, 0, 0, 1, 1, 1], [0], [0]>} : vector<8x16x8xbf16>, vector<8x16x8xbf16>, vector<8x16x16xf32> -> vector<8x16x16xf32>
    "tpu.trace_stop"() : () -> ()
    %63 = vector.shape_cast %62 : vector<8x16x16xf32> to vector<8x1x16x16xf32>
    %c1 = arith.constant 1 : index
    %c0_27 = arith.constant 0 : index
    %c0_28 = arith.constant 0 : index
    %c0_29 = arith.constant 0 : index
    %64 = vector.load %arg7[%c1, %c0_27, %c0_28, %c0_29] : memref<4x1x16x16xf32, #tpu.memory_space<vmem>>, vector<1x1x16x16xf32>
    %65 = vector.shape_cast %64 : vector<1x1x16x16xf32> to vector<1x16x16xf32>
    %66 = vector.shape_cast %65 : vector<1x16x16xf32> to vector<1x1x16x16xf32>
    %67 = vector.broadcast %66 : vector<1x1x16x16xf32> to vector<8x1x16x16xf32>
    %68 = arith.addf %63, %67 : vector<8x1x16x16xf32>
    %69 = vector.shape_cast %68 : vector<8x1x16x16xf32> to vector<8x16x16xf32>
    %cst_30 = arith.constant dense<0xFF800000> : vector<8x16xf32>
    %70 = vector.multi_reduction <maximumf>, %69, %cst_30 [2] : vector<8x16x16xf32> to vector<8x16xf32>
    %71 = vector.shape_cast %70 : vector<8x16xf32> to vector<8x16x1xf32>
    %72 = vector.broadcast %71 : vector<8x16x1xf32> to vector<8x16x16xf32>
    %73 = arith.subf %69, %72 : vector<8x16x16xf32>
    %74 = math.exp %73 : vector<8x16x16xf32>
    %cst_31 = arith.constant dense<0.000000e+00> : vector<8x16xf32>
    %75 = vector.multi_reduction <add>, %74, %cst_31 [2] : vector<8x16x16xf32> to vector<8x16xf32>
    %76 = vector.shape_cast %75 : vector<8x16xf32> to vector<8x16x1xf32>
    %77 = tpu.reciprocal %76 {approx = true} : vector<8x16x1xf32> -> vector<8x16x1xf32>
    %78 = vector.broadcast %77 : vector<8x16x1xf32> to vector<8x16x16xf32>
    %79 = arith.mulf %74, %78 : vector<8x16x16xf32>
    %80 = arith.truncf %79 : vector<8x16x16xf32> to vector<8x16x16xbf16>
    "tpu.trace_start"() <{level = 10 : i32, message = "wqk,wkd->wqd"}> : () -> ()
    %cst_32 = arith.constant dense<0.000000e+00> : vector<8x16x8xf32>
    %81 = tpu.matmul %80, %61, %cst_32 {dimension_numbers = #tpu.dot_dimension_numbers<[2], [1], [1], [2], [0, 0, 0, 1, 1, 2], [0], [0]>} : vector<8x16x16xbf16>, vector<8x16x8xbf16>, vector<8x16x8xf32> -> vector<8x16x8xf32>
    "tpu.trace_stop"() : () -> ()
    %82 = vector.shape_cast %81 : vector<8x16x8xf32> to vector<128x8xf32>
    %83 = arith.truncf %82 : vector<128x8xf32> to vector<128x8xbf16>
    %84 = vector.extract_strided_slice %31 {offsets = [8, 0], sizes = [8, 32], strides = [1, 1]} : vector<32x32xbf16> to vector<8x32xbf16>
    %cst_33 = arith.constant dense<0.000000e+00> : vector<128x32xf32>
    %85 = tpu.matmul %83, %84, %cst_33 {dimension_numbers = #tpu.dot_dimension_numbers<[1], [0], [0], [1], [0, 0, 1, 1], [], []>} : vector<128x8xbf16>, vector<8x32xbf16>, vector<128x32xf32> -> vector<128x32xf32>
    %86 = arith.addf %58, %85 : vector<128x32xf32>
    %87 = vector.extract_strided_slice %25 {offsets = [0, 0, 16], sizes = [8, 16, 8], strides = [1, 1, 1]} : vector<8x16x32xbf16> to vector<8x16x8xbf16>
    %88 = vector.extract_strided_slice %27 {offsets = [0, 0, 16], sizes = [8, 16, 8], strides = [1, 1, 1]} : vector<8x16x32xbf16> to vector<8x16x8xbf16>
    %89 = vector.extract_strided_slice %30 {offsets = [0, 0, 16], sizes = [8, 16, 8], strides = [1, 1, 1]} : vector<8x16x32xbf16> to vector<8x16x8xbf16>
    "tpu.trace_start"() <{level = 10 : i32, message = "wqd,wkd->wqk"}> : () -> ()
    %cst_34 = arith.constant dense<0.000000e+00> : vector<8x16x16xf32>
    %90 = tpu.matmul %87, %88, %cst_34 {dimension_numbers = #tpu.dot_dimension_numbers<[2], [2], [1], [1], [0, 0, 0, 1, 1, 1], [0], [0]>} : vector<8x16x8xbf16>, vector<8x16x8xbf16>, vector<8x16x16xf32> -> vector<8x16x16xf32>
    "tpu.trace_stop"() : () -> ()
    %91 = vector.shape_cast %90 : vector<8x16x16xf32> to vector<8x1x16x16xf32>
    %c2 = arith.constant 2 : index
    %c0_35 = arith.constant 0 : index
    %c0_36 = arith.constant 0 : index
    %c0_37 = arith.constant 0 : index
    %92 = vector.load %arg7[%c2, %c0_35, %c0_36, %c0_37] : memref<4x1x16x16xf32, #tpu.memory_space<vmem>>, vector<1x1x16x16xf32>
    %93 = vector.shape_cast %92 : vector<1x1x16x16xf32> to vector<1x16x16xf32>
    %94 = vector.shape_cast %93 : vector<1x16x16xf32> to vector<1x1x16x16xf32>
    %95 = vector.broadcast %94 : vector<1x1x16x16xf32> to vector<8x1x16x16xf32>
    %96 = arith.addf %91, %95 : vector<8x1x16x16xf32>
    %97 = vector.shape_cast %96 : vector<8x1x16x16xf32> to vector<8x16x16xf32>
    %cst_38 = arith.constant dense<0xFF800000> : vector<8x16xf32>
    %98 = vector.multi_reduction <maximumf>, %97, %cst_38 [2] : vector<8x16x16xf32> to vector<8x16xf32>
    %99 = vector.shape_cast %98 : vector<8x16xf32> to vector<8x16x1xf32>
    %100 = vector.broadcast %99 : vector<8x16x1xf32> to vector<8x16x16xf32>
    %101 = arith.subf %97, %100 : vector<8x16x16xf32>
    %102 = math.exp %101 : vector<8x16x16xf32>
    %cst_39 = arith.constant dense<0.000000e+00> : vector<8x16xf32>
    %103 = vector.multi_reduction <add>, %102, %cst_39 [2] : vector<8x16x16xf32> to vector<8x16xf32>
    %104 = vector.shape_cast %103 : vector<8x16xf32> to vector<8x16x1xf32>
    %105 = tpu.reciprocal %104 {approx = true} : vector<8x16x1xf32> -> vector<8x16x1xf32>
    %106 = vector.broadcast %105 : vector<8x16x1xf32> to vector<8x16x16xf32>
    %107 = arith.mulf %102, %106 : vector<8x16x16xf32>
    %108 = arith.truncf %107 : vector<8x16x16xf32> to vector<8x16x16xbf16>
    "tpu.trace_start"() <{level = 10 : i32, message = "wqk,wkd->wqd"}> : () -> ()
    %cst_40 = arith.constant dense<0.000000e+00> : vector<8x16x8xf32>
    %109 = tpu.matmul %108, %89, %cst_40 {dimension_numbers = #tpu.dot_dimension_numbers<[2], [1], [1], [2], [0, 0, 0, 1, 1, 2], [0], [0]>} : vector<8x16x16xbf16>, vector<8x16x8xbf16>, vector<8x16x8xf32> -> vector<8x16x8xf32>
    "tpu.trace_stop"() : () -> ()
    %110 = vector.shape_cast %109 : vector<8x16x8xf32> to vector<128x8xf32>
    %111 = arith.truncf %110 : vector<128x8xf32> to vector<128x8xbf16>
    %112 = vector.extract_strided_slice %31 {offsets = [16, 0], sizes = [8, 32], strides = [1, 1]} : vector<32x32xbf16> to vector<8x32xbf16>
    %cst_41 = arith.constant dense<0.000000e+00> : vector<128x32xf32>
    %113 = tpu.matmul %111, %112, %cst_41 {dimension_numbers = #tpu.dot_dimension_numbers<[1], [0], [0], [1], [0, 0, 1, 1], [], []>} : vector<128x8xbf16>, vector<8x32xbf16>, vector<128x32xf32> -> vector<128x32xf32>
    %114 = arith.addf %86, %113 : vector<128x32xf32>
    %115 = vector.extract_strided_slice %25 {offsets = [0, 0, 24], sizes = [8, 16, 8], strides = [1, 1, 1]} : vector<8x16x32xbf16> to vector<8x16x8xbf16>
    %116 = vector.extract_strided_slice %27 {offsets = [0, 0, 24], sizes = [8, 16, 8], strides = [1, 1, 1]} : vector<8x16x32xbf16> to vector<8x16x8xbf16>
    %117 = vector.extract_strided_slice %30 {offsets = [0, 0, 24], sizes = [8, 16, 8], strides = [1, 1, 1]} : vector<8x16x32xbf16> to vector<8x16x8xbf16>
    "tpu.trace_start"() <{level = 10 : i32, message = "wqd,wkd->wqk"}> : () -> ()
    %cst_42 = arith.constant dense<0.000000e+00> : vector<8x16x16xf32>
    %118 = tpu.matmul %115, %116, %cst_42 {dimension_numbers = #tpu.dot_dimension_numbers<[2], [2], [1], [1], [0, 0, 0, 1, 1, 1], [0], [0]>} : vector<8x16x8xbf16>, vector<8x16x8xbf16>, vector<8x16x16xf32> -> vector<8x16x16xf32>
    "tpu.trace_stop"() : () -> ()
    %119 = vector.shape_cast %118 : vector<8x16x16xf32> to vector<8x1x16x16xf32>
    %c3 = arith.constant 3 : index
    %c0_43 = arith.constant 0 : index
    %c0_44 = arith.constant 0 : index
    %c0_45 = arith.constant 0 : index
    %120 = vector.load %arg7[%c3, %c0_43, %c0_44, %c0_45] : memref<4x1x16x16xf32, #tpu.memory_space<vmem>>, vector<1x1x16x16xf32>
    %121 = vector.shape_cast %120 : vector<1x1x16x16xf32> to vector<1x16x16xf32>
    %122 = vector.shape_cast %121 : vector<1x16x16xf32> to vector<1x1x16x16xf32>
    %123 = vector.broadcast %122 : vector<1x1x16x16xf32> to vector<8x1x16x16xf32>
    %124 = arith.addf %119, %123 : vector<8x1x16x16xf32>
    %125 = vector.shape_cast %124 : vector<8x1x16x16xf32> to vector<8x16x16xf32>
    %cst_46 = arith.constant dense<0xFF800000> : vector<8x16xf32>
    %126 = vector.multi_reduction <maximumf>, %125, %cst_46 [2] : vector<8x16x16xf32> to vector<8x16xf32>
    %127 = vector.shape_cast %126 : vector<8x16xf32> to vector<8x16x1xf32>
    %128 = vector.broadcast %127 : vector<8x16x1xf32> to vector<8x16x16xf32>
    %129 = arith.subf %125, %128 : vector<8x16x16xf32>
    %130 = math.exp %129 : vector<8x16x16xf32>
    %cst_47 = arith.constant dense<0.000000e+00> : vector<8x16xf32>
    %131 = vector.multi_reduction <add>, %130, %cst_47 [2] : vector<8x16x16xf32> to vector<8x16xf32>
    %132 = vector.shape_cast %131 : vector<8x16xf32> to vector<8x16x1xf32>
    %133 = tpu.reciprocal %132 {approx = true} : vector<8x16x1xf32> -> vector<8x16x1xf32>
    %134 = vector.broadcast %133 : vector<8x16x1xf32> to vector<8x16x16xf32>
    %135 = arith.mulf %130, %134 : vector<8x16x16xf32>
    %136 = arith.truncf %135 : vector<8x16x16xf32> to vector<8x16x16xbf16>
    "tpu.trace_start"() <{level = 10 : i32, message = "wqk,wkd->wqd"}> : () -> ()
    %cst_48 = arith.constant dense<0.000000e+00> : vector<8x16x8xf32>
    %137 = tpu.matmul %136, %117, %cst_48 {dimension_numbers = #tpu.dot_dimension_numbers<[2], [1], [1], [2], [0, 0, 0, 1, 1, 2], [0], [0]>} : vector<8x16x16xbf16>, vector<8x16x8xbf16>, vector<8x16x8xf32> -> vector<8x16x8xf32>
    "tpu.trace_stop"() : () -> ()
    %138 = vector.shape_cast %137 : vector<8x16x8xf32> to vector<128x8xf32>
    %139 = arith.truncf %138 : vector<128x8xf32> to vector<128x8xbf16>
    %140 = vector.extract_strided_slice %31 {offsets = [24, 0], sizes = [8, 32], strides = [1, 1]} : vector<32x32xbf16> to vector<8x32xbf16>
    %cst_49 = arith.constant dense<0.000000e+00> : vector<128x32xf32>
    %141 = tpu.matmul %139, %140, %cst_49 {dimension_numbers = #tpu.dot_dimension_numbers<[1], [0], [0], [1], [0, 0, 1, 1], [], []>} : vector<128x8xbf16>, vector<8x32xbf16>, vector<128x32xf32> -> vector<128x32xf32>
    %142 = arith.addf %114, %141 : vector<128x32xf32>
    %c0_50 = arith.constant 0 : index
    %c0_51 = arith.constant 0 : index
    %143 = vector.load %arg9[%c0_50, %c0_51] : memref<1x32xf32, #tpu.memory_space<vmem>>, vector<1x32xf32>
    %144 = vector.broadcast %143 : vector<1x32xf32> to vector<128x32xf32>
    %145 = arith.addf %142, %144 : vector<128x32xf32>
    %146 = vector.shape_cast %145 : vector<128x32xf32> to vector<8x16x32xf32>
    %147 = arith.truncf %146 : vector<8x16x32xf32> to vector<8x16x32xbf16>
    %c0_52 = arith.constant 0 : index
    %c0_53 = arith.constant 0 : index
    %c0_54 = arith.constant 0 : index
    %148 = vector.load %arg10[%c0_52, %c0_53, %c0_54] : memref<8x16x32xbf16, #tpu.memory_space<vmem>>, vector<8x16x32xbf16>
    tpu.vector_store %arg10[%c0_52, %c0_53, %c0_54], %147 {strides = array<i32>} : memref<8x16x32xbf16, #tpu.memory_space<vmem>>, vector<8x16x32xbf16>,
    return
  }
  func.func @transform_0(%arg0: i32) -> (i32, i32, i32) {
    %c0_i32 = arith.constant 0 : i32
    %c0_i32_0 = arith.constant 0 : i32
    %c0_i32_1 = arith.constant 0 : i32
    return %arg0, %c0_i32, %c0_i32_0 : i32, i32, i32
  }
  func.func @transform_1(%arg0: i32) -> (i32, i32) {
    %c0_i32 = arith.constant 0 : i32
    %c0_i32_0 = arith.constant 0 : i32
    %c0_i32_1 = arith.constant 0 : i32
    return %c0_i32, %c0_i32_0 : i32, i32
  }
  func.func @transform_2(%arg0: i32) -> (i32, i32) {
    %c0_i32 = arith.constant 0 : i32
    %c0_i32_0 = arith.constant 0 : i32
    %c0_i32_1 = arith.constant 0 : i32
    return %c0_i32, %c0_i32_0 : i32, i32
  }
  func.func @transform_3(%arg0: i32) -> (i32, i32) {
    %c0_i32 = arith.constant 0 : i32
    %c0_i32_0 = arith.constant 0 : i32
    %c0_i32_1 = arith.constant 0 : i32
    return %c0_i32, %c0_i32_0 : i32, i32
  }
  func.func @transform_4(%arg0: i32) -> (i32, i32) {
    %c0_i32 = arith.constant 0 : i32
    %c0_i32_0 = arith.constant 0 : i32
    %c0_i32_1 = arith.constant 0 : i32
    return %c0_i32, %c0_i32_0 : i32, i32
  }
  func.func @transform_5(%arg0: i32) -> (i32, i32) {
    %c0_i32 = arith.constant 0 : i32
    %c0_i32_0 = arith.constant 0 : i32
    %c0_i32_1 = arith.constant 0 : i32
    return %c0_i32, %c0_i32_0 : i32, i32
  }
  func.func @transform_6(%arg0: i32) -> (i32, i32, i32, i32) {
    %c0_i32 = arith.constant 0 : i32
    %c0_i32_0 = arith.constant 0 : i32
    %c0_i32_1 = arith.constant 0 : i32
    %c0_i32_2 = arith.constant 0 : i32
    %c0_i32_3 = arith.constant 0 : i32
    return %c0_i32, %c0_i32_0, %c0_i32_1, %c0_i32_2 : i32, i32, i32, i32
  }
  func.func @transform_7(%arg0: i32) -> (i32, i32) {
    %c0_i32 = arith.constant 0 : i32
    %c0_i32_0 = arith.constant 0 : i32
    %c0_i32_1 = arith.constant 0 : i32
    return %c0_i32, %c0_i32_0 : i32, i32
  }
  func.func @transform_8(%arg0: i32) -> (i32, i32) {
    %c0_i32 = arith.constant 0 : i32
    %c0_i32_0 = arith.constant 0 : i32
    %c0_i32_1 = arith.constant 0 : i32
    return %c0_i32, %c0_i32_0 : i32, i32
  }
  func.func @transform_9(%arg0: i32) -> (i32, i32, i32) {
    %c0_i32 = arith.constant 0 : i32
    %c0_i32_0 = arith.constant 0 : i32
    %c0_i32_1 = arith.constant 0 : i32
    return %arg0, %c0_i32, %c0_i32_0 : i32, i32, i32
  }
}

</mosaic_0001>

<llo_original>
// kernel: tpu_custom_call.1
$region0: #{tpu_custom_call.1}
  #allocation0 [shape = 'u32[]', space=smem, size = 0x4, offset = 0x4, fixed_abs, tag = 'smem constant byte address 0x4 - core index']
  #allocation1 [shape = 'u32[144,128]{1,0:T(1,128)}', space=vmem, size = 0x12000, scoped, tag = 'internal scratch']
  %s0 = inlined_call_operand.hbm [shape: f32[8,128], index: 0, kind: input, shape index: {}]
  %s1 = inlined_call_operand.hbm [shape: f32[16,128], index: 1, kind: output, shape index: {}]
  %s2 = sld [smem:[#allocation0]]
  $region41: #{tpu_custom_call.1} parent=0
    _
  %s4 = ssub.s32 1, %s2
  %s5 = scalar_select 0, %s4, %s2
  $region1: #{tpu_custom_call.1} parent=0
    #allocation2 [shape = 'u8[4096]{0}', space=vmem, size = 0x1000, scoped, tag = 'input window, operand 0, single buffered']
    #allocation3 [shape = 's32[2]{0}', space=sflag, size = 0x8, scoped, tag = 'scoped memory for tpu_custom_call.1']
    #allocation4 [shape = 's32[2]{0}', space=sflag, size = 0x8, scoped, tag = 'scoped memory for tpu_custom_call.1']
    #allocation5 [shape = 'u8[8192]{0}', space=vmem, size = 0x2000, scoped, tag = 'output window, operand 0']
    %6 = vsyncpa [#allocation3], 0
    %7 = vsyncpa [#allocation4], 0
    %s8 = scalar_lea.sflag [#allocation4], 1
    %9 = vsyncpa %s8, 0
    loop: start=0, step=1, limit=4
    $region2: #{tpu_custom_call.1} parent=1 // loop_pre_header
      _
    $region3: #{tpu_custom_call.1} parent=1 // loop_header
      %s11 = sphi 0, %s15
      %p12 = scmp.ge.s32.totalorder %s11, 4
      %s19 = sphi 0, %s19
      %s21 = sphi 0, %s19
      %s22 = sphi 0, %s21
      %s36 = sphi 0, %s22
      %s42 = sphi 0, %s44
      %s45 = sphi 0, %s42
      %s46 = sphi 0, %s45
      %s62 = sphi 0, %s46
    $region4: #{tpu_custom_call.1} parent=1 // loop_header_branch
      %14 = sbr.rel (%p12) target = $region8
    $region5: #{tpu_custom_call.1} parent=1 // loop_body
      %s16 = ssub.s32 %s11, 1
      %s17 = ssub.s32 %s11, 2
      %s18 = sadd.s32 %s11, 1
      %s20 = sadd.s32 %s19, 1
      %p23 = scmp.eq.s32.totalorder %s11, 1
      %p24 = scmp.ne.s32.totalorder %s19, %s21
      %p25 = scmp.eq.s32.totalorder %s11, 0
      %p26 = por %p24, %p25
      %p27 = scmp.ne.s32.totalorder %s19, %s21
      %p28 = scmp.eq.s32.totalorder %s16, 1
      %p29 = por %p27, %p28
      %p30 = scmp.ne.s32.totalorder %s21, %s22
      %p31 = scmp.eq.s32.totalorder %s16, 0
      %p32 = por %p30, %p31
      %p33 = scmp.ne.s32.totalorder %s21, %s22
      %p34 = scmp.eq.s32.totalorder %s17, 1
      %p35 = por %p33, %p34
      %p37 = scmp.ne.s32.totalorder %s22, %s36
      %p38 = scmp.eq.s32.totalorder %s17, 0
      %p39 = por %p37, %p38
      %s40 = ssub.s32 %s11, %s18
      %p41 = scmp.eq.s32.totalorder %s40, 0
      %s43 = sadd.s32 %s42, 1
      %s44 = scalar_select %p41, %s42, %s43
      %p47 = pneg %p41
      %p48 = scmp.eq.s32.totalorder %s11, 1
      %p49 = por %p47, %p48
      %p50 = scmp.ne.s32.totalorder %s42, %s45
      %p51 = scmp.eq.s32.totalorder %s11, 0
      %p52 = por %p50, %p51
      %p53 = scmp.ne.s32.totalorder %s42, %s45
      %p54 = scmp.eq.s32.totalorder %s16, 1
      %p55 = por %p53, %p54
      %p56 = scmp.ne.s32.totalorder %s45, %s46
      %p57 = scmp.eq.s32.totalorder %s16, 0
      %p58 = por %p56, %p57
      %p59 = scmp.ne.s32.totalorder %s45, %s46
      %p60 = scmp.eq.s32.totalorder %s17, 1
      %p61 = por %p59, %p60
      %p63 = scmp.ne.s32.totalorder %s46, %s62
      %p64 = scmp.eq.s32.totalorder %s17, 0
      %p65 = por %p63, %p64
      %p66 = scmp.le.s32.totalorder 1, %s11
      %p67 = scmp.lt.s32.totalorder %s11, 3
      %p68 = pnand %p66, %p67
      %p69 = pneg %p68
      // Predicated region
      $region9: #{tpu_custom_call.1} parent=5 // pred_check
        _
      $region10: #{tpu_custom_call.1} parent=5 // pred_check_branch
        %71 = sbr.rel (%p68) target = $region12
      $region11: #{tpu_custom_call.1} parent=5 // pred_region
        %s72 = ssub.s32 %s11, 1
        // Predicated region
        $region13: #{tpu_custom_call.1} parent=11 // pred_check
          %p73 = pneg %p32
        $region14: #{tpu_custom_call.1} parent=11 // pred_check_branch
          %75 = sbr.rel (%p73) target = $region16
        $region15: #{tpu_custom_call.1} parent=11 // pred_region
          %s77 = ssub.s32 128, 128
          %78 = vsyncadd [#allocation3], %s77
          %s80 = sshll.u32 [#allocation2], 4
          %s81 = int_to_ptr.vmem [resolvable:$true] %s80
          %83 = dma.hbm_to_vmem [thread:$0]  %s0, 128, %s81, [#allocation3]
        $region16: #{tpu_custom_call.1} parent=11 // pred_fallthru
          _
      $region12: #{tpu_custom_call.1} parent=5 // pred_fallthru
        _
      %p84 = scmp.lt.s32.totalorder %s11, 2
      // Predicated region
      $region17: #{tpu_custom_call.1} parent=5 // pred_check
        %p85 = pneg %p84
      $region18: #{tpu_custom_call.1} parent=5 // pred_check_branch
        %87 = sbr.rel (%p85) target = $region20
      $region19: #{tpu_custom_call.1} parent=5 // pred_region
        _
      $region20: #{tpu_custom_call.1} parent=5 // pred_fallthru
        _
      %p88 = scmp.le.s32.totalorder 1, %s11
      %p89 = scmp.lt.s32.totalorder %s11, 3
      %p90 = pnand %p88, %p89
      %p91 = pneg %p90
      // Predicated region
      $region21: #{tpu_custom_call.1} parent=5 // pred_check
        _
      $region22: #{tpu_custom_call.1} parent=5 // pred_check_branch
        %93 = sbr.rel (%p90) target = $region24
      $region23: #{tpu_custom_call.1} parent=5 // pred_region
        %s94 = ssub.s32 %s11, 1
        // Predicated region
        $region25: #{tpu_custom_call.1} parent=23 // pred_check
          %p95 = pneg %p32
        $region26: #{tpu_custom_call.1} parent=23 // pred_check_branch
          %97 = sbr.rel (%p95) target = $region28
        $region27: #{tpu_custom_call.1} parent=23 // pred_region
          %98 = dma.done [#allocation3], 128
        $region28: #{tpu_custom_call.1} parent=23 // pred_fallthru
          _
        %p99 = pneg %p32
        %p100 = pneg %p29
        %p101 = pneg %p58
        %p102 = pneg %p55
        %s103 = sand.u32 %s45, 1
        %s104 = scalar_lea.sflag [#allocation4], %s103
        %s105 = sand.u32 %s45, 1
        %s106 = smul.addr %s105, 8
        %s107 = scalar_lea.vmem [#allocation5], %s106
        %v108 = vld [vmem:[#allocation2] sm:$0xff]
        %v109 = vadd.f32 %v108, 1.0
        %110 = vst [vmem:[%s107] sm:$0xff] %v109
        %s111 = sand.u32 %s45, 1
        %s112 = scalar_lea.sflag [#allocation4], %s111
        %s113 = sand.u32 %s45, 1
        %s114 = smul.addr %s113, 8
        %s115 = scalar_lea.vmem [#allocation5], %s114
        // Predicated region
        $region29: #{tpu_custom_call.1} parent=23 // pred_check
          %p116 = pneg %p55
        $region30: #{tpu_custom_call.1} parent=23 // pred_check_branch
          %118 = sbr.rel (%p116) target = $region32
        $region31: #{tpu_custom_call.1} parent=23 // pred_region
          %s120 = ssub.s32 128, 128
          %121 = vsyncadd %s112, %s120
          %s122 = smul.addr %s16, 128
          %s123 = scalar_lea.hbm %s1, %s122
          %s125 = sshll.u32 %s115, 4
          %s126 = int_to_ptr.vmem [resolvable:$true] %s125
          %128 = dma.vmem_to_hbm [thread:$0]  %s126, 128, %s123, %s112
        $region32: #{tpu_custom_call.1} parent=23 // pred_fallthru
          _
      $region24: #{tpu_custom_call.1} parent=5 // pred_fallthru
        _
      %p129 = scmp.le.s32.totalorder 2, %s11
      // Predicated region
      $region33: #{tpu_custom_call.1} parent=5 // pred_check
        %p130 = pneg %p129
      $region34: #{tpu_custom_call.1} parent=5 // pred_check_branch
        %132 = sbr.rel (%p130) target = $region36
      $region35: #{tpu_custom_call.1} parent=5 // pred_region
        %s133 = ssub.s32 %s11, 2
        // Predicated region
        $region37: #{tpu_custom_call.1} parent=35 // pred_check
          %p134 = pneg %p61
        $region38: #{tpu_custom_call.1} parent=35 // pred_check_branch
          %136 = sbr.rel (%p134) target = $region40
        $region39: #{tpu_custom_call.1} parent=35 // pred_region
          %s137 = sand.u32 %s46, 1
          %s138 = scalar_lea.sflag [#allocation4], %s137
          %s139 = sand.u32 %s46, 1
          %s140 = smul.addr %s139, 8
          %s141 = scalar_lea.vmem [#allocation5], %s140
          %142 = dma.done %s138, 128
        $region40: #{tpu_custom_call.1} parent=35 // pred_fallthru
          _
      $region36: #{tpu_custom_call.1} parent=5 // pred_fallthru
        _
    $region6: #{tpu_custom_call.1} parent=1 // loop_footer
      %s15 = sadd.s32 1, %s11
    $region7: #{tpu_custom_call.1} parent=1 // loop_footer_branch
      %10 = sbr.rel target = $region3
    $region8: #{tpu_custom_call.1} parent=1 // loop_exit
      _
    %143 = vsyncpa [#allocation3], 1
    %s144 = scalar_lea.sflag [#allocation3], 1
    %145 = vsyncpa %s144, 1
    %146 = vsyncpa [#allocation4], 1
    %s147 = scalar_lea.sflag [#allocation4], 1
    %148 = vsyncpa %s147, 1

// kernel: tpu_custom_call.1
$region0: #{tpu_custom_call.1}
  #allocation0 [shape = 'u32[]', space=smem, size = 0x4, offset = 0x4, fixed_abs, tag = 'smem constant byte address 0x4 - core index']
  #allocation1 [shape = 'u32[144,128]{1,0:T(1,128)}', space=vmem, size = 0x12000, scoped, tag = 'internal scratch']
  %s0 = inlined_call_operand.hbm [shape: f32[16,16,32], index: 0, kind: input, shape index: {}]
  %s1 = inlined_call_operand.vmem [shape: bf16[32,96], index: 1, kind: input, shape index: {}]
  %s2 = inlined_call_operand.vmem [shape: f32[1,96], index: 2, kind: input, shape index: {}]
  %s3 = inlined_call_operand.vmem [shape: bf16[64,8], index: 3, kind: input, shape index: {}]
  %s4 = inlined_call_operand.vmem [shape: bf16[8,64], index: 4, kind: input, shape index: {}]
  %s5 = inlined_call_operand.vmem [shape: f32[1,64], index: 5, kind: input, shape index: {}]
  %s6 = inlined_call_operand.hbm [shape: f32[4,1,16,16], index: 6, kind: input, shape index: {}]
  %s7 = inlined_call_operand.vmem [shape: bf16[32,32], index: 7, kind: input, shape index: {}]
  %s8 = inlined_call_operand.vmem [shape: f32[1,32], index: 8, kind: input, shape index: {}]
  %s9 = inlined_call_operand.hbm [shape: bf16[16,16,32], index: 9, kind: output, shape index: {}]
  %s10 = sld [smem:[#allocation0]]
  $region77: #{tpu_custom_call.1} parent=0
    _
  %s12 = ssub.s32 1, %s10
  %s13 = scalar_select 0, %s12, %s10
  $region1: #{tpu_custom_call.1} parent=0
    #allocation2 [shape = 'u8[131072]{0}', space=vmem, size = 0x20000, scoped, tag = 'input window, operand 0']
    #allocation3 [shape = 's32[2]{0}', space=sflag, size = 0x8, scoped, tag = 'scoped memory for tpu_custom_call.1']
    #allocation4 [shape = 's32[2]{0}', space=sflag, size = 0x8, scoped, tag = 'scoped memory for tpu_custom_call.1']
    #allocation5 [shape = 'u8[32768]{0}', space=vmem, size = 0x8000, scoped, tag = 'input window, operand 6, single buffered']
    #allocation6 [shape = 's32[1]{0}', space=sflag, size = 0x4, scoped, tag = 'scoped memory for tpu_custom_call.1']
    #allocation7 [shape = 'u8[65536]{0}', space=vmem, size = 0x10000, scoped, tag = 'output window, operand 0']
    %14 = vsyncpa [#allocation3], 0
    %s15 = scalar_lea.sflag [#allocation3], 1
    %16 = vsyncpa %s15, 0
    %17 = vsyncpa [#allocation6], 0
    %18 = vsyncpa [#allocation4], 0
    %s19 = scalar_lea.sflag [#allocation4], 1
    %20 = vsyncpa %s19, 0
    loop: start=0, step=1, limit=4
    $region2: #{tpu_custom_call.1} parent=1 // loop_pre_header
      _
    $region3: #{tpu_custom_call.1} parent=1 // loop_header
      %s22 = sphi 0, %s26
      %p23 = scmp.ge.s32.totalorder %s22, 4
      %s32 = sphi 0, %s34
      %s35 = sphi 0, %s32
      %s36 = sphi 0, %s35
      %s52 = sphi 0, %s36
      %s56 = sphi 0, %s56
      %s58 = sphi 0, %s56
      %s59 = sphi 0, %s58
      %s73 = sphi 0, %s59
      %s77 = sphi 0, %s77
      %s79 = sphi 0, %s77
      %s80 = sphi 0, %s79
      %s94 = sphi 0, %s80
      %s98 = sphi 0, %s98
      %s100 = sphi 0, %s98
      %s101 = sphi 0, %s100
      %s115 = sphi 0, %s101
      %s119 = sphi 0, %s119
      %s121 = sphi 0, %s119
      %s122 = sphi 0, %s121
      %s136 = sphi 0, %s122
      %s140 = sphi 0, %s140
      %s142 = sphi 0, %s140
      %s143 = sphi 0, %s142
      %s157 = sphi 0, %s143
      %s161 = sphi 0, %s161
      %s163 = sphi 0, %s161
      %s164 = sphi 0, %s163
      %s178 = sphi 0, %s164
      %s182 = sphi 0, %s182
      %s184 = sphi 0, %s182
      %s185 = sphi 0, %s184
      %s199 = sphi 0, %s185
      %s203 = sphi 0, %s203
      %s205 = sphi 0, %s203
      %s206 = sphi 0, %s205
      %s220 = sphi 0, %s206
      %s226 = sphi 0, %s228
      %s229 = sphi 0, %s226
      %s230 = sphi 0, %s229
      %s246 = sphi 0, %s230
    $region4: #{tpu_custom_call.1} parent=1 // loop_header_branch
      %25 = sbr.rel (%p23) target = $region8
    $region5: #{tpu_custom_call.1} parent=1 // loop_body
      %s27 = ssub.s32 %s22, 1
      %s28 = ssub.s32 %s22, 2
      %s29 = sadd.s32 %s22, 1
      %s30 = ssub.s32 %s22, %s29
      %p31 = scmp.eq.s32.totalorder %s30, 0
      %s33 = sadd.s32 %s32, 1
      %s34 = scalar_select %p31, %s32, %s33
      %p37 = pneg %p31
      %p38 = scmp.eq.s32.totalorder %s22, 1
      %p39 = por %p37, %p38
      %p40 = scmp.ne.s32.totalorder %s32, %s35
      %p41 = scmp.eq.s32.totalorder %s22, 0
      %p42 = por %p40, %p41
      %p43 = scmp.ne.s32.totalorder %s32, %s35
      %p44 = scmp.eq.s32.totalorder %s27, 1
      %p45 = por %p43, %p44
      %p46 = scmp.ne.s32.totalorder %s35, %s36
      %p47 = scmp.eq.s32.totalorder %s27, 0
      %p48 = por %p46, %p47
      %p49 = scmp.ne.s32.totalorder %s35, %s36
      %p50 = scmp.eq.s32.totalorder %s28, 1
      %p51 = por %p49, %p50
      %p53 = scmp.ne.s32.totalorder %s36, %s52
      %p54 = scmp.eq.s32.totalorder %s28, 0
      %p55 = por %p53, %p54
      %s57 = sadd.s32 %s56, 1
      %p60 = scmp.eq.s32.totalorder %s22, 1
      %p61 = scmp.ne.s32.totalorder %s56, %s58
      %p62 = scmp.eq.s32.totalorder %s22, 0
      %p63 = por %p61, %p62
      %p64 = scmp.ne.s32.totalorder %s56, %s58
      %p65 = scmp.eq.s32.totalorder %s27, 1
      %p66 = por %p64, %p65
      %p67 = scmp.ne.s32.totalorder %s58, %s59
      %p68 = scmp.eq.s32.totalorder %s27, 0
      %p69 = por %p67, %p68
      %p70 = scmp.ne.s32.totalorder %s58, %s59
      %p71 = scmp.eq.s32.totalorder %s28, 1
      %p72 = por %p70, %p71
      %p74 = scmp.ne.s32.totalorder %s59, %s73
      %p75 = scmp.eq.s32.totalorder %s28, 0
      %p76 = por %p74, %p75
      %s78 = sadd.s32 %s77, 1
      %p81 = scmp.eq.s32.totalorder %s22, 1
      %p82 = scmp.ne.s32.totalorder %s77, %s79
      %p83 = scmp.eq.s32.totalorder %s22, 0
      %p84 = por %p82, %p83
      %p85 = scmp.ne.s32.totalorder %s77, %s79
      %p86 = scmp.eq.s32.totalorder %s27, 1
      %p87 = por %p85, %p86
      %p88 = scmp.ne.s32.totalorder %s79, %s80
      %p89 = scmp.eq.s32.totalorder %s27, 0
      %p90 = por %p88, %p89
      %p91 = scmp.ne.s32.totalorder %s79, %s80
      %p92 = scmp.eq.s32.totalorder %s28, 1
      %p93 = por %p91, %p92
      %p95 = scmp.ne.s32.totalorder %s80, %s94
      %p96 = scmp.eq.s32.totalorder %s28, 0
      %p97 = por %p95, %p96
      %s99 = sadd.s32 %s98, 1
      %p102 = scmp.eq.s32.totalorder %s22, 1
      %p103 = scmp.ne.s32.totalorder %s98, %s100
      %p104 = scmp.eq.s32.totalorder %s22, 0
      %p105 = por %p103, %p104
      %p106 = scmp.ne.s32.totalorder %s98, %s100
      %p107 = scmp.eq.s32.totalorder %s27, 1
      %p108 = por %p106, %p107
      %p109 = scmp.ne.s32.totalorder %s100, %s101
      %p110 = scmp.eq.s32.totalorder %s27, 0
      %p111 = por %p109, %p110
      %p112 = scmp.ne.s32.totalorder %s100, %s101
      %p113 = scmp.eq.s32.totalorder %s28, 1
      %p114 = por %p112, %p113
      %p116 = scmp.ne.s32.totalorder %s101, %s115
      %p117 = scmp.eq.s32.totalorder %s28, 0
      %p118 = por %p116, %p117
      %s120 = sadd.s32 %s119, 1
      %p123 = scmp.eq.s32.totalorder %s22, 1
      %p124 = scmp.ne.s32.totalorder %s119, %s121
      %p125 = scmp.eq.s32.totalorder %s22, 0
      %p126 = por %p124, %p125
      %p127 = scmp.ne.s32.totalorder %s119, %s121
      %p128 = scmp.eq.s32.totalorder %s27, 1
      %p129 = por %p127, %p128
      %p130 = scmp.ne.s32.totalorder %s121, %s122
      %p131 = scmp.eq.s32.totalorder %s27, 0
      %p132 = por %p130, %p131
      %p133 = scmp.ne.s32.totalorder %s121, %s122
      %p134 = scmp.eq.s32.totalorder %s28, 1
      %p135 = por %p133, %p134
      %p137 = scmp.ne.s32.totalorder %s122, %s136
      %p138 = scmp.eq.s32.totalorder %s28, 0
      %p139 = por %p137, %p138
      %s141 = sadd.s32 %s140, 1
      %p144 = scmp.eq.s32.totalorder %s22, 1
      %p145 = scmp.ne.s32.totalorder %s140, %s142
      %p146 = scmp.eq.s32.totalorder %s22, 0
      %p147 = por %p145, %p146
      %p148 = scmp.ne.s32.totalorder %s140, %s142
      %p149 = scmp.eq.s32.totalorder %s27, 1
      %p150 = por %p148, %p149
      %p151 = scmp.ne.s32.totalorder %s142, %s143
      %p152 = scmp.eq.s32.totalorder %s27, 0
      %p153 = por %p151, %p152
      %p154 = scmp.ne.s32.totalorder %s142, %s143
      %p155 = scmp.eq.s32.totalorder %s28, 1
      %p156 = por %p154, %p155
      %p158 = scmp.ne.s32.totalorder %s143, %s157
      %p159 = scmp.eq.s32.totalorder %s28, 0
      %p160 = por %p158, %p159
      %s162 = sadd.s32 %s161, 1
      %p165 = scmp.eq.s32.totalorder %s22, 1
      %p166 = scmp.ne.s32.totalorder %s161, %s163
      %p167 = scmp.eq.s32.totalorder %s22, 0
      %p168 = por %p166, %p167
      %p169 = scmp.ne.s32.totalorder %s161, %s163
      %p170 = scmp.eq.s32.totalorder %s27, 1
      %p171 = por %p169, %p170
      %p172 = scmp.ne.s32.totalorder %s163, %s164
      %p173 = scmp.eq.s32.totalorder %s27, 0
      %p174 = por %p172, %p173
      %p175 = scmp.ne.s32.totalorder %s163, %s164
      %p176 = scmp.eq.s32.totalorder %s28, 1
      %p177 = por %p175, %p176
      %p179 = scmp.ne.s32.totalorder %s164, %s178
      %p180 = scmp.eq.s32.totalorder %s28, 0
      %p181 = por %p179, %p180
      %s183 = sadd.s32 %s182, 1
      %p186 = scmp.eq.s32.totalorder %s22, 1
      %p187 = scmp.ne.s32.totalorder %s182, %s184
      %p188 = scmp.eq.s32.totalorder %s22, 0
      %p189 = por %p187, %p188
      %p190 = scmp.ne.s32.totalorder %s182, %s184
      %p191 = scmp.eq.s32.totalorder %s27, 1
      %p192 = por %p190, %p191
      %p193 = scmp.ne.s32.totalorder %s184, %s185
      %p194 = scmp.eq.s32.totalorder %s27, 0
      %p195 = por %p193, %p194
      %p196 = scmp.ne.s32.totalorder %s184, %s185
      %p197 = scmp.eq.s32.totalorder %s28, 1
      %p198 = por %p196, %p197
      %p200 = scmp.ne.s32.totalorder %s185, %s199
      %p201 = scmp.eq.s32.totalorder %s28, 0
      %p202 = por %p200, %p201
      %s204 = sadd.s32 %s203, 1
      %p207 = scmp.eq.s32.totalorder %s22, 1
      %p208 = scmp.ne.s32.totalorder %s203, %s205
      %p209 = scmp.eq.s32.totalorder %s22, 0
      %p210 = por %p208, %p209
      %p211 = scmp.ne.s32.totalorder %s203, %s205
      %p212 = scmp.eq.s32.totalorder %s27, 1
      %p213 = por %p211, %p212
      %p214 = scmp.ne.s32.totalorder %s205, %s206
      %p215 = scmp.eq.s32.totalorder %s27, 0
      %p216 = por %p214, %p215
      %p217 = scmp.ne.s32.totalorder %s205, %s206
      %p218 = scmp.eq.s32.totalorder %s28, 1
      %p219 = por %p217, %p218
      %p221 = scmp.ne.s32.totalorder %s206, %s220
      %p222 = scmp.eq.s32.totalorder %s28, 0
      %p223 = por %p221, %p222
      %s224 = ssub.s32 %s22, %s29
      %p225 = scmp.eq.s32.totalorder %s224, 0
      %s227 = sadd.s32 %s226, 1
      %s228 = scalar_select %p225, %s226, %s227
      %p231 = pneg %p225
      %p232 = scmp.eq.s32.totalorder %s22, 1
      %p233 = por %p231, %p232
      %p234 = scmp.ne.s32.totalorder %s226, %s229
      %p235 = scmp.eq.s32.totalorder %s22, 0
      %p236 = por %p234, %p235
      %p237 = scmp.ne.s32.totalorder %s226, %s229
      %p238 = scmp.eq.s32.totalorder %s27, 1
      %p239 = por %p237, %p238
      %p240 = scmp.ne.s32.totalorder %s229, %s230
      %p241 = scmp.eq.s32.totalorder %s27, 0
      %p242 = por %p240, %p241
      %p243 = scmp.ne.s32.totalorder %s229, %s230
      %p244 = scmp.eq.s32.totalorder %s28, 1
      %p245 = por %p243, %p244
      %p247 = scmp.ne.s32.totalorder %s230, %s246
      %p248 = scmp.eq.s32.totalorder %s28, 0
      %p249 = por %p247, %p248
      %p250 = scmp.le.s32.totalorder 1, %s22
      %p251 = scmp.lt.s32.totalorder %s22, 3
      %p252 = pnand %p250, %p251
      %p253 = pneg %p252
      // Predicated region
      $region9: #{tpu_custom_call.1} parent=5 // pred_check
        _
      $region10: #{tpu_custom_call.1} parent=5 // pred_check_branch
        %255 = sbr.rel (%p252) target = $region12
      $region11: #{tpu_custom_call.1} parent=5 // pred_region
        %s256 = ssub.s32 %s22, 1
        // Predicated region
        $region13: #{tpu_custom_call.1} parent=11 // pred_check
          %p257 = pneg %p69
        $region14: #{tpu_custom_call.1} parent=11 // pred_check_branch
          %259 = sbr.rel (%p257) target = $region16
        $region15: #{tpu_custom_call.1} parent=11 // pred_region
          _
        $region16: #{tpu_custom_call.1} parent=11 // pred_fallthru
          _
        // Predicated region
        $region17: #{tpu_custom_call.1} parent=11 // pred_check
          %p260 = pneg %p90
        $region18: #{tpu_custom_call.1} parent=11 // pred_check_branch
          %262 = sbr.rel (%p260) target = $region20
        $region19: #{tpu_custom_call.1} parent=11 // pred_region
          _
        $region20: #{tpu_custom_call.1} parent=11 // pred_fallthru
          _
        // Predicated region
        $region21: #{tpu_custom_call.1} parent=11 // pred_check
          %p263 = pneg %p111
        $region22: #{tpu_custom_call.1} parent=11 // pred_check_branch
          %265 = sbr.rel (%p263) target = $region24
        $region23: #{tpu_custom_call.1} parent=11 // pred_region
          _
        $region24: #{tpu_custom_call.1} parent=11 // pred_fallthru
          _
        // Predicated region
        $region25: #{tpu_custom_call.1} parent=11 // pred_check
          %p266 = pneg %p132
        $region26: #{tpu_custom_call.1} parent=11 // pred_check_branch
          %268 = sbr.rel (%p266) target = $region28
        $region27: #{tpu_custom_call.1} parent=11 // pred_region
          _
        $region28: #{tpu_custom_call.1} parent=11 // pred_fallthru
          _
        // Predicated region
        $region29: #{tpu_custom_call.1} parent=11 // pred_check
          %p269 = pneg %p153
        $region30: #{tpu_custom_call.1} parent=11 // pred_check_branch
          %271 = sbr.rel (%p269) target = $region32
        $region31: #{tpu_custom_call.1} parent=11 // pred_region
          _
        $region32: #{tpu_custom_call.1} parent=11 // pred_fallthru
          _
        // Predicated region
        $region33: #{tpu_custom_call.1} parent=11 // pred_check
          %p272 = pneg %p174
        $region34: #{tpu_custom_call.1} parent=11 // pred_check_branch
          %274 = sbr.rel (%p272) target = $region36
        $region35: #{tpu_custom_call.1} parent=11 // pred_region
          %s276 = ssub.s32 1024, 1024
          %277 = vsyncadd [#allocation6], %s276
          %s278 = sshll.u32 [#allocation5], 4
          %s279 = int_to_ptr.vmem [resolvable:$true] %s278
          %284 = dma.hbm_to_vmem [thread:$0]  %s6, 1024, %s279, [#allocation6], 128, 128, 8
        $region36: #{tpu_custom_call.1} parent=11 // pred_fallthru
          _
        // Predicated region
        $region37: #{tpu_custom_call.1} parent=11 // pred_check
          %p285 = pneg %p195
        $region38: #{tpu_custom_call.1} parent=11 // pred_check_branch
          %287 = sbr.rel (%p285) target = $region40
        $region39: #{tpu_custom_call.1} parent=11 // pred_region
          _
        $region40: #{tpu_custom_call.1} parent=11 // pred_fallthru
          _
        // Predicated region
        $region41: #{tpu_custom_call.1} parent=11 // pred_check
          %p288 = pneg %p216
        $region42: #{tpu_custom_call.1} parent=11 // pred_check_branch
          %290 = sbr.rel (%p288) target = $region44
        $region43: #{tpu_custom_call.1} parent=11 // pred_region
          _
        $region44: #{tpu_custom_call.1} parent=11 // pred_fallthru
          _
      $region12: #{tpu_custom_call.1} parent=5 // pred_fallthru
        _
      %p291 = scmp.lt.s32.totalorder %s22, 2
      // Predicated region
      $region45: #{tpu_custom_call.1} parent=5 // pred_check
        %p292 = pneg %p291
      $region46: #{tpu_custom_call.1} parent=5 // pred_check_branch
        %294 = sbr.rel (%p292) target = $region48
      $region47: #{tpu_custom_call.1} parent=5 // pred_region
        // Predicated region
        $region49: #{tpu_custom_call.1} parent=47 // pred_check
          %p295 = pneg %p42
        $region50: #{tpu_custom_call.1} parent=47 // pred_check_branch
          %297 = sbr.rel (%p295) target = $region52
        $region51: #{tpu_custom_call.1} parent=47 // pred_region
          %s298 = sand.u32 %s32, 1
          %s299 = scalar_lea.sflag [#allocation3], %s298
          %s300 = sand.u32 %s32, 1
          %s301 = smul.addr %s300, 128
          %s302 = scalar_lea.vmem [#allocation2], %s301
          %s303 = smul.u32 8, %s22
          %s305 = ssub.s32 2048, 2048
          %306 = vsyncadd %s299, %s305
          %s307 = smul.addr %s303, 2
          %s308 = smul.addr %s307, 128
          %s309 = scalar_lea.hbm %s0, %s308
          %s310 = sshll.u32 %s302, 4
          %s311 = int_to_ptr.vmem [resolvable:$true] %s310
          %316 = dma.hbm_to_vmem [thread:$0]  %s309, 2048, %s311, %s299, 128, 128, 8
        $region52: #{tpu_custom_call.1} parent=47 // pred_fallthru
          _
      $region48: #{tpu_custom_call.1} parent=5 // pred_fallthru
        _
      %p317 = scmp.le.s32.totalorder 1, %s22
      %p318 = scmp.lt.s32.totalorder %s22, 3
      %p319 = pnand %p317, %p318
      %p320 = pneg %p319
      // Predicated region
      $region53: #{tpu_custom_call.1} parent=5 // pred_check
        _
      $region54: #{tpu_custom_call.1} parent=5 // pred_check_branch
        %322 = sbr.rel (%p319) target = $region56
      $region55: #{tpu_custom_call.1} parent=5 // pred_region
        %s323 = ssub.s32 %s22, 1
        %s324 = sand.u32 %s35, 1
        %s325 = scalar_lea.sflag [#allocation3], %s324
        %s326 = sand.u32 %s35, 1
        %s327 = smul.addr %s326, 128
        %s328 = scalar_lea.vmem [#allocation2], %s327
        // Predicated region
        $region57: #{tpu_custom_call.1} parent=55 // pred_check
          %p329 = pneg %p48
        $region58: #{tpu_custom_call.1} parent=55 // pred_check_branch
          %331 = sbr.rel (%p329) target = $region60
        $region59: #{tpu_custom_call.1} parent=55 // pred_region
          %332 = dma.done %s325, 2048
        $region60: #{tpu_custom_call.1} parent=55 // pred_fallthru
          _
        // Predicated region
        $region61: #{tpu_custom_call.1} parent=55 // pred_check
          %p333 = pneg %p174
        $region62: #{tpu_custom_call.1} parent=55 // pred_check_branch
          %335 = sbr.rel (%p333) target = $region64
        $region63: #{tpu_custom_call.1} parent=55 // pred_region
          %336 = dma.done [#allocation6], 1024
        $region64: #{tpu_custom_call.1} parent=55 // pred_fallthru
          _
        %s337 = sand.u32 %s35, 1
        %s338 = scalar_lea.sflag [#allocation3], %s337
        %s339 = sand.u32 %s35, 1
        %s340 = smul.addr %s339, 128
        %s341 = scalar_lea.vmem [#allocation2], %s340
        %p342 = pneg %p48
        %p343 = pneg %p45
        %p344 = pneg %p69
        %p345 = pneg %p66
        %p346 = pneg %p90
        %p347 = pneg %p87
        %p348 = pneg %p111
        %p349 = pneg %p108
        %p350 = pneg %p132
        %p351 = pneg %p129
        %p352 = pneg %p153
        %p353 = pneg %p150
        %p354 = pneg %p174
        %p355 = pneg %p171
        %p356 = pneg %p195
        %p357 = pneg %p192
        %p358 = pneg %p216
        %p359 = pneg %p213
        %p360 = pneg %p242
        %p361 = pneg %p239
        %s362 = sand.u32 %s229, 1
        %s363 = scalar_lea.sflag [#allocation4], %s362
        %s364 = sand.u32 %s229, 1
        %s365 = smul.addr %s364, 64
        %s366 = scalar_lea.vmem [#allocation7], %s365
        %s367 = smul.u32 8, %s27
        %s368 = smul.u32 8, %s27
        %v370 = vld [vmem:[%s328] sm:$0xff]
        %v371 = vld [vmem:[%s328 + $0x8] sm:$0xff]
        %v372 = vld [vmem:[%s328 + $0x10] sm:$0xff]
        %v373 = vld [vmem:[%s328 + $0x18] sm:$0xff]
        %v374 = vld [vmem:[%s328 + $0x20] sm:$0xff]
        %v375 = vld [vmem:[%s328 + $0x28] sm:$0xff]
        %v376 = vld [vmem:[%s328 + $0x30] sm:$0xff]
        %v377 = vld [vmem:[%s328 + $0x38] sm:$0xff]
        %v378 = vld [vmem:[%s328 + $0x40] sm:$0xff]
        %v379 = vld [vmem:[%s328 + $0x48] sm:$0xff]
        %v380 = vld [vmem:[%s328 + $0x50] sm:$0xff]
        %v381 = vld [vmem:[%s328 + $0x58] sm:$0xff]
        %v382 = vld [vmem:[%s328 + $0x60] sm:$0xff]
        %v383 = vld [vmem:[%s328 + $0x68] sm:$0xff]
        %v384 = vld [vmem:[%s328 + $0x70] sm:$0xff]
        %v385 = vld [vmem:[%s328 + $0x78] sm:$0xff]
        %v386 = vpack.c.bf16 %v371, %v370
        %v387 = vpack.c.bf16 %v373, %v372
        %v388 = vpack.c.bf16 %v375, %v374
        %v389 = vpack.c.bf16 %v377, %v376
        %v390 = vpack.c.bf16 %v379, %v378
        %v391 = vpack.c.bf16 %v381, %v380
        %v392 = vpack.c.bf16 %v383, %v382
        %v393 = vpack.c.bf16 %v385, %v384
        %v394 = vld [vmem:[%s1] sm:$0xf]
        %v395 = vld [vmem:[%s1 + $0x4] sm:$0xf]
        %v396 = vld [vmem:[%s1 + $0x8] sm:$0xf]
        %v397 = vld [vmem:[%s1 + $0xc] sm:$0xf]
        %v398 = vld [vmem:[%s2] sm:$0x1]
        %v400 = vlaneseq
        %v401 = vshrl.u32 %v400, 7
        %v402 = vsub.s32 0, %v401
        %v403 = vrot.slane %v398, %v402
        %v409 = vunpack.c.l.b16 %v394
        %v410 = vunpack.c.l.b16 %v395
        %v411 = vunpack.c.l.b16 %v396
        %v412 = vunpack.c.l.b16 %v397
        %v413 = vpack.c.b16 %v410, %v409
        %v414 = vpack.c.b16 %v412, %v411
        %vm417 = vcmask 261120
        %v419 = vsel %vm417, %v386, 0
        %v422 = vsel %vm417, %v387, 0
        %v425 = vsel %vm417, %v388, 0
        %v428 = vsel %vm417, %v389, 0
        %v431 = vsel %vm417, %v390, 0
        %v434 = vsel %vm417, %v391, 0
        %v437 = vsel %vm417, %v392, 0
        %v440 = vsel %vm417, %v393, 0
        %442 = vmatprep.subr.bf16.mxu0 0
        %443 = vmatpush1.bf16.msra.mxu0 %v413
        %444 = vmatprep.subr.bf16.mxu0 0
        %445 = vmatpush1.bf16.msra.mxu0 %v414
        %446 = vmatprep.subr.bf16.mxu0 0
        %447 = vmatpush1.bf16.msra.mxu0 0
        %448 = vmatprep.subr.bf16.mxu0 0
        %449 = vmatpush1.bf16.msra.mxu0 0
        %450 = vmatprep.subr.bf16.mxu0 0
        %451 = vmatpush1.bf16.msra.mxu0 0
        %452 = vmatprep.subr.bf16.mxu0 0
        %453 = vmatpush1.bf16.msra.mxu0 0
        %454 = vmatprep.subr.bf16.mxu0 0
        %455 = vmatpush1.bf16.msra.mxu0 0
        %456 = vmatprep.subr.bf16.mxu0 0
        %457 = vmatpush1.bf16.msra.mxu0 0
        %458 = vmatprep.subr.bf16.mxu0 0
        %459 = vmatpush1.bf16.msra.mxu0 0
        %460 = vmatprep.subr.bf16.mxu0 0
        %461 = vmatpush1.bf16.msra.mxu0 0
        %462 = vmatprep.subr.bf16.mxu0 0
        %463 = vmatpush1.bf16.msra.mxu0 0
        %464 = vmatprep.subr.bf16.mxu0 0
        %465 = vmatpush1.bf16.msra.mxu0 0
        %466 = vmatprep.subr.bf16.mxu0 0
        %467 = vmatpush1.bf16.msra.mxu0 0
        %468 = vmatprep.subr.bf16.mxu0 0
        %469 = vmatpush1.bf16.msra.mxu0 0
        %470 = vmatprep.subr.bf16.mxu0 0
        %471 = vmatpush1.bf16.msra.mxu0 0
        %472 = vmatprep.subr.bf16.mxu0 0
        %473 = vmatpush1.bf16.msra.mxu0 0
        %474 = vmatprep.mubr.bf16.mxu0 0
        %475 = vmatmul.mubr.bf16.gmra.mrb[0].mxu0 %v419
        %v476 = vpop.f32.mrb[0].mxu0
        %v477 = vadd.f32 %v403, %v476
        %v478 = vpop.f32.mrb[0].mxu0
        %v479 = vpop.f32.mrb[0].mxu0
        %v480 = vadd.f32 %v403, %v479
        %v481 = vpop.f32.mrb[0].mxu0
        %482 = vmatprep.mubr.bf16.mxu0 0
        %483 = vmatmul.mubr.bf16.gmra.mrb[0].mxu0 %v422
        %v484 = vpop.f32.mrb[0].mxu0
        %v485 = vadd.f32 %v403, %v484
        %v486 = vpop.f32.mrb[0].mxu0
        %v487 = vpop.f32.mrb[0].mxu0
        %v488 = vadd.f32 %v403, %v487
        %v489 = vpop.f32.mrb[0].mxu0
        %490 = vmatprep.mubr.bf16.mxu0 0
        %491 = vmatmul.mubr.bf16.gmra.mrb[0].mxu0 %v425
        %v492 = vpop.f32.mrb[0].mxu0
        %v493 = vadd.f32 %v403, %v492
        %v494 = vpop.f32.mrb[0].mxu0
        %v495 = vpop.f32.mrb[0].mxu0
        %v496 = vadd.f32 %v403, %v495
        %v497 = vpop.f32.mrb[0].mxu0
        %498 = vmatprep.mubr.bf16.mxu0 0
        %499 = vmatmul.mubr.bf16.gmra.mrb[0].mxu0 %v428
        %v500 = vpop.f32.mrb[0].mxu0
        %v501 = vadd.f32 %v403, %v500
        %v502 = vpop.f32.mrb[0].mxu0
        %v503 = vpop.f32.mrb[0].mxu0
        %v504 = vadd.f32 %v403, %v503
        %v505 = vpop.f32.mrb[0].mxu0
        %506 = vmatprep.mubr.bf16.mxu0 0
        %507 = vmatmul.mubr.bf16.gmra.mrb[0].mxu0 %v431
        %v508 = vpop.f32.mrb[0].mxu0
        %v509 = vadd.f32 %v403, %v508
        %v510 = vpop.f32.mrb[0].mxu0
        %v511 = vpop.f32.mrb[0].mxu0
        %v512 = vadd.f32 %v403, %v511
        %v513 = vpop.f32.mrb[0].mxu0
        %514 = vmatprep.mubr.bf16.mxu0 0
        %515 = vmatmul.mubr.bf16.gmra.mrb[0].mxu0 %v434
        %v516 = vpop.f32.mrb[0].mxu0
        %v517 = vadd.f32 %v403, %v516
        %v518 = vpop.f32.mrb[0].mxu0
        %v519 = vpop.f32.mrb[0].mxu0
        %v520 = vadd.f32 %v403, %v519
        %v521 = vpop.f32.mrb[0].mxu0
        %522 = vmatprep.mubr.bf16.mxu0 0
        %523 = vmatmul.mubr.bf16.gmra.mrb[0].mxu0 %v437
        %v524 = vpop.f32.mrb[0].mxu0
        %v525 = vadd.f32 %v403, %v524
        %v526 = vpop.f32.mrb[0].mxu0
        %v527 = vpop.f32.mrb[0].mxu0
        %v528 = vadd.f32 %v403, %v527
        %v529 = vpop.f32.mrb[0].mxu0
        %530 = vmatprep.mubr.bf16.mxu0 0
        %531 = vmatmul.mubr.bf16.gmra.mrb[0].mxu0 %v440
        %v532 = vpop.f32.mrb[0].mxu0
        %v533 = vadd.f32 %v403, %v532
        %v534 = vpop.f32.mrb[0].mxu0
        %v535 = vpop.f32.mrb[0].mxu0
        %v536 = vadd.f32 %v403, %v535
        %v537 = vpop.f32.mrb[0].mxu0
        %538 = vdwg.mxu0
        %v539 = vmul.f32 %v477, %v477
        %v540 = vmul.f32 %v480, %v480
        %v541 = vmul.f32 %v485, %v485
        %v542 = vmul.f32 %v488, %v488
        %v543 = vmul.f32 %v493, %v493
        %v544 = vmul.f32 %v496, %v496
        %v545 = vmul.f32 %v501, %v501
        %v546 = vmul.f32 %v504, %v504
        %v547 = vmul.f32 %v509, %v509
        %v548 = vmul.f32 %v512, %v512
        %v549 = vmul.f32 %v517, %v517
        %v550 = vmul.f32 %v520, %v520
        %v551 = vmul.f32 %v525, %v525
        %v552 = vmul.f32 %v528, %v528
        %v553 = vmul.f32 %v533, %v533
        %v554 = vmul.f32 %v536, %v536
        %v555 = vpack.c.bf16 %v540, %v539
        %v556 = vpack.c.bf16 %v542, %v541
        %v557 = vpack.c.bf16 %v544, %v543
        %v558 = vpack.c.bf16 %v546, %v545
        %v559 = vpack.c.bf16 %v548, %v547
        %v560 = vpack.c.bf16 %v550, %v549
        %v561 = vpack.c.bf16 %v552, %v551
        %v562 = vpack.c.bf16 %v554, %v553
        %v563 = vld [vmem:[%s3] sm:$0xf]
        %v564 = vld [vmem:[%s3 + $0x4] sm:$0xf]
        %v565 = vld [vmem:[%s3 + $0x8] sm:$0xf]
        %v566 = vld [vmem:[%s3 + $0xc] sm:$0xf]
        %v567 = vld [vmem:[%s3 + $0x10] sm:$0xf]
        %v568 = vld [vmem:[%s3 + $0x14] sm:$0xf]
        %v569 = vld [vmem:[%s3 + $0x18] sm:$0xf]
        %v570 = vld [vmem:[%s3 + $0x1c] sm:$0xf]
        %v579 = vunpack.c.l.b16 %v563
        %v580 = vunpack.c.l.b16 %v564
        %v581 = vunpack.c.l.b16 %v565
        %v582 = vunpack.c.l.b16 %v566
        %v583 = vunpack.c.l.b16 %v567
        %v584 = vunpack.c.l.b16 %v568
        %v585 = vunpack.c.l.b16 %v569
        %v586 = vunpack.c.l.b16 %v570
        %v587 = vpack.c.b16 %v580, %v579
        %v588 = vpack.c.b16 %v582, %v581
        %v589 = vpack.c.b16 %v584, %v583
        %v590 = vpack.c.b16 %v586, %v585
        %vm595 = vcmask 523264
        %v597 = vsel %vm595, %v555, 0
        %v600 = vsel %vm595, %v556, 0
        %v603 = vsel %vm595, %v557, 0
        %v606 = vsel %vm595, %v558, 0
        %v609 = vsel %vm595, %v559, 0
        %v612 = vsel %vm595, %v560, 0
        %v615 = vsel %vm595, %v561, 0
        %v618 = vsel %vm595, %v562, 0
        %620 = vmatprep.subr.bf16.mxu0 0
        %621 = vmatpush1.bf16.msra.mxu0 %v587
        %622 = vmatprep.subr.bf16.mxu0 0
        %623 = vmatpush1.bf16.msra.mxu0 %v588
        %624 = vmatprep.subr.bf16.mxu0 0
        %625 = vmatpush1.bf16.msra.mxu0 %v589
        %626 = vmatprep.subr.bf16.mxu0 0
        %627 = vmatpush1.bf16.msra.mxu0 %v590
        %628 = vmatprep.subr.bf16.mxu0 0
        %629 = vmatpush1.bf16.msra.mxu0 0
        %630 = vmatprep.subr.bf16.mxu0 0
        %631 = vmatpush1.bf16.msra.mxu0 0
        %632 = vmatprep.subr.bf16.mxu0 0
        %633 = vmatpush1.bf16.msra.mxu0 0
        %634 = vmatprep.subr.bf16.mxu0 0
        %635 = vmatpush1.bf16.msra.mxu0 0
        %636 = vmatprep.subr.bf16.mxu0 0
        %637 = vmatpush1.bf16.msra.mxu0 0
        %638 = vmatprep.subr.bf16.mxu0 0
        %639 = vmatpush1.bf16.msra.mxu0 0
        %640 = vmatprep.subr.bf16.mxu0 0
        %641 = vmatpush1.bf16.msra.mxu0 0
        %642 = vmatprep.subr.bf16.mxu0 0
        %643 = vmatpush1.bf16.msra.mxu0 0
        %644 = vmatprep.subr.bf16.mxu0 0
        %645 = vmatpush1.bf16.msra.mxu0 0
        %646 = vmatprep.subr.bf16.mxu0 0
        %647 = vmatpush1.bf16.msra.mxu0 0
        %648 = vmatprep.subr.bf16.mxu0 0
        %649 = vmatpush1.bf16.msra.mxu0 0
        %650 = vmatprep.subr.bf16.mxu0 0
        %651 = vmatpush1.bf16.msra.mxu0 0
        %652 = vmatprep.mubr.bf16.mxu0 0
        %653 = vmatmul.mubr.bf16.gmra.mrb[0].mxu0 %v597
        %v654 = vpop.f32.mrb[0].mxu0
        %v655 = vadd.f32 0.0, %v654
        %v656 = vpop.f32.mrb[0].mxu0
        %v657 = vpop.f32.mrb[0].mxu0
        %v658 = vadd.f32 0.0, %v657
        %v659 = vpop.f32.mrb[0].mxu0
        %660 = vmatprep.mubr.bf16.mxu0 0
        %661 = vmatmul.mubr.bf16.gmra.mrb[0].mxu0 %v600
        %v662 = vpop.f32.mrb[0].mxu0
        %v663 = vadd.f32 0.0, %v662
        %v664 = vpop.f32.mrb[0].mxu0
        %v665 = vpop.f32.mrb[0].mxu0
        %v666 = vadd.f32 0.0, %v665
        %v667 = vpop.f32.mrb[0].mxu0
        %668 = vmatprep.mubr.bf16.mxu0 0
        %669 = vmatmul.mubr.bf16.gmra.mrb[0].mxu0 %v603
        %v670 = vpop.f32.mrb[0].mxu0
        %v671 = vadd.f32 0.0, %v670
        %v672 = vpop.f32.mrb[0].mxu0
        %v673 = vpop.f32.mrb[0].mxu0
        %v674 = vadd.f32 0.0, %v673
        %v675 = vpop.f32.mrb[0].mxu0
        %676 = vmatprep.mubr.bf16.mxu0 0
        %677 = vmatmul.mubr.bf16.gmra.mrb[0].mxu0 %v606
        %v678 = vpop.f32.mrb[0].mxu0
        %v679 = vadd.f32 0.0, %v678
        %v680 = vpop.f32.mrb[0].mxu0
        %v681 = vpop.f32.mrb[0].mxu0
        %v682 = vadd.f32 0.0, %v681
        %v683 = vpop.f32.mrb[0].mxu0
        %684 = vmatprep.mubr.bf16.mxu0 0
        %685 = vmatmul.mubr.bf16.gmra.mrb[0].mxu0 %v609
        %v686 = vpop.f32.mrb[0].mxu0
        %v687 = vadd.f32 0.0, %v686
        %v688 = vpop.f32.mrb[0].mxu0
        %v689 = vpop.f32.mrb[0].mxu0
        %v690 = vadd.f32 0.0, %v689
        %v691 = vpop.f32.mrb[0].mxu0
        %692 = vmatprep.mubr.bf16.mxu0 0
        %693 = vmatmul.mubr.bf16.gmra.mrb[0].mxu0 %v612
        %v694 = vpop.f32.mrb[0].mxu0
        %v695 = vadd.f32 0.0, %v694
        %v696 = vpop.f32.mrb[0].mxu0
        %v697 = vpop.f32.mrb[0].mxu0
        %v698 = vadd.f32 0.0, %v697
        %v699 = vpop.f32.mrb[0].mxu0
        %700 = vmatprep.mubr.bf16.mxu0 0
        %701 = vmatmul.mubr.bf16.gmra.mrb[0].mxu0 %v615
        %v702 = vpop.f32.mrb[0].mxu0
        %v703 = vadd.f32 0.0, %v702
        %v704 = vpop.f32.mrb[0].mxu0
        %v705 = vpop.f32.mrb[0].mxu0
        %v706 = vadd.f32 0.0, %v705
        %v707 = vpop.f32.mrb[0].mxu0
        %708 = vmatprep.mubr.bf16.mxu0 0
        %709 = vmatmul.mubr.bf16.gmra.mrb[0].mxu0 %v618
        %v710 = vpop.f32.mrb[0].mxu0
        %v711 = vadd.f32 0.0, %v710
        %v712 = vpop.f32.mrb[0].mxu0
        %v713 = vpop.f32.mrb[0].mxu0
        %v714 = vadd.f32 0.0, %v713
        %v715 = vpop.f32.mrb[0].mxu0
        %716 = vdwg.mxu0
        %v717 = vmax.f32 %v655, 1e-24
        %v718 = vmax.f32 %v658, 1e-24
        %v719 = vmax.f32 %v663, 1e-24
        %v720 = vmax.f32 %v666, 1e-24
        %v721 = vmax.f32 %v671, 1e-24
        %v722 = vmax.f32 %v674, 1e-24
        %v723 = vmax.f32 %v679, 1e-24
        %v724 = vmax.f32 %v682, 1e-24
        %v725 = vmax.f32 %v687, 1e-24
        %v726 = vmax.f32 %v690, 1e-24
        %v727 = vmax.f32 %v695, 1e-24
        %v728 = vmax.f32 %v698, 1e-24
        %v729 = vmax.f32 %v703, 1e-24
        %v730 = vmax.f32 %v706, 1e-24
        %v731 = vmax.f32 %v711, 1e-24
        %v732 = vmax.f32 %v714, 1e-24
        %v733 = vrsqrt.pop %v717
        %v734 = vrsqrt.pop %v718
        %v735 = vrsqrt.pop %v719
        %v736 = vrsqrt.pop %v720
        %v737 = vrsqrt.pop %v721
        %v738 = vrsqrt.pop %v722
        %v739 = vrsqrt.pop %v723
        %v740 = vrsqrt.pop %v724
        %v741 = vrsqrt.pop %v725
        %v742 = vrsqrt.pop %v726
        %v743 = vrsqrt.pop %v727
        %v744 = vrsqrt.pop %v728
        %v745 = vrsqrt.pop %v729
        %v746 = vrsqrt.pop %v730
        %v747 = vrsqrt.pop %v731
        %v748 = vrsqrt.pop %v732
        %v749 = vpack.c.bf16 %v734, %v733
        %v750 = vpack.c.bf16 %v736, %v735
        %v751 = vpack.c.bf16 %v738, %v737
        %v752 = vpack.c.bf16 %v740, %v739
        %v753 = vpack.c.bf16 %v742, %v741
        %v754 = vpack.c.bf16 %v744, %v743
        %v755 = vpack.c.bf16 %v746, %v745
        %v756 = vpack.c.bf16 %v748, %v747
        %v757 = vld [vmem:[%s4] sm:$0xf]
        %vm758 = vcmask 64512
        %v760 = vsel %vm758, %v749, 0
        %v763 = vsel %vm758, %v750, 0
        %v766 = vsel %vm758, %v751, 0
        %v769 = vsel %vm758, %v752, 0
        %v772 = vsel %vm758, %v753, 0
        %v775 = vsel %vm758, %v754, 0
        %v778 = vsel %vm758, %v755, 0
        %v781 = vsel %vm758, %v756, 0
        %vm783 = vcmask 1043456
        %v785 = vsel %vm783, %v757, 0
        %787 = vmatprep.subr.bf16.mxu0 0
        %788 = vmatpush1.bf16.msra.mxu0 %v785
        %789 = vmatprep.subr.bf16.mxu0 0
        %790 = vmatpush1.bf16.msra.mxu0 0
        %791 = vmatprep.subr.bf16.mxu0 0
        %792 = vmatpush1.bf16.msra.mxu0 0
        %793 = vmatprep.subr.bf16.mxu0 0
        %794 = vmatpush1.bf16.msra.mxu0 0
        %795 = vmatprep.subr.bf16.mxu0 0
        %796 = vmatpush1.bf16.msra.mxu0 0
        %797 = vmatprep.subr.bf16.mxu0 0
        %798 = vmatpush1.bf16.msra.mxu0 0
        %799 = vmatprep.subr.bf16.mxu0 0
        %800 = vmatpush1.bf16.msra.mxu0 0
        %801 = vmatprep.subr.bf16.mxu0 0
        %802 = vmatpush1.bf16.msra.mxu0 0
        %803 = vmatprep.subr.bf16.mxu0 0
        %804 = vmatpush1.bf16.msra.mxu0 0
        %805 = vmatprep.subr.bf16.mxu0 0
        %806 = vmatpush1.bf16.msra.mxu0 0
        %807 = vmatprep.subr.bf16.mxu0 0
        %808 = vmatpush1.bf16.msra.mxu0 0
        %809 = vmatprep.subr.bf16.mxu0 0
        %810 = vmatpush1.bf16.msra.mxu0 0
        %811 = vmatprep.subr.bf16.mxu0 0
        %812 = vmatpush1.bf16.msra.mxu0 0
        %813 = vmatprep.subr.bf16.mxu0 0
        %814 = vmatpush1.bf16.msra.mxu0 0
        %815 = vmatprep.subr.bf16.mxu0 0
        %816 = vmatpush1.bf16.msra.mxu0 0
        %817 = vmatprep.subr.bf16.mxu0 0
        %818 = vmatpush1.bf16.msra.mxu0 0
        %819 = vmatprep.mubr.bf16.mxu0 0
        %820 = vmatmul.mubr.bf16.gmra.mrb[0].mxu0 %v760
        %v821 = vpop.f32.mrb[0].mxu0
        %v822 = vadd.f32 0.0, %v821
        %v823 = vpop.f32.mrb[0].mxu0
        %v824 = vpop.f32.mrb[0].mxu0
        %v825 = vadd.f32 0.0, %v824
        %v826 = vpop.f32.mrb[0].mxu0
        %827 = vmatprep.mubr.bf16.mxu0 0
        %828 = vmatmul.mubr.bf16.gmra.mrb[0].mxu0 %v763
        %v829 = vpop.f32.mrb[0].mxu0
        %v830 = vadd.f32 0.0, %v829
        %v831 = vpop.f32.mrb[0].mxu0
        %v832 = vpop.f32.mrb[0].mxu0
        %v833 = vadd.f32 0.0, %v832
        %v834 = vpop.f32.mrb[0].mxu0
        %835 = vmatprep.mubr.bf16.mxu0 0
        %836 = vmatmul.mubr.bf16.gmra.mrb[0].mxu0 %v766
        %v837 = vpop.f32.mrb[0].mxu0
        %v838 = vadd.f32 0.0, %v837
        %v839 = vpop.f32.mrb[0].mxu0
        %v840 = vpop.f32.mrb[0].mxu0
        %v841 = vadd.f32 0.0, %v840
        %v842 = vpop.f32.mrb[0].mxu0
        %843 = vmatprep.mubr.bf16.mxu0 0
        %844 = vmatmul.mubr.bf16.gmra.mrb[0].mxu0 %v769
        %v845 = vpop.f32.mrb[0].mxu0
        %v846 = vadd.f32 0.0, %v845
        %v847 = vpop.f32.mrb[0].mxu0
        %v848 = vpop.f32.mrb[0].mxu0
        %v849 = vadd.f32 0.0, %v848
        %v850 = vpop.f32.mrb[0].mxu0
        %851 = vmatprep.mubr.bf16.mxu0 0
        %852 = vmatmul.mubr.bf16.gmra.mrb[0].mxu0 %v772
        %v853 = vpop.f32.mrb[0].mxu0
        %v854 = vadd.f32 0.0, %v853
        %v855 = vpop.f32.mrb[0].mxu0
        %v856 = vpop.f32.mrb[0].mxu0
        %v857 = vadd.f32 0.0, %v856
        %v858 = vpop.f32.mrb[0].mxu0
        %859 = vmatprep.mubr.bf16.mxu0 0
        %860 = vmatmul.mubr.bf16.gmra.mrb[0].mxu0 %v775
        %v861 = vpop.f32.mrb[0].mxu0
        %v862 = vadd.f32 0.0, %v861
        %v863 = vpop.f32.mrb[0].mxu0
        %v864 = vpop.f32.mrb[0].mxu0
        %v865 = vadd.f32 0.0, %v864
        %v866 = vpop.f32.mrb[0].mxu0
        %867 = vmatprep.mubr.bf16.mxu0 0
        %868 = vmatmul.mubr.bf16.gmra.mrb[0].mxu0 %v778
        %v869 = vpop.f32.mrb[0].mxu0
        %v870 = vadd.f32 0.0, %v869
        %v871 = vpop.f32.mrb[0].mxu0
        %v872 = vpop.f32.mrb[0].mxu0
        %v873 = vadd.f32 0.0, %v872
        %v874 = vpop.f32.mrb[0].mxu0
        %875 = vmatprep.mubr.bf16.mxu0 0
        %876 = vmatmul.mubr.bf16.gmra.mrb[0].mxu0 %v781
        %v877 = vpop.f32.mrb[0].mxu0
        %v878 = vadd.f32 0.0, %v877
        %v879 = vpop.f32.mrb[0].mxu0
        %v880 = vpop.f32.mrb[0].mxu0
        %v881 = vadd.f32 0.0, %v880
        %v882 = vpop.f32.mrb[0].mxu0
        %883 = vdwg.mxu0
        %v884 = vmul.f32 %v477, %v822
        %v885 = vmul.f32 %v480, %v825
        %v886 = vmul.f32 %v485, %v830
        %v887 = vmul.f32 %v488, %v833
        %v888 = vmul.f32 %v493, %v838
        %v889 = vmul.f32 %v496, %v841
        %v890 = vmul.f32 %v501, %v846
        %v891 = vmul.f32 %v504, %v849
        %v892 = vmul.f32 %v509, %v854
        %v893 = vmul.f32 %v512, %v857
        %v894 = vmul.f32 %v517, %v862
        %v895 = vmul.f32 %v520, %v865
        %v896 = vmul.f32 %v525, %v870
        %v897 = vmul.f32 %v528, %v873
        %v898 = vmul.f32 %v533, %v878
        %v899 = vmul.f32 %v536, %v881
        %v900 = vld [vmem:[%s5] sm:$0x1]
        %v902 = vlaneseq
        %v903 = vshrl.u32 %v902, 7
        %v904 = vsub.s32 0, %v903
        %v905 = vrot.slane %v900, %v904
        %v907 = vmul.f32 %v884, %v905
        %v908 = vmul.f32 %v885, %v905
        %v909 = vmul.f32 %v886, %v905
        %v910 = vmul.f32 %v887, %v905
        %v911 = vmul.f32 %v888, %v905
        %v912 = vmul.f32 %v889, %v905
        %v913 = vmul.f32 %v890, %v905
        %v914 = vmul.f32 %v891, %v905
        %v915 = vmul.f32 %v892, %v905
        %v916 = vmul.f32 %v893, %v905
        %v917 = vmul.f32 %v894, %v905
        %v918 = vmul.f32 %v895, %v905
        %v919 = vmul.f32 %v896, %v905
        %v920 = vmul.f32 %v897, %v905
        %v921 = vmul.f32 %v898, %v905
        %v922 = vmul.f32 %v899, %v905
        %v923 = vpack.c.bf16 %v908, %v907
        %v924 = vpack.c.bf16 %v910, %v909
        %v925 = vpack.c.bf16 %v912, %v911
        %v926 = vpack.c.bf16 %v914, %v913
        %v927 = vpack.c.bf16 %v916, %v915
        %v928 = vpack.c.bf16 %v918, %v917
        %v929 = vpack.c.bf16 %v920, %v919
        %v930 = vpack.c.bf16 %v922, %v921
        %v931 = vpack.c.bf16 %v480, %v477
        %v932 = vpack.c.bf16 %v488, %v485
        %v933 = vpack.c.bf16 %v496, %v493
        %v934 = vpack.c.bf16 %v504, %v501
        %v935 = vpack.c.bf16 %v512, %v509
        %v936 = vpack.c.bf16 %v520, %v517
        %v937 = vpack.c.bf16 %v528, %v525
        %v938 = vpack.c.bf16 %v536, %v533
        %v939 = vld [vmem:[%s7] sm:$0xf]
        %v940 = vld [vmem:[%s7 + $0x4] sm:$0xf]
        %v941 = vld [vmem:[%s7 + $0x8] sm:$0xf]
        %v942 = vld [vmem:[%s7 + $0xc] sm:$0xf]
        %944 = vrot.lane.b32.xlu0 %v923, 96
        %v945 = vpop.permute.xlu0 %944
        %v947 = vsel %vm758, %v923, 0
        %v950 = vsel %vm758, %v945, 0
        %952 = vmatprep.subr.bf16.mxu0 0
        %953 = vmatpush1.bf16.xpose.msra.mxu0 %v950
        %954 = vmatprep.subr.bf16.mxu0 0
        %955 = vmatpush1.bf16.xpose.msra.mxu0 0
        %956 = vmatprep.subr.bf16.mxu0 0
        %957 = vmatpush1.bf16.xpose.msra.mxu0 0
        %958 = vmatprep.subr.bf16.mxu0 0
        %959 = vmatpush1.bf16.xpose.msra.mxu0 0
        %960 = vmatprep.subr.bf16.mxu0 0
        %961 = vmatpush1.bf16.xpose.msra.mxu0 0
        %962 = vmatprep.subr.bf16.mxu0 0
        %963 = vmatpush1.bf16.xpose.msra.mxu0 0
        %964 = vmatprep.subr.bf16.mxu0 0
        %965 = vmatpush1.bf16.xpose.msra.mxu0 0
        %966 = vmatprep.subr.bf16.mxu0 0
        %967 = vmatpush1.bf16.xpose.msra.mxu0 0
        %968 = vmatprep.subr.bf16.mxu0 0
        %969 = vmatpush1.bf16.xpose.msra.mxu0 0
        %970 = vmatprep.subr.bf16.mxu0 0
        %971 = vmatpush1.bf16.xpose.msra.mxu0 0
        %972 = vmatprep.subr.bf16.mxu0 0
        %973 = vmatpush1.bf16.xpose.msra.mxu0 0
        %974 = vmatprep.subr.bf16.mxu0 0
        %975 = vmatpush1.bf16.xpose.msra.mxu0 0
        %976 = vmatprep.subr.bf16.mxu0 0
        %977 = vmatpush1.bf16.xpose.msra.mxu0 0
        %978 = vmatprep.subr.bf16.mxu0 0
        %979 = vmatpush1.bf16.xpose.msra.mxu0 0
        %980 = vmatprep.subr.bf16.mxu0 0
        %981 = vmatpush1.bf16.xpose.msra.mxu0 0
        %982 = vmatprep.subr.bf16.mxu0 0
        %983 = vmatpush1.bf16.xpose.msra.mxu0 0
        %984 = vmatprep.mubr.bf16.mxu0 0
        %985 = vmatmul.mubr.bf16.gmra.mrb[0].mxu0 %v947
        %v986 = vpop.f32.mrb[0].mxu0
        %v987 = vadd.f32 0.0, %v986
        %v988 = vpop.f32.mrb[0].mxu0
        %v989 = vpop.f32.mrb[0].mxu0
        %v990 = vadd.f32 0.0, %v989
        %v991 = vpop.f32.mrb[0].mxu0
        %992 = vdwg.mxu0
        %994 = vrot.lane.b32.xlu0 %v924, 96
        %v995 = vpop.permute.xlu0 %994
        %v997 = vsel %vm758, %v924, 0
        %v1000 = vsel %vm758, %v995, 0
        %1002 = vmatprep.subr.bf16.mxu0 0
        %1003 = vmatpush1.bf16.xpose.msra.mxu0 %v1000
        %1004 = vmatprep.subr.bf16.mxu0 0
        %1005 = vmatpush1.bf16.xpose.msra.mxu0 0
        %1006 = vmatprep.subr.bf16.mxu0 0
        %1007 = vmatpush1.bf16.xpose.msra.mxu0 0
        %1008 = vmatprep.subr.bf16.mxu0 0
        %1009 = vmatpush1.bf16.xpose.msra.mxu0 0
        %1010 = vmatprep.subr.bf16.mxu0 0
        %1011 = vmatpush1.bf16.xpose.msra.mxu0 0
        %1012 = vmatprep.subr.bf16.mxu0 0
        %1013 = vmatpush1.bf16.xpose.msra.mxu0 0
        %1014 = vmatprep.subr.bf16.mxu0 0
        %1015 = vmatpush1.bf16.xpose.msra.mxu0 0
        %1016 = vmatprep.subr.bf16.mxu0 0
        %1017 = vmatpush1.bf16.xpose.msra.mxu0 0
        %1018 = vmatprep.subr.bf16.mxu0 0
        %1019 = vmatpush1.bf16.xpose.msra.mxu0 0
        %1020 = vmatprep.subr.bf16.mxu0 0
        %1021 = vmatpush1.bf16.xpose.msra.mxu0 0
        %1022 = vmatprep.subr.bf16.mxu0 0
        %1023 = vmatpush1.bf16.xpose.msra.mxu0 0
        %1024 = vmatprep.subr.bf16.mxu0 0
        %1025 = vmatpush1.bf16.xpose.msra.mxu0 0
        %1026 = vmatprep.subr.bf16.mxu0 0
        %1027 = vmatpush1.bf16.xpose.msra.mxu0 0
        %1028 = vmatprep.subr.bf16.mxu0 0
        %1029 = vmatpush1.bf16.xpose.msra.mxu0 0
        %1030 = vmatprep.subr.bf16.mxu0 0
        %1031 = vmatpush1.bf16.xpose.msra.mxu0 0
        %1032 = vmatprep.subr.bf16.mxu0 0
        %1033 = vmatpush1.bf16.xpose.msra.mxu0 0
        %1034 = vmatprep.mubr.bf16.mxu0 0
        %1035 = vmatmul.mubr.bf16.gmra.mrb[0].mxu0 %v997
        %v1036 = vpop.f32.mrb[0].mxu0
        %v1037 = vadd.f32 0.0, %v1036
        %v1038 = vpop.f32.mrb[0].mxu0
        %v1039 = vpop.f32.mrb[0].mxu0
        %v1040 = vadd.f32 0.0, %v1039
        %v1041 = vpop.f32.mrb[0].mxu0
        %1042 = vdwg.mxu0
        %1044 = vrot.lane.b32.xlu0 %v925, 96
        %v1045 = vpop.permute.xlu0 %1044
        %v1047 = vsel %vm758, %v925, 0
        %v1050 = vsel %vm758, %v1045, 0
        %1052 = vmatprep.subr.bf16.mxu0 0
        %1053 = vmatpush1.bf16.xpose.msra.mxu0 %v1050
        %1054 = vmatprep.subr.bf16.mxu0 0
        %1055 = vmatpush1.bf16.xpose.msra.mxu0 0
        %1056 = vmatprep.subr.bf16.mxu0 0
        %1057 = vmatpush1.bf16.xpose.msra.mxu0 0
        %1058 = vmatprep.subr.bf16.mxu0 0
        %1059 = vmatpush1.bf16.xpose.msra.mxu0 0
        %1060 = vmatprep.subr.bf16.mxu0 0
        %1061 = vmatpush1.bf16.xpose.msra.mxu0 0
        %1062 = vmatprep.subr.bf16.mxu0 0
        %1063 = vmatpush1.bf16.xpose.msra.mxu0 0
        %1064 = vmatprep.subr.bf16.mxu0 0
        %1065 = vmatpush1.bf16.xpose.msra.mxu0 0
        %1066 = vmatprep.subr.bf16.mxu0 0
        %1067 = vmatpush1.bf16.xpose.msra.mxu0 0
        %1068 = vmatprep.subr.bf16.mxu0 0
        %1069 = vmatpush1.bf16.xpose.msra.mxu0 0
        %1070 = vmatprep.subr.bf16.mxu0 0
        %1071 = vmatpush1.bf16.xpose.msra.mxu0 0
        %1072 = vmatprep.subr.bf16.mxu0 0
        %1073 = vmatpush1.bf16.xpose.msra.mxu0 0
        %1074 = vmatprep.subr.bf16.mxu0 0
        %1075 = vmatpush1.bf16.xpose.msra.mxu0 0
        %1076 = vmatprep.subr.bf16.mxu0 0
        %1077 = vmatpush1.bf16.xpose.msra.mxu0 0
        %1078 = vmatprep.subr.bf16.mxu0 0
        %1079 = vmatpush1.bf16.xpose.msra.mxu0 0
        %1080 = vmatprep.subr.bf16.mxu0 0
        %1081 = vmatpush1.bf16.xpose.msra.mxu0 0
        %1082 = vmatprep.subr.bf16.mxu0 0
        %1083 = vmatpush1.bf16.xpose.msra.mxu0 0
        %1084 = vmatprep.mubr.bf16.mxu0 0
        %1085 = vmatmul.mubr.bf16.gmra.mrb[0].mxu0 %v1047
        %v1086 = vpop.f32.mrb[0].mxu0
        %v1087 = vadd.f32 0.0, %v1086
        %v1088 = vpop.f32.mrb[0].mxu0
        %v1089 = vpop.f32.mrb[0].mxu0
        %v1090 = vadd.f32 0.0, %v1089
        %v1091 = vpop.f32.mrb[0].mxu0
        %1092 = vdwg.mxu0
        %1094 = vrot.lane.b32.xlu0 %v926, 96
        %v1095 = vpop.permute.xlu0 %1094
        %v1097 = vsel %vm758, %v926, 0
        %v1100 = vsel %vm758, %v1095, 0
        %1102 = vmatprep.subr.bf16.mxu0 0
        %1103 = vmatpush1.bf16.xpose.msra.mxu0 %v1100
        %1104 = vmatprep.subr.bf16.mxu0 0
        %1105 = vmatpush1.bf16.xpose.msra.mxu0 0
        %1106 = vmatprep.subr.bf16.mxu0 0
        %1107 = vmatpush1.bf16.xpose.msra.mxu0 0
        %1108 = vmatprep.subr.bf16.mxu0 0
        %1109 = vmatpush1.bf16.xpose.msra.mxu0 0
        %1110 = vmatprep.subr.bf16.mxu0 0
        %1111 = vmatpush1.bf16.xpose.msra.mxu0 0
        %1112 = vmatprep.subr.bf16.mxu0 0
        %1113 = vmatpush1.bf16.xpose.msra.mxu0 0
        %1114 = vmatprep.subr.bf16.mxu0 0
        %1115 = vmatpush1.bf16.xpose.msra.mxu0 0
        %1116 = vmatprep.subr.bf16.mxu0 0
        %1117 = vmatpush1.bf16.xpose.msra.mxu0 0
        %1118 = vmatprep.subr.bf16.mxu0 0
        %1119 = vmatpush1.bf16.xpose.msra.mxu0 0
        %1120 = vmatprep.subr.bf16.mxu0 0
        %1121 = vmatpush1.bf16.xpose.msra.mxu0 0
        %1122 = vmatprep.subr.bf16.mxu0 0
        %1123 = vmatpush1.bf16.xpose.msra.mxu0 0
        %1124 = vmatprep.subr.bf16.mxu0 0
        %1125 = vmatpush1.bf16.xpose.msra.mxu0 0
        %1126 = vmatprep.subr.bf16.mxu0 0
        %1127 = vmatpush1.bf16.xpose.msra.mxu0 0
        %1128 = vmatprep.subr.bf16.mxu0 0
        %1129 = vmatpush1.bf16.xpose.msra.mxu0 0
        %1130 = vmatprep.subr.bf16.mxu0 0
        %1131 = vmatpush1.bf16.xpose.msra.mxu0 0
        %1132 = vmatprep.subr.bf16.mxu0 0
        %1133 = vmatpush1.bf16.xpose.msra.mxu0 0
        %1134 = vmatprep.mubr.bf16.mxu0 0
        %1135 = vmatmul.mubr.bf16.gmra.mrb[0].mxu0 %v1097
        %v1136 = vpop.f32.mrb[0].mxu0
        %v1137 = vadd.f32 0.0, %v1136
        %v1138 = vpop.f32.mrb[0].mxu0
        %v1139 = vpop.f32.mrb[0].mxu0
        %v1140 = vadd.f32 0.0, %v1139
        %v1141 = vpop.f32.mrb[0].mxu0
        %1142 = vdwg.mxu0
        %1144 = vrot.lane.b32.xlu0 %v927, 96
        %v1145 = vpop.permute.xlu0 %1144
        %v1147 = vsel %vm758, %v927, 0
        %v1150 = vsel %vm758, %v1145, 0
        %1152 = vmatprep.subr.bf16.mxu0 0
        %1153 = vmatpush1.bf16.xpose.msra.mxu0 %v1150
        %1154 = vmatprep.subr.bf16.mxu0 0
        %1155 = vmatpush1.bf16.xpose.msra.mxu0 0
        %1156 = vmatprep.subr.bf16.mxu0 0
        %1157 = vmatpush1.bf16.xpose.msra.mxu0 0
        %1158 = vmatprep.subr.bf16.mxu0 0
        %1159 = vmatpush1.bf16.xpose.msra.mxu0 0
        %1160 = vmatprep.subr.bf16.mxu0 0
        %1161 = vmatpush1.bf16.xpose.msra.mxu0 0
        %1162 = vmatprep.subr.bf16.mxu0 0
        %1163 = vmatpush1.bf16.xpose.msra.mxu0 0
        %1164 = vmatprep.subr.bf16.mxu0 0
        %1165 = vmatpush1.bf16.xpose.msra.mxu0 0
        %1166 = vmatprep.subr.bf16.mxu0 0
        %1167 = vmatpush1.bf16.xpose.msra.mxu0 0
        %1168 = vmatprep.subr.bf16.mxu0 0
        %1169 = vmatpush1.bf16.xpose.msra.mxu0 0
        %1170 = vmatprep.subr.bf16.mxu0 0
        %1171 = vmatpush1.bf16.xpose.msra.mxu0 0
        %1172 = vmatprep.subr.bf16.mxu0 0
        %1173 = vmatpush1.bf16.xpose.msra.mxu0 0
        %1174 = vmatprep.subr.bf16.mxu0 0
        %1175 = vmatpush1.bf16.xpose.msra.mxu0 0
        %1176 = vmatprep.subr.bf16.mxu0 0
        %1177 = vmatpush1.bf16.xpose.msra.mxu0 0
        %1178 = vmatprep.subr.bf16.mxu0 0
        %1179 = vmatpush1.bf16.xpose.msra.mxu0 0
        %1180 = vmatprep.subr.bf16.mxu0 0
        %1181 = vmatpush1.bf16.xpose.msra.mxu0 0
        %1182 = vmatprep.subr.bf16.mxu0 0
        %1183 = vmatpush1.bf16.xpose.msra.mxu0 0
        %1184 = vmatprep.mubr.bf16.mxu0 0
        %1185 = vmatmul.mubr.bf16.gmra.mrb[0].mxu0 %v1147
        %v1186 = vpop.f32.mrb[0].mxu0
        %v1187 = vadd.f32 0.0, %v1186
        %v1188 = vpop.f32.mrb[0].mxu0
        %v1189 = vpop.f32.mrb[0].mxu0
        %v1190 = vadd.f32 0.0, %v1189
        %v1191 = vpop.f32.mrb[0].mxu0
        %1192 = vdwg.mxu0
        %1194 = vrot.lane.b32.xlu0 %v928, 96
        %v1195 = vpop.permute.xlu0 %1194
        %v1197 = vsel %vm758, %v928, 0
        %v1200 = vsel %vm758, %v1195, 0
        %1202 = vmatprep.subr.bf16.mxu0 0
        %1203 = vmatpush1.bf16.xpose.msra.mxu0 %v1200
        %1204 = vmatprep.subr.bf16.mxu0 0
        %1205 = vmatpush1.bf16.xpose.msra.mxu0 0
        %1206 = vmatprep.subr.bf16.mxu0 0
        %1207 = vmatpush1.bf16.xpose.msra.mxu0 0
        %1208 = vmatprep.subr.bf16.mxu0 0
        %1209 = vmatpush1.bf16.xpose.msra.mxu0 0
        %1210 = vmatprep.subr.bf16.mxu0 0
        %1211 = vmatpush1.bf16.xpose.msra.mxu0 0
        %1212 = vmatprep.subr.bf16.mxu0 0
        %1213 = vmatpush1.bf16.xpose.msra.mxu0 0
        %1214 = vmatprep.subr.bf16.mxu0 0
        %1215 = vmatpush1.bf16.xpose.msra.mxu0 0
        %1216 = vmatprep.subr.bf16.mxu0 0
        %1217 = vmatpush1.bf16.xpose.msra.mxu0 0
        %1218 = vmatprep.subr.bf16.mxu0 0
        %1219 = vmatpush1.bf16.xpose.msra.mxu0 0
        %1220 = vmatprep.subr.bf16.mxu0 0
        %1221 = vmatpush1.bf16.xpose.msra.mxu0 0
        %1222 = vmatprep.subr.bf16.mxu0 0
        %1223 = vmatpush1.bf16.xpose.msra.mxu0 0
        %1224 = vmatprep.subr.bf16.mxu0 0
        %1225 = vmatpush1.bf16.xpose.msra.mxu0 0
        %1226 = vmatprep.subr.bf16.mxu0 0
        %1227 = vmatpush1.bf16.xpose.msra.mxu0 0
        %1228 = vmatprep.subr.bf16.mxu0 0
        %1229 = vmatpush1.bf16.xpose.msra.mxu0 0
        %1230 = vmatprep.subr.bf16.mxu0 0
        %1231 = vmatpush1.bf16.xpose.msra.mxu0 0
        %1232 = vmatprep.subr.bf16.mxu0 0
        %1233 = vmatpush1.bf16.xpose.msra.mxu0 0
        %1234 = vmatprep.mubr.bf16.mxu0 0
        %1235 = vmatmul.mubr.bf16.gmra.mrb[0].mxu0 %v1197
        %v1236 = vpop.f32.mrb[0].mxu0
        %v1237 = vadd.f32 0.0, %v1236
        %v1238 = vpop.f32.mrb[0].mxu0
        %v1239 = vpop.f32.mrb[0].mxu0
        %v1240 = vadd.f32 0.0, %v1239
        %v1241 = vpop.f32.mrb[0].mxu0
        %1242 = vdwg.mxu0
        %1244 = vrot.lane.b32.xlu0 %v929, 96
        %v1245 = vpop.permute.xlu0 %1244
        %v1247 = vsel %vm758, %v929, 0
        %v1250 = vsel %vm758, %v1245, 0
        %1252 = vmatprep.subr.bf16.mxu0 0
        %1253 = vmatpush1.bf16.xpose.msra.mxu0 %v1250
        %1254 = vmatprep.subr.bf16.mxu0 0
        %1255 = vmatpush1.bf16.xpose.msra.mxu0 0
        %1256 = vmatprep.subr.bf16.mxu0 0
        %1257 = vmatpush1.bf16.xpose.msra.mxu0 0
        %1258 = vmatprep.subr.bf16.mxu0 0
        %1259 = vmatpush1.bf16.xpose.msra.mxu0 0
        %1260 = vmatprep.subr.bf16.mxu0 0
        %1261 = vmatpush1.bf16.xpose.msra.mxu0 0
        %1262 = vmatprep.subr.bf16.mxu0 0
        %1263 = vmatpush1.bf16.xpose.msra.mxu0 0
        %1264 = vmatprep.subr.bf16.mxu0 0
        %1265 = vmatpush1.bf16.xpose.msra.mxu0 0
        %1266 = vmatprep.subr.bf16.mxu0 0
        %1267 = vmatpush1.bf16.xpose.msra.mxu0 0
        %1268 = vmatprep.subr.bf16.mxu0 0
        %1269 = vmatpush1.bf16.xpose.msra.mxu0 0
        %1270 = vmatprep.subr.bf16.mxu0 0
        %1271 = vmatpush1.bf16.xpose.msra.mxu0 0
        %1272 = vmatprep.subr.bf16.mxu0 0
        %1273 = vmatpush1.bf16.xpose.msra.mxu0 0
        %1274 = vmatprep.subr.bf16.mxu0 0
        %1275 = vmatpush1.bf16.xpose.msra.mxu0 0
        %1276 = vmatprep.subr.bf16.mxu0 0
        %1277 = vmatpush1.bf16.xpose.msra.mxu0 0
        %1278 = vmatprep.subr.bf16.mxu0 0
        %1279 = vmatpush1.bf16.xpose.msra.mxu0 0
        %1280 = vmatprep.subr.bf16.mxu0 0
        %1281 = vmatpush1.bf16.xpose.msra.mxu0 0
        %1282 = vmatprep.subr.bf16.mxu0 0
        %1283 = vmatpush1.bf16.xpose.msra.mxu0 0
        %1284 = vmatprep.mubr.bf16.mxu0 0
        %1285 = vmatmul.mubr.bf16.gmra.mrb[0].mxu0 %v1247
        %v1286 = vpop.f32.mrb[0].mxu0
        %v1287 = vadd.f32 0.0, %v1286
        %v1288 = vpop.f32.mrb[0].mxu0
        %v1289 = vpop.f32.mrb[0].mxu0
        %v1290 = vadd.f32 0.0, %v1289
        %v1291 = vpop.f32.mrb[0].mxu0
        %1292 = vdwg.mxu0
        %1294 = vrot.lane.b32.xlu0 %v930, 96
        %v1295 = vpop.permute.xlu0 %1294
        %v1297 = vsel %vm758, %v930, 0
        %v1300 = vsel %vm758, %v1295, 0
        %1302 = vmatprep.subr.bf16.mxu0 0
        %1303 = vmatpush1.bf16.xpose.msra.mxu0 %v1300
        %1304 = vmatprep.subr.bf16.mxu0 0
        %1305 = vmatpush1.bf16.xpose.msra.mxu0 0
        %1306 = vmatprep.subr.bf16.mxu0 0
        %1307 = vmatpush1.bf16.xpose.msra.mxu0 0
        %1308 = vmatprep.subr.bf16.mxu0 0
        %1309 = vmatpush1.bf16.xpose.msra.mxu0 0
        %1310 = vmatprep.subr.bf16.mxu0 0
        %1311 = vmatpush1.bf16.xpose.msra.mxu0 0
        %1312 = vmatprep.subr.bf16.mxu0 0
        %1313 = vmatpush1.bf16.xpose.msra.mxu0 0
        %1314 = vmatprep.subr.bf16.mxu0 0
        %1315 = vmatpush1.bf16.xpose.msra.mxu0 0
        %1316 = vmatprep.subr.bf16.mxu0 0
        %1317 = vmatpush1.bf16.xpose.msra.mxu0 0
        %1318 = vmatprep.subr.bf16.mxu0 0
        %1319 = vmatpush1.bf16.xpose.msra.mxu0 0
        %1320 = vmatprep.subr.bf16.mxu0 0
        %1321 = vmatpush1.bf16.xpose.msra.mxu0 0
        %1322 = vmatprep.subr.bf16.mxu0 0
        %1323 = vmatpush1.bf16.xpose.msra.mxu0 0
        %1324 = vmatprep.subr.bf16.mxu0 0
        %1325 = vmatpush1.bf16.xpose.msra.mxu0 0
        %1326 = vmatprep.subr.bf16.mxu0 0
        %1327 = vmatpush1.bf16.xpose.msra.mxu0 0
        %1328 = vmatprep.subr.bf16.mxu0 0
        %1329 = vmatpush1.bf16.xpose.msra.mxu0 0
        %1330 = vmatprep.subr.bf16.mxu0 0
        %1331 = vmatpush1.bf16.xpose.msra.mxu0 0
        %1332 = vmatprep.subr.bf16.mxu0 0
        %1333 = vmatpush1.bf16.xpose.msra.mxu0 0
        %1334 = vmatprep.mubr.bf16.mxu0 0
        %1335 = vmatmul.mubr.bf16.gmra.mrb[0].mxu0 %v1297
        %v1336 = vpop.f32.mrb[0].mxu0
        %v1337 = vadd.f32 0.0, %v1336
        %v1338 = vpop.f32.mrb[0].mxu0
        %v1339 = vpop.f32.mrb[0].mxu0
        %v1340 = vadd.f32 0.0, %v1339
        %v1341 = vpop.f32.mrb[0].mxu0
        %1342 = vdwg.mxu0
        %v1343 = vld [vmem:[#allocation5] sm:$0xff]
        %v1344 = vld [vmem:[#allocation5 + $0x8] sm:$0xff]
        %v1345 = vadd.f32 %v987, %v1343
        %v1346 = vadd.f32 %v990, %v1344
        %v1347 = vadd.f32 %v1037, %v1343
        %v1348 = vadd.f32 %v1040, %v1344
        %v1349 = vadd.f32 %v1087, %v1343
        %v1350 = vadd.f32 %v1090, %v1344
        %v1351 = vadd.f32 %v1137, %v1343
        %v1352 = vadd.f32 %v1140, %v1344
        %v1353 = vadd.f32 %v1187, %v1343
        %v1354 = vadd.f32 %v1190, %v1344
        %v1355 = vadd.f32 %v1237, %v1343
        %v1356 = vadd.f32 %v1240, %v1344
        %v1357 = vadd.f32 %v1287, %v1343
        %v1358 = vadd.f32 %v1290, %v1344
        %v1359 = vadd.f32 %v1337, %v1343
        %v1360 = vadd.f32 %v1340, %v1344
        %vm1361 = vcmask 130048
        %v1362 = vsel %vm1361, %v1345, -inf
        %1363 = vmax.xlane.f32.xlu0 %v1362
        %v1364 = vpop.xlane.xlu0 %1363
        %v1365 = vsel %vm1361, %v1346, -inf
        %1366 = vmax.xlane.f32.xlu0 %v1365
        %v1367 = vpop.xlane.xlu0 %1366
        %v1368 = vsel %vm1361, %v1347, -inf
        %1369 = vmax.xlane.f32.xlu0 %v1368
        %v1370 = vpop.xlane.xlu0 %1369
        %v1371 = vsel %vm1361, %v1348, -inf
        %1372 = vmax.xlane.f32.xlu0 %v1371
        %v1373 = vpop.xlane.xlu0 %1372
        %v1374 = vsel %vm1361, %v1349, -inf
        %1375 = vmax.xlane.f32.xlu0 %v1374
        %v1376 = vpop.xlane.xlu0 %1375
        %v1377 = vsel %vm1361, %v1350, -inf
        %1378 = vmax.xlane.f32.xlu0 %v1377
        %v1379 = vpop.xlane.xlu0 %1378
        %v1380 = vsel %vm1361, %v1351, -inf
        %1381 = vmax.xlane.f32.xlu0 %v1380
        %v1382 = vpop.xlane.xlu0 %1381
        %v1383 = vsel %vm1361, %v1352, -inf
        %1384 = vmax.xlane.f32.xlu0 %v1383
        %v1385 = vpop.xlane.xlu0 %1384
        %v1386 = vsel %vm1361, %v1353, -inf
        %1387 = vmax.xlane.f32.xlu0 %v1386
        %v1388 = vpop.xlane.xlu0 %1387
        %v1389 = vsel %vm1361, %v1354, -inf
        %1390 = vmax.xlane.f32.xlu0 %v1389
        %v1391 = vpop.xlane.xlu0 %1390
        %v1392 = vsel %vm1361, %v1355, -inf
        %1393 = vmax.xlane.f32.xlu0 %v1392
        %v1394 = vpop.xlane.xlu0 %1393
        %v1395 = vsel %vm1361, %v1356, -inf
        %1396 = vmax.xlane.f32.xlu0 %v1395
        %v1397 = vpop.xlane.xlu0 %1396
        %v1398 = vsel %vm1361, %v1357, -inf
        %1399 = vmax.xlane.f32.xlu0 %v1398
        %v1400 = vpop.xlane.xlu0 %1399
        %v1401 = vsel %vm1361, %v1358, -inf
        %1402 = vmax.xlane.f32.xlu0 %v1401
        %v1403 = vpop.xlane.xlu0 %1402
        %v1404 = vsel %vm1361, %v1359, -inf
        %1405 = vmax.xlane.f32.xlu0 %v1404
        %v1406 = vpop.xlane.xlu0 %1405
        %v1407 = vsel %vm1361, %v1360, -inf
        %1408 = vmax.xlane.f32.xlu0 %v1407
        %v1409 = vpop.xlane.xlu0 %1408
        %v1410 = vsub.f32 %v1345, %v1364
        %v1411 = vsub.f32 %v1346, %v1367
        %v1412 = vsub.f32 %v1347, %v1370
        %v1413 = vsub.f32 %v1348, %v1373
        %v1414 = vsub.f32 %v1349, %v1376
        %v1415 = vsub.f32 %v1350, %v1379
        %v1416 = vsub.f32 %v1351, %v1382
        %v1417 = vsub.f32 %v1352, %v1385
        %v1418 = vsub.f32 %v1353, %v1388
        %v1419 = vsub.f32 %v1354, %v1391
        %v1420 = vsub.f32 %v1355, %v1394
        %v1421 = vsub.f32 %v1356, %v1397
        %v1422 = vsub.f32 %v1357, %v1400
        %v1423 = vsub.f32 %v1358, %v1403
        %v1424 = vsub.f32 %v1359, %v1406
        %v1425 = vsub.f32 %v1360, %v1409
        %v1426 = vmul.f32 %v1410, 1.442695
        %v1427 = vpow.pop %v1426
        %v1428 = vmul.f32 %v1411, 1.442695
        %v1429 = vpow.pop %v1428
        %v1430 = vmul.f32 %v1412, 1.442695
        %v1431 = vpow.pop %v1430
        %v1432 = vmul.f32 %v1413, 1.442695
        %v1433 = vpow.pop %v1432
        %v1434 = vmul.f32 %v1414, 1.442695
        %v1435 = vpow.pop %v1434
        %v1436 = vmul.f32 %v1415, 1.442695
        %v1437 = vpow.pop %v1436
        %v1438 = vmul.f32 %v1416, 1.442695
        %v1439 = vpow.pop %v1438
        %v1440 = vmul.f32 %v1417, 1.442695
        %v1441 = vpow.pop %v1440
        %v1442 = vmul.f32 %v1418, 1.442695
        %v1443 = vpow.pop %v1442
        %v1444 = vmul.f32 %v1419, 1.442695
        %v1445 = vpow.pop %v1444
        %v1446 = vmul.f32 %v1420, 1.442695
        %v1447 = vpow.pop %v1446
        %v1448 = vmul.f32 %v1421, 1.442695
        %v1449 = vpow.pop %v1448
        %v1450 = vmul.f32 %v1422, 1.442695
        %v1451 = vpow.pop %v1450
        %v1452 = vmul.f32 %v1423, 1.442695
        %v1453 = vpow.pop %v1452
        %v1454 = vmul.f32 %v1424, 1.442695
        %v1455 = vpow.pop %v1454
        %v1456 = vmul.f32 %v1425, 1.442695
        %v1457 = vpow.pop %v1456
        %v1458 = vsel %vm1361, %v1427, 0.0
        %1459 = vadd.xlane.f32.xlu0 %v1458
        %v1460 = vpop.xlane.xlu0 %1459
        %v1461 = vsel %vm1361, %v1429, 0.0
        %1462 = vadd.xlane.f32.xlu0 %v1461
        %v1463 = vpop.xlane.xlu0 %1462
        %v1464 = vsel %vm1361, %v1431, 0.0
        %1465 = vadd.xlane.f32.xlu0 %v1464
        %v1466 = vpop.xlane.xlu0 %1465
        %v1467 = vsel %vm1361, %v1433, 0.0
        %1468 = vadd.xlane.f32.xlu0 %v1467
        %v1469 = vpop.xlane.xlu0 %1468
        %v1470 = vsel %vm1361, %v1435, 0.0
        %1471 = vadd.xlane.f32.xlu0 %v1470
        %v1472 = vpop.xlane.xlu0 %1471
        %v1473 = vsel %vm1361, %v1437, 0.0
        %1474 = vadd.xlane.f32.xlu0 %v1473
        %v1475 = vpop.xlane.xlu0 %1474
        %v1476 = vsel %vm1361, %v1439, 0.0
        %1477 = vadd.xlane.f32.xlu0 %v1476
        %v1478 = vpop.xlane.xlu0 %1477
        %v1479 = vsel %vm1361, %v1441, 0.0
        %1480 = vadd.xlane.f32.xlu0 %v1479
        %v1481 = vpop.xlane.xlu0 %1480
        %v1482 = vsel %vm1361, %v1443, 0.0
        %1483 = vadd.xlane.f32.xlu0 %v1482
        %v1484 = vpop.xlane.xlu0 %1483
        %v1485 = vsel %vm1361, %v1445, 0.0
        %1486 = vadd.xlane.f32.xlu0 %v1485
        %v1487 = vpop.xlane.xlu0 %1486
        %v1488 = vsel %vm1361, %v1447, 0.0
        %1489 = vadd.xlane.f32.xlu0 %v1488
        %v1490 = vpop.xlane.xlu0 %1489
        %v1491 = vsel %vm1361, %v1449, 0.0
        %1492 = vadd.xlane.f32.xlu0 %v1491
        %v1493 = vpop.xlane.xlu0 %1492
        %v1494 = vsel %vm1361, %v1451, 0.0
        %1495 = vadd.xlane.f32.xlu0 %v1494
        %v1496 = vpop.xlane.xlu0 %1495
        %v1497 = vsel %vm1361, %v1453, 0.0
        %1498 = vadd.xlane.f32.xlu0 %v1497
        %v1499 = vpop.xlane.xlu0 %1498
        %v1500 = vsel %vm1361, %v1455, 0.0
        %1501 = vadd.xlane.f32.xlu0 %v1500
        %v1502 = vpop.xlane.xlu0 %1501
        %v1503 = vsel %vm1361, %v1457, 0.0
        %1504 = vadd.xlane.f32.xlu0 %v1503
        %v1505 = vpop.xlane.xlu0 %1504
        %v1506 = vrcp.pop %v1460
        %v1507 = vrcp.pop %v1463
        %v1508 = vrcp.pop %v1466
        %v1509 = vrcp.pop %v1469
        %v1510 = vrcp.pop %v1472
        %v1511 = vrcp.pop %v1475
        %v1512 = vrcp.pop %v1478
        %v1513 = vrcp.pop %v1481
        %v1514 = vrcp.pop %v1484
        %v1515 = vrcp.pop %v1487
        %v1516 = vrcp.pop %v1490
        %v1517 = vrcp.pop %v1493
        %v1518 = vrcp.pop %v1496
        %v1519 = vrcp.pop %v1499
        %v1520 = vrcp.pop %v1502
        %v1521 = vrcp.pop %v1505
        %v1522 = vmul.f32 %v1427, %v1506
        %v1523 = vmul.f32 %v1429, %v1507
        %v1524 = vmul.f32 %v1431, %v1508
        %v1525 = vmul.f32 %v1433, %v1509
        %v1526 = vmul.f32 %v1435, %v1510
        %v1527 = vmul.f32 %v1437, %v1511
        %v1528 = vmul.f32 %v1439, %v1512
        %v1529 = vmul.f32 %v1441, %v1513
        %v1530 = vmul.f32 %v1443, %v1514
        %v1531 = vmul.f32 %v1445, %v1515
        %v1532 = vmul.f32 %v1447, %v1516
        %v1533 = vmul.f32 %v1449, %v1517
        %v1534 = vmul.f32 %v1451, %v1518
        %v1535 = vmul.f32 %v1453, %v1519
        %v1536 = vmul.f32 %v1455, %v1520
        %v1537 = vmul.f32 %v1457, %v1521
        %v1538 = vpack.c.bf16 %v1523, %v1522
        %v1539 = vpack.c.bf16 %v1525, %v1524
        %v1540 = vpack.c.bf16 %v1527, %v1526
        %v1541 = vpack.c.bf16 %v1529, %v1528
        %v1542 = vpack.c.bf16 %v1531, %v1530
        %v1543 = vpack.c.bf16 %v1533, %v1532
        %v1544 = vpack.c.bf16 %v1535, %v1534
        %v1545 = vpack.c.bf16 %v1537, %v1536
        %1547 = vrot.lane.b32.xlu0 %v931, 64
        %v1548 = vpop.permute.xlu0 %1547
        %v1551 = vsel %vm1361, %v1538, 0
        %1553 = vmatprep.subr.bf16.mxu0 0
        %1554 = vmatpush1.bf16.msra.mxu0 %v1548
        %1555 = vmatprep.subr.bf16.mxu0 0
        %1556 = vmatpush1.bf16.msra.mxu0 0
        %1557 = vmatprep.subr.bf16.mxu0 0
        %1558 = vmatpush1.bf16.msra.mxu0 0
        %1559 = vmatprep.subr.bf16.mxu0 0
        %1560 = vmatpush1.bf16.msra.mxu0 0
        %1561 = vmatprep.subr.bf16.mxu0 0
        %1562 = vmatpush1.bf16.msra.mxu0 0
        %1563 = vmatprep.subr.bf16.mxu0 0
        %1564 = vmatpush1.bf16.msra.mxu0 0
        %1565 = vmatprep.subr.bf16.mxu0 0
        %1566 = vmatpush1.bf16.msra.mxu0 0
        %1567 = vmatprep.subr.bf16.mxu0 0
        %1568 = vmatpush1.bf16.msra.mxu0 0
        %1569 = vmatprep.subr.bf16.mxu0 0
        %1570 = vmatpush1.bf16.msra.mxu0 0
        %1571 = vmatprep.subr.bf16.mxu0 0
        %1572 = vmatpush1.bf16.msra.mxu0 0
        %1573 = vmatprep.subr.bf16.mxu0 0
        %1574 = vmatpush1.bf16.msra.mxu0 0
        %1575 = vmatprep.subr.bf16.mxu0 0
        %1576 = vmatpush1.bf16.msra.mxu0 0
        %1577 = vmatprep.subr.bf16.mxu0 0
        %1578 = vmatpush1.bf16.msra.mxu0 0
        %1579 = vmatprep.subr.bf16.mxu0 0
        %1580 = vmatpush1.bf16.msra.mxu0 0
        %1581 = vmatprep.subr.bf16.mxu0 0
        %1582 = vmatpush1.bf16.msra.mxu0 0
        %1583 = vmatprep.subr.bf16.mxu0 0
        %1584 = vmatpush1.bf16.msra.mxu0 0
        %1585 = vmatprep.mubr.bf16.mxu0 0
        %1586 = vmatmul.mubr.bf16.gmra.mrb[0].mxu0 %v1551
        %v1587 = vpop.f32.mrb[0].mxu0
        %v1588 = vadd.f32 0.0, %v1587
        %v1589 = vpop.f32.mrb[0].mxu0
        %v1590 = vpop.f32.mrb[0].mxu0
        %v1591 = vadd.f32 0.0, %v1590
        %v1592 = vpop.f32.mrb[0].mxu0
        %1593 = vdwg.mxu0
        %1595 = vrot.lane.b32.xlu0 %v932, 64
        %v1596 = vpop.permute.xlu0 %1595
        %v1599 = vsel %vm1361, %v1539, 0
        %1601 = vmatprep.subr.bf16.mxu0 0
        %1602 = vmatpush1.bf16.msra.mxu0 %v1596
        %1603 = vmatprep.subr.bf16.mxu0 0
        %1604 = vmatpush1.bf16.msra.mxu0 0
        %1605 = vmatprep.subr.bf16.mxu0 0
        %1606 = vmatpush1.bf16.msra.mxu0 0
        %1607 = vmatprep.subr.bf16.mxu0 0
        %1608 = vmatpush1.bf16.msra.mxu0 0
        %1609 = vmatprep.subr.bf16.mxu0 0
        %1610 = vmatpush1.bf16.msra.mxu0 0
        %1611 = vmatprep.subr.bf16.mxu0 0
        %1612 = vmatpush1.bf16.msra.mxu0 0
        %1613 = vmatprep.subr.bf16.mxu0 0
        %1614 = vmatpush1.bf16.msra.mxu0 0
        %1615 = vmatprep.subr.bf16.mxu0 0
        %1616 = vmatpush1.bf16.msra.mxu0 0
        %1617 = vmatprep.subr.bf16.mxu0 0
        %1618 = vmatpush1.bf16.msra.mxu0 0
        %1619 = vmatprep.subr.bf16.mxu0 0
        %1620 = vmatpush1.bf16.msra.mxu0 0
        %1621 = vmatprep.subr.bf16.mxu0 0
        %1622 = vmatpush1.bf16.msra.mxu0 0
        %1623 = vmatprep.subr.bf16.mxu0 0
        %1624 = vmatpush1.bf16.msra.mxu0 0
        %1625 = vmatprep.subr.bf16.mxu0 0
        %1626 = vmatpush1.bf16.msra.mxu0 0
        %1627 = vmatprep.subr.bf16.mxu0 0
        %1628 = vmatpush1.bf16.msra.mxu0 0
        %1629 = vmatprep.subr.bf16.mxu0 0
        %1630 = vmatpush1.bf16.msra.mxu0 0
        %1631 = vmatprep.subr.bf16.mxu0 0
        %1632 = vmatpush1.bf16.msra.mxu0 0
        %1633 = vmatprep.mubr.bf16.mxu0 0
        %1634 = vmatmul.mubr.bf16.gmra.mrb[0].mxu0 %v1599
        %v1635 = vpop.f32.mrb[0].mxu0
        %v1636 = vadd.f32 0.0, %v1635
        %v1637 = vpop.f32.mrb[0].mxu0
        %v1638 = vpop.f32.mrb[0].mxu0
        %v1639 = vadd.f32 0.0, %v1638
        %v1640 = vpop.f32.mrb[0].mxu0
        %1641 = vdwg.mxu0
        %1643 = vrot.lane.b32.xlu0 %v933, 64
        %v1644 = vpop.permute.xlu0 %1643
        %v1647 = vsel %vm1361, %v1540, 0
        %1649 = vmatprep.subr.bf16.mxu0 0
        %1650 = vmatpush1.bf16.msra.mxu0 %v1644
        %1651 = vmatprep.subr.bf16.mxu0 0
        %1652 = vmatpush1.bf16.msra.mxu0 0
        %1653 = vmatprep.subr.bf16.mxu0 0
        %1654 = vmatpush1.bf16.msra.mxu0 0
        %1655 = vmatprep.subr.bf16.mxu0 0
        %1656 = vmatpush1.bf16.msra.mxu0 0
        %1657 = vmatprep.subr.bf16.mxu0 0
        %1658 = vmatpush1.bf16.msra.mxu0 0
        %1659 = vmatprep.subr.bf16.mxu0 0
        %1660 = vmatpush1.bf16.msra.mxu0 0
        %1661 = vmatprep.subr.bf16.mxu0 0
        %1662 = vmatpush1.bf16.msra.mxu0 0
        %1663 = vmatprep.subr.bf16.mxu0 0
        %1664 = vmatpush1.bf16.msra.mxu0 0
        %1665 = vmatprep.subr.bf16.mxu0 0
        %1666 = vmatpush1.bf16.msra.mxu0 0
        %1667 = vmatprep.subr.bf16.mxu0 0
        %1668 = vmatpush1.bf16.msra.mxu0 0
        %1669 = vmatprep.subr.bf16.mxu0 0
        %1670 = vmatpush1.bf16.msra.mxu0 0
        %1671 = vmatprep.subr.bf16.mxu0 0
        %1672 = vmatpush1.bf16.msra.mxu0 0
        %1673 = vmatprep.subr.bf16.mxu0 0
        %1674 = vmatpush1.bf16.msra.mxu0 0
        %1675 = vmatprep.subr.bf16.mxu0 0
        %1676 = vmatpush1.bf16.msra.mxu0 0
        %1677 = vmatprep.subr.bf16.mxu0 0
        %1678 = vmatpush1.bf16.msra.mxu0 0
        %1679 = vmatprep.subr.bf16.mxu0 0
        %1680 = vmatpush1.bf16.msra.mxu0 0
        %1681 = vmatprep.mubr.bf16.mxu0 0
        %1682 = vmatmul.mubr.bf16.gmra.mrb[0].mxu0 %v1647
        %v1683 = vpop.f32.mrb[0].mxu0
        %v1684 = vadd.f32 0.0, %v1683
        %v1685 = vpop.f32.mrb[0].mxu0
        %v1686 = vpop.f32.mrb[0].mxu0
        %v1687 = vadd.f32 0.0, %v1686
        %v1688 = vpop.f32.mrb[0].mxu0
        %1689 = vdwg.mxu0
        %1691 = vrot.lane.b32.xlu0 %v934, 64
        %v1692 = vpop.permute.xlu0 %1691
        %v1695 = vsel %vm1361, %v1541, 0
        %1697 = vmatprep.subr.bf16.mxu0 0
        %1698 = vmatpush1.bf16.msra.mxu0 %v1692
        %1699 = vmatprep.subr.bf16.mxu0 0
        %1700 = vmatpush1.bf16.msra.mxu0 0
        %1701 = vmatprep.subr.bf16.mxu0 0
        %1702 = vmatpush1.bf16.msra.mxu0 0
        %1703 = vmatprep.subr.bf16.mxu0 0
        %1704 = vmatpush1.bf16.msra.mxu0 0
        %1705 = vmatprep.subr.bf16.mxu0 0
        %1706 = vmatpush1.bf16.msra.mxu0 0
        %1707 = vmatprep.subr.bf16.mxu0 0
        %1708 = vmatpush1.bf16.msra.mxu0 0
        %1709 = vmatprep.subr.bf16.mxu0 0
        %1710 = vmatpush1.bf16.msra.mxu0 0
        %1711 = vmatprep.subr.bf16.mxu0 0
        %1712 = vmatpush1.bf16.msra.mxu0 0
        %1713 = vmatprep.subr.bf16.mxu0 0
        %1714 = vmatpush1.bf16.msra.mxu0 0
        %1715 = vmatprep.subr.bf16.mxu0 0
        %1716 = vmatpush1.bf16.msra.mxu0 0
        %1717 = vmatprep.subr.bf16.mxu0 0
        %1718 = vmatpush1.bf16.msra.mxu0 0
        %1719 = vmatprep.subr.bf16.mxu0 0
        %1720 = vmatpush1.bf16.msra.mxu0 0
        %1721 = vmatprep.subr.bf16.mxu0 0
        %1722 = vmatpush1.bf16.msra.mxu0 0
        %1723 = vmatprep.subr.bf16.mxu0 0
        %1724 = vmatpush1.bf16.msra.mxu0 0
        %1725 = vmatprep.subr.bf16.mxu0 0
        %1726 = vmatpush1.bf16.msra.mxu0 0
        %1727 = vmatprep.subr.bf16.mxu0 0
        %1728 = vmatpush1.bf16.msra.mxu0 0
        %1729 = vmatprep.mubr.bf16.mxu0 0
        %1730 = vmatmul.mubr.bf16.gmra.mrb[0].mxu0 %v1695
        %v1731 = vpop.f32.mrb[0].mxu0
        %v1732 = vadd.f32 0.0, %v1731
        %v1733 = vpop.f32.mrb[0].mxu0
        %v1734 = vpop.f32.mrb[0].mxu0
        %v1735 = vadd.f32 0.0, %v1734
        %v1736 = vpop.f32.mrb[0].mxu0
        %1737 = vdwg.mxu0
        %1739 = vrot.lane.b32.xlu0 %v935, 64
        %v1740 = vpop.permute.xlu0 %1739
        %v1743 = vsel %vm1361, %v1542, 0
        %1745 = vmatprep.subr.bf16.mxu0 0
        %1746 = vmatpush1.bf16.msra.mxu0 %v1740
        %1747 = vmatprep.subr.bf16.mxu0 0
        %1748 = vmatpush1.bf16.msra.mxu0 0
        %1749 = vmatprep.subr.bf16.mxu0 0
        %1750 = vmatpush1.bf16.msra.mxu0 0
        %1751 = vmatprep.subr.bf16.mxu0 0
        %1752 = vmatpush1.bf16.msra.mxu0 0
        %1753 = vmatprep.subr.bf16.mxu0 0
        %1754 = vmatpush1.bf16.msra.mxu0 0
        %1755 = vmatprep.subr.bf16.mxu0 0
        %1756 = vmatpush1.bf16.msra.mxu0 0
        %1757 = vmatprep.subr.bf16.mxu0 0
        %1758 = vmatpush1.bf16.msra.mxu0 0
        %1759 = vmatprep.subr.bf16.mxu0 0
        %1760 = vmatpush1.bf16.msra.mxu0 0
        %1761 = vmatprep.subr.bf16.mxu0 0
        %1762 = vmatpush1.bf16.msra.mxu0 0
        %1763 = vmatprep.subr.bf16.mxu0 0
        %1764 = vmatpush1.bf16.msra.mxu0 0
        %1765 = vmatprep.subr.bf16.mxu0 0
        %1766 = vmatpush1.bf16.msra.mxu0 0
        %1767 = vmatprep.subr.bf16.mxu0 0
        %1768 = vmatpush1.bf16.msra.mxu0 0
        %1769 = vmatprep.subr.bf16.mxu0 0
        %1770 = vmatpush1.bf16.msra.mxu0 0
        %1771 = vmatprep.subr.bf16.mxu0 0
        %1772 = vmatpush1.bf16.msra.mxu0 0
        %1773 = vmatprep.subr.bf16.mxu0 0
        %1774 = vmatpush1.bf16.msra.mxu0 0
        %1775 = vmatprep.subr.bf16.mxu0 0
        %1776 = vmatpush1.bf16.msra.mxu0 0
        %1777 = vmatprep.mubr.bf16.mxu0 0
        %1778 = vmatmul.mubr.bf16.gmra.mrb[0].mxu0 %v1743
        %v1779 = vpop.f32.mrb[0].mxu0
        %v1780 = vadd.f32 0.0, %v1779
        %v1781 = vpop.f32.mrb[0].mxu0
        %v1782 = vpop.f32.mrb[0].mxu0
        %v1783 = vadd.f32 0.0, %v1782
        %v1784 = vpop.f32.mrb[0].mxu0
        %1785 = vdwg.mxu0
        %1787 = vrot.lane.b32.xlu0 %v936, 64
        %v1788 = vpop.permute.xlu0 %1787
        %v1791 = vsel %vm1361, %v1543, 0
        %1793 = vmatprep.subr.bf16.mxu0 0
        %1794 = vmatpush1.bf16.msra.mxu0 %v1788
        %1795 = vmatprep.subr.bf16.mxu0 0
        %1796 = vmatpush1.bf16.msra.mxu0 0
        %1797 = vmatprep.subr.bf16.mxu0 0
        %1798 = vmatpush1.bf16.msra.mxu0 0
        %1799 = vmatprep.subr.bf16.mxu0 0
        %1800 = vmatpush1.bf16.msra.mxu0 0
        %1801 = vmatprep.subr.bf16.mxu0 0
        %1802 = vmatpush1.bf16.msra.mxu0 0
        %1803 = vmatprep.subr.bf16.mxu0 0
        %1804 = vmatpush1.bf16.msra.mxu0 0
        %1805 = vmatprep.subr.bf16.mxu0 0
        %1806 = vmatpush1.bf16.msra.mxu0 0
        %1807 = vmatprep.subr.bf16.mxu0 0
        %1808 = vmatpush1.bf16.msra.mxu0 0
        %1809 = vmatprep.subr.bf16.mxu0 0
        %1810 = vmatpush1.bf16.msra.mxu0 0
        %1811 = vmatprep.subr.bf16.mxu0 0
        %1812 = vmatpush1.bf16.msra.mxu0 0
        %1813 = vmatprep.subr.bf16.mxu0 0
        %1814 = vmatpush1.bf16.msra.mxu0 0
        %1815 = vmatprep.subr.bf16.mxu0 0
        %1816 = vmatpush1.bf16.msra.mxu0 0
        %1817 = vmatprep.subr.bf16.mxu0 0
        %1818 = vmatpush1.bf16.msra.mxu0 0
        %1819 = vmatprep.subr.bf16.mxu0 0
        %1820 = vmatpush1.bf16.msra.mxu0 0
        %1821 = vmatprep.subr.bf16.mxu0 0
        %1822 = vmatpush1.bf16.msra.mxu0 0
        %1823 = vmatprep.subr.bf16.mxu0 0
        %1824 = vmatpush1.bf16.msra.mxu0 0
        %1825 = vmatprep.mubr.bf16.mxu0 0
        %1826 = vmatmul.mubr.bf16.gmra.mrb[0].mxu0 %v1791
        %v1827 = vpop.f32.mrb[0].mxu0
        %v1828 = vadd.f32 0.0, %v1827
        %v1829 = vpop.f32.mrb[0].mxu0
        %v1830 = vpop.f32.mrb[0].mxu0
        %v1831 = vadd.f32 0.0, %v1830
        %v1832 = vpop.f32.mrb[0].mxu0
        %1833 = vdwg.mxu0
        %1835 = vrot.lane.b32.xlu0 %v937, 64
        %v1836 = vpop.permute.xlu0 %1835
        %v1839 = vsel %vm1361, %v1544, 0
        %1841 = vmatprep.subr.bf16.mxu0 0
        %1842 = vmatpush1.bf16.msra.mxu0 %v1836
        %1843 = vmatprep.subr.bf16.mxu0 0
        %1844 = vmatpush1.bf16.msra.mxu0 0
        %1845 = vmatprep.subr.bf16.mxu0 0
        %1846 = vmatpush1.bf16.msra.mxu0 0
        %1847 = vmatprep.subr.bf16.mxu0 0
        %1848 = vmatpush1.bf16.msra.mxu0 0
        %1849 = vmatprep.subr.bf16.mxu0 0
        %1850 = vmatpush1.bf16.msra.mxu0 0
        %1851 = vmatprep.subr.bf16.mxu0 0
        %1852 = vmatpush1.bf16.msra.mxu0 0
        %1853 = vmatprep.subr.bf16.mxu0 0
        %1854 = vmatpush1.bf16.msra.mxu0 0
        %1855 = vmatprep.subr.bf16.mxu0 0
        %1856 = vmatpush1.bf16.msra.mxu0 0
        %1857 = vmatprep.subr.bf16.mxu0 0
        %1858 = vmatpush1.bf16.msra.mxu0 0
        %1859 = vmatprep.subr.bf16.mxu0 0
        %1860 = vmatpush1.bf16.msra.mxu0 0
        %1861 = vmatprep.subr.bf16.mxu0 0
        %1862 = vmatpush1.bf16.msra.mxu0 0
        %1863 = vmatprep.subr.bf16.mxu0 0
        %1864 = vmatpush1.bf16.msra.mxu0 0
        %1865 = vmatprep.subr.bf16.mxu0 0
        %1866 = vmatpush1.bf16.msra.mxu0 0
        %1867 = vmatprep.subr.bf16.mxu0 0
        %1868 = vmatpush1.bf16.msra.mxu0 0
        %1869 = vmatprep.subr.bf16.mxu0 0
        %1870 = vmatpush1.bf16.msra.mxu0 0
        %1871 = vmatprep.subr.bf16.mxu0 0
        %1872 = vmatpush1.bf16.msra.mxu0 0
        %1873 = vmatprep.mubr.bf16.mxu0 0
        %1874 = vmatmul.mubr.bf16.gmra.mrb[0].mxu0 %v1839
        %v1875 = vpop.f32.mrb[0].mxu0
        %v1876 = vadd.f32 0.0, %v1875
        %v1877 = vpop.f32.mrb[0].mxu0
        %v1878 = vpop.f32.mrb[0].mxu0
        %v1879 = vadd.f32 0.0, %v1878
        %v1880 = vpop.f32.mrb[0].mxu0
        %1881 = vdwg.mxu0
        %1883 = vrot.lane.b32.xlu0 %v938, 64
        %v1884 = vpop.permute.xlu0 %1883
        %v1887 = vsel %vm1361, %v1545, 0
        %1889 = vmatprep.subr.bf16.mxu0 0
        %1890 = vmatpush1.bf16.msra.mxu0 %v1884
        %1891 = vmatprep.subr.bf16.mxu0 0
        %1892 = vmatpush1.bf16.msra.mxu0 0
        %1893 = vmatprep.subr.bf16.mxu0 0
        %1894 = vmatpush1.bf16.msra.mxu0 0
        %1895 = vmatprep.subr.bf16.mxu0 0
        %1896 = vmatpush1.bf16.msra.mxu0 0
        %1897 = vmatprep.subr.bf16.mxu0 0
        %1898 = vmatpush1.bf16.msra.mxu0 0
        %1899 = vmatprep.subr.bf16.mxu0 0
        %1900 = vmatpush1.bf16.msra.mxu0 0
        %1901 = vmatprep.subr.bf16.mxu0 0
        %1902 = vmatpush1.bf16.msra.mxu0 0
        %1903 = vmatprep.subr.bf16.mxu0 0
        %1904 = vmatpush1.bf16.msra.mxu0 0
        %1905 = vmatprep.subr.bf16.mxu0 0
        %1906 = vmatpush1.bf16.msra.mxu0 0
        %1907 = vmatprep.subr.bf16.mxu0 0
        %1908 = vmatpush1.bf16.msra.mxu0 0
        %1909 = vmatprep.subr.bf16.mxu0 0
        %1910 = vmatpush1.bf16.msra.mxu0 0
        %1911 = vmatprep.subr.bf16.mxu0 0
        %1912 = vmatpush1.bf16.msra.mxu0 0
        %1913 = vmatprep.subr.bf16.mxu0 0
        %1914 = vmatpush1.bf16.msra.mxu0 0
        %1915 = vmatprep.subr.bf16.mxu0 0
        %1916 = vmatpush1.bf16.msra.mxu0 0
        %1917 = vmatprep.subr.bf16.mxu0 0
        %1918 = vmatpush1.bf16.msra.mxu0 0
        %1919 = vmatprep.subr.bf16.mxu0 0
        %1920 = vmatpush1.bf16.msra.mxu0 0
        %1921 = vmatprep.mubr.bf16.mxu0 0
        %1922 = vmatmul.mubr.bf16.gmra.mrb[0].mxu0 %v1887
        %v1923 = vpop.f32.mrb[0].mxu0
        %v1924 = vadd.f32 0.0, %v1923
        %v1925 = vpop.f32.mrb[0].mxu0
        %v1926 = vpop.f32.mrb[0].mxu0
        %v1927 = vadd.f32 0.0, %v1926
        %v1928 = vpop.f32.mrb[0].mxu0
        %1929 = vdwg.mxu0
        %v1930 = vpack.c.bf16 %v1591, %v1588
        %v1931 = vpack.c.bf16 %v1639, %v1636
        %v1932 = vpack.c.bf16 %v1687, %v1684
        %v1933 = vpack.c.bf16 %v1735, %v1732
        %v1934 = vpack.c.bf16 %v1783, %v1780
        %v1935 = vpack.c.bf16 %v1831, %v1828
        %v1936 = vpack.c.bf16 %v1879, %v1876
        %v1937 = vpack.c.bf16 %v1927, %v1924
        %1938 = vrot.lane.b32.xlu0 %v923, 120
        %v1939 = vpop.permute.xlu0 %1938
        %1940 = vrot.lane.b32.xlu0 %v923, 88
        %v1941 = vpop.permute.xlu0 %1940
        %v1943 = vsel %vm758, %v1939, 0
        %v1946 = vsel %vm758, %v1941, 0
        %1948 = vmatprep.subr.bf16.mxu0 0
        %1949 = vmatpush1.bf16.xpose.msra.mxu0 %v1946
        %1950 = vmatprep.subr.bf16.mxu0 0
        %1951 = vmatpush1.bf16.xpose.msra.mxu0 0
        %1952 = vmatprep.subr.bf16.mxu0 0
        %1953 = vmatpush1.bf16.xpose.msra.mxu0 0
        %1954 = vmatprep.subr.bf16.mxu0 0
        %1955 = vmatpush1.bf16.xpose.msra.mxu0 0
        %1956 = vmatprep.subr.bf16.mxu0 0
        %1957 = vmatpush1.bf16.xpose.msra.mxu0 0
        %1958 = vmatprep.subr.bf16.mxu0 0
        %1959 = vmatpush1.bf16.xpose.msra.mxu0 0
        %1960 = vmatprep.subr.bf16.mxu0 0
        %1961 = vmatpush1.bf16.xpose.msra.mxu0 0
        %1962 = vmatprep.subr.bf16.mxu0 0
        %1963 = vmatpush1.bf16.xpose.msra.mxu0 0
        %1964 = vmatprep.subr.bf16.mxu0 0
        %1965 = vmatpush1.bf16.xpose.msra.mxu0 0
        %1966 = vmatprep.subr.bf16.mxu0 0
        %1967 = vmatpush1.bf16.xpose.msra.mxu0 0
        %1968 = vmatprep.subr.bf16.mxu0 0
        %1969 = vmatpush1.bf16.xpose.msra.mxu0 0
        %1970 = vmatprep.subr.bf16.mxu0 0
        %1971 = vmatpush1.bf16.xpose.msra.mxu0 0
        %1972 = vmatprep.subr.bf16.mxu0 0
        %1973 = vmatpush1.bf16.xpose.msra.mxu0 0
        %1974 = vmatprep.subr.bf16.mxu0 0
        %1975 = vmatpush1.bf16.xpose.msra.mxu0 0
        %1976 = vmatprep.subr.bf16.mxu0 0
        %1977 = vmatpush1.bf16.xpose.msra.mxu0 0
        %1978 = vmatprep.subr.bf16.mxu0 0
        %1979 = vmatpush1.bf16.xpose.msra.mxu0 0
        %1980 = vmatprep.mubr.bf16.mxu0 0
        %1981 = vmatmul.mubr.bf16.gmra.mrb[0].mxu0 %v1943
        %v1982 = vpop.f32.mrb[0].mxu0
        %v1983 = vadd.f32 0.0, %v1982
        %v1984 = vpop.f32.mrb[0].mxu0
        %v1985 = vpop.f32.mrb[0].mxu0
        %v1986 = vadd.f32 0.0, %v1985
        %v1987 = vpop.f32.mrb[0].mxu0
        %1988 = vdwg.mxu0
        %1989 = vrot.lane.b32.xlu0 %v924, 120
        %v1990 = vpop.permute.xlu0 %1989
        %1991 = vrot.lane.b32.xlu0 %v924, 88
        %v1992 = vpop.permute.xlu0 %1991
        %v1994 = vsel %vm758, %v1990, 0
        %v1997 = vsel %vm758, %v1992, 0
        %1999 = vmatprep.subr.bf16.mxu0 0
        %2000 = vmatpush1.bf16.xpose.msra.mxu0 %v1997
        %2001 = vmatprep.subr.bf16.mxu0 0
        %2002 = vmatpush1.bf16.xpose.msra.mxu0 0
        %2003 = vmatprep.subr.bf16.mxu0 0
        %2004 = vmatpush1.bf16.xpose.msra.mxu0 0
        %2005 = vmatprep.subr.bf16.mxu0 0
        %2006 = vmatpush1.bf16.xpose.msra.mxu0 0
        %2007 = vmatprep.subr.bf16.mxu0 0
        %2008 = vmatpush1.bf16.xpose.msra.mxu0 0
        %2009 = vmatprep.subr.bf16.mxu0 0
        %2010 = vmatpush1.bf16.xpose.msra.mxu0 0
        %2011 = vmatprep.subr.bf16.mxu0 0
        %2012 = vmatpush1.bf16.xpose.msra.mxu0 0
        %2013 = vmatprep.subr.bf16.mxu0 0
        %2014 = vmatpush1.bf16.xpose.msra.mxu0 0
        %2015 = vmatprep.subr.bf16.mxu0 0
        %2016 = vmatpush1.bf16.xpose.msra.mxu0 0
        %2017 = vmatprep.subr.bf16.mxu0 0
        %2018 = vmatpush1.bf16.xpose.msra.mxu0 0
        %2019 = vmatprep.subr.bf16.mxu0 0
        %2020 = vmatpush1.bf16.xpose.msra.mxu0 0
        %2021 = vmatprep.subr.bf16.mxu0 0
        %2022 = vmatpush1.bf16.xpose.msra.mxu0 0
        %2023 = vmatprep.subr.bf16.mxu0 0
        %2024 = vmatpush1.bf16.xpose.msra.mxu0 0
        %2025 = vmatprep.subr.bf16.mxu0 0
        %2026 = vmatpush1.bf16.xpose.msra.mxu0 0
        %2027 = vmatprep.subr.bf16.mxu0 0
        %2028 = vmatpush1.bf16.xpose.msra.mxu0 0
        %2029 = vmatprep.subr.bf16.mxu0 0
        %2030 = vmatpush1.bf16.xpose.msra.mxu0 0
        %2031 = vmatprep.mubr.bf16.mxu0 0
        %2032 = vmatmul.mubr.bf16.gmra.mrb[0].mxu0 %v1994
        %v2033 = vpop.f32.mrb[0].mxu0
        %v2034 = vadd.f32 0.0, %v2033
        %v2035 = vpop.f32.mrb[0].mxu0
        %v2036 = vpop.f32.mrb[0].mxu0
        %v2037 = vadd.f32 0.0, %v2036
        %v2038 = vpop.f32.mrb[0].mxu0
        %2039 = vdwg.mxu0
        %2040 = vrot.lane.b32.xlu0 %v925, 120
        %v2041 = vpop.permute.xlu0 %2040
        %2042 = vrot.lane.b32.xlu0 %v925, 88
        %v2043 = vpop.permute.xlu0 %2042
        %v2045 = vsel %vm758, %v2041, 0
        %v2048 = vsel %vm758, %v2043, 0
        %2050 = vmatprep.subr.bf16.mxu0 0
        %2051 = vmatpush1.bf16.xpose.msra.mxu0 %v2048
        %2052 = vmatprep.subr.bf16.mxu0 0
        %2053 = vmatpush1.bf16.xpose.msra.mxu0 0
        %2054 = vmatprep.subr.bf16.mxu0 0
        %2055 = vmatpush1.bf16.xpose.msra.mxu0 0
        %2056 = vmatprep.subr.bf16.mxu0 0
        %2057 = vmatpush1.bf16.xpose.msra.mxu0 0
        %2058 = vmatprep.subr.bf16.mxu0 0
        %2059 = vmatpush1.bf16.xpose.msra.mxu0 0
        %2060 = vmatprep.subr.bf16.mxu0 0
        %2061 = vmatpush1.bf16.xpose.msra.mxu0 0
        %2062 = vmatprep.subr.bf16.mxu0 0
        %2063 = vmatpush1.bf16.xpose.msra.mxu0 0
        %2064 = vmatprep.subr.bf16.mxu0 0
        %2065 = vmatpush1.bf16.xpose.msra.mxu0 0
        %2066 = vmatprep.subr.bf16.mxu0 0
        %2067 = vmatpush1.bf16.xpose.msra.mxu0 0
        %2068 = vmatprep.subr.bf16.mxu0 0
        %2069 = vmatpush1.bf16.xpose.msra.mxu0 0
        %2070 = vmatprep.subr.bf16.mxu0 0
        %2071 = vmatpush1.bf16.xpose.msra.mxu0 0
        %2072 = vmatprep.subr.bf16.mxu0 0
        %2073 = vmatpush1.bf16.xpose.msra.mxu0 0
        %2074 = vmatprep.subr.bf16.mxu0 0
        %2075 = vmatpush1.bf16.xpose.msra.mxu0 0
        %2076 = vmatprep.subr.bf16.mxu0 0
        %2077 = vmatpush1.bf16.xpose.msra.mxu0 0
        %2078 = vmatprep.subr.bf16.mxu0 0
        %2079 = vmatpush1.bf16.xpose.msra.mxu0 0
        %2080 = vmatprep.subr.bf16.mxu0 0
        %2081 = vmatpush1.bf16.xpose.msra.mxu0 0
        %2082 = vmatprep.mubr.bf16.mxu0 0
        %2083 = vmatmul.mubr.bf16.gmra.mrb[0].mxu0 %v2045
        %v2084 = vpop.f32.mrb[0].mxu0
        %v2085 = vadd.f32 0.0, %v2084
        %v2086 = vpop.f32.mrb[0].mxu0
        %v2087 = vpop.f32.mrb[0].mxu0
        %v2088 = vadd.f32 0.0, %v2087
        %v2089 = vpop.f32.mrb[0].mxu0
        %2090 = vdwg.mxu0
        %2091 = vrot.lane.b32.xlu0 %v926, 120
        %v2092 = vpop.permute.xlu0 %2091
        %2093 = vrot.lane.b32.xlu0 %v926, 88
        %v2094 = vpop.permute.xlu0 %2093
        %v2096 = vsel %vm758, %v2092, 0
        %v2099 = vsel %vm758, %v2094, 0
        %2101 = vmatprep.subr.bf16.mxu0 0
        %2102 = vmatpush1.bf16.xpose.msra.mxu0 %v2099
        %2103 = vmatprep.subr.bf16.mxu0 0
        %2104 = vmatpush1.bf16.xpose.msra.mxu0 0
        %2105 = vmatprep.subr.bf16.mxu0 0
        %2106 = vmatpush1.bf16.xpose.msra.mxu0 0
        %2107 = vmatprep.subr.bf16.mxu0 0
        %2108 = vmatpush1.bf16.xpose.msra.mxu0 0
        %2109 = vmatprep.subr.bf16.mxu0 0
        %2110 = vmatpush1.bf16.xpose.msra.mxu0 0
        %2111 = vmatprep.subr.bf16.mxu0 0
        %2112 = vmatpush1.bf16.xpose.msra.mxu0 0
        %2113 = vmatprep.subr.bf16.mxu0 0
        %2114 = vmatpush1.bf16.xpose.msra.mxu0 0
        %2115 = vmatprep.subr.bf16.mxu0 0
        %2116 = vmatpush1.bf16.xpose.msra.mxu0 0
        %2117 = vmatprep.subr.bf16.mxu0 0
        %2118 = vmatpush1.bf16.xpose.msra.mxu0 0
        %2119 = vmatprep.subr.bf16.mxu0 0
        %2120 = vmatpush1.bf16.xpose.msra.mxu0 0
        %2121 = vmatprep.subr.bf16.mxu0 0
        %2122 = vmatpush1.bf16.xpose.msra.mxu0 0
        %2123 = vmatprep.subr.bf16.mxu0 0
        %2124 = vmatpush1.bf16.xpose.msra.mxu0 0
        %2125 = vmatprep.subr.bf16.mxu0 0
        %2126 = vmatpush1.bf16.xpose.msra.mxu0 0
        %2127 = vmatprep.subr.bf16.mxu0 0
        %2128 = vmatpush1.bf16.xpose.msra.mxu0 0
        %2129 = vmatprep.subr.bf16.mxu0 0
        %2130 = vmatpush1.bf16.xpose.msra.mxu0 0
        %2131 = vmatprep.subr.bf16.mxu0 0
        %2132 = vmatpush1.bf16.xpose.msra.mxu0 0
        %2133 = vmatprep.mubr.bf16.mxu0 0
        %2134 = vmatmul.mubr.bf16.gmra.mrb[0].mxu0 %v2096
        %v2135 = vpop.f32.mrb[0].mxu0
        %v2136 = vadd.f32 0.0, %v2135
        %v2137 = vpop.f32.mrb[0].mxu0
        %v2138 = vpop.f32.mrb[0].mxu0
        %v2139 = vadd.f32 0.0, %v2138
        %v2140 = vpop.f32.mrb[0].mxu0
        %2141 = vdwg.mxu0
        %2142 = vrot.lane.b32.xlu0 %v927, 120
        %v2143 = vpop.permute.xlu0 %2142
        %2144 = vrot.lane.b32.xlu0 %v927, 88
        %v2145 = vpop.permute.xlu0 %2144
        %v2147 = vsel %vm758, %v2143, 0
        %v2150 = vsel %vm758, %v2145, 0
        %2152 = vmatprep.subr.bf16.mxu0 0
        %2153 = vmatpush1.bf16.xpose.msra.mxu0 %v2150
        %2154 = vmatprep.subr.bf16.mxu0 0
        %2155 = vmatpush1.bf16.xpose.msra.mxu0 0
        %2156 = vmatprep.subr.bf16.mxu0 0
        %2157 = vmatpush1.bf16.xpose.msra.mxu0 0
        %2158 = vmatprep.subr.bf16.mxu0 0
        %2159 = vmatpush1.bf16.xpose.msra.mxu0 0
        %2160 = vmatprep.subr.bf16.mxu0 0
        %2161 = vmatpush1.bf16.xpose.msra.mxu0 0
        %2162 = vmatprep.subr.bf16.mxu0 0
        %2163 = vmatpush1.bf16.xpose.msra.mxu0 0
        %2164 = vmatprep.subr.bf16.mxu0 0
        %2165 = vmatpush1.bf16.xpose.msra.mxu0 0
        %2166 = vmatprep.subr.bf16.mxu0 0
        %2167 = vmatpush1.bf16.xpose.msra.mxu0 0
        %2168 = vmatprep.subr.bf16.mxu0 0
        %2169 = vmatpush1.bf16.xpose.msra.mxu0 0
        %2170 = vmatprep.subr.bf16.mxu0 0
        %2171 = vmatpush1.bf16.xpose.msra.mxu0 0
        %2172 = vmatprep.subr.bf16.mxu0 0
        %2173 = vmatpush1.bf16.xpose.msra.mxu0 0
        %2174 = vmatprep.subr.bf16.mxu0 0
        %2175 = vmatpush1.bf16.xpose.msra.mxu0 0
        %2176 = vmatprep.subr.bf16.mxu0 0
        %2177 = vmatpush1.bf16.xpose.msra.mxu0 0
        %2178 = vmatprep.subr.bf16.mxu0 0
        %2179 = vmatpush1.bf16.xpose.msra.mxu0 0
        %2180 = vmatprep.subr.bf16.mxu0 0
        %2181 = vmatpush1.bf16.xpose.msra.mxu0 0
        %2182 = vmatprep.subr.bf16.mxu0 0
        %2183 = vmatpush1.bf16.xpose.msra.mxu0 0
        %2184 = vmatprep.mubr.bf16.mxu0 0
        %2185 = vmatmul.mubr.bf16.gmra.mrb[0].mxu0 %v2147
        %v2186 = vpop.f32.mrb[0].mxu0
        %v2187 = vadd.f32 0.0, %v2186
        %v2188 = vpop.f32.mrb[0].mxu0
        %v2189 = vpop.f32.mrb[0].mxu0
        %v2190 = vadd.f32 0.0, %v2189
        %v2191 = vpop.f32.mrb[0].mxu0
        %2192 = vdwg.mxu0
        %2193 = vrot.lane.b32.xlu0 %v928, 120
        %v2194 = vpop.permute.xlu0 %2193
        %2195 = vrot.lane.b32.xlu0 %v928, 88
        %v2196 = vpop.permute.xlu0 %2195
        %v2198 = vsel %vm758, %v2194, 0
        %v2201 = vsel %vm758, %v2196, 0
        %2203 = vmatprep.subr.bf16.mxu0 0
        %2204 = vmatpush1.bf16.xpose.msra.mxu0 %v2201
        %2205 = vmatprep.subr.bf16.mxu0 0
        %2206 = vmatpush1.bf16.xpose.msra.mxu0 0
        %2207 = vmatprep.subr.bf16.mxu0 0
        %2208 = vmatpush1.bf16.xpose.msra.mxu0 0
        %2209 = vmatprep.subr.bf16.mxu0 0
        %2210 = vmatpush1.bf16.xpose.msra.mxu0 0
        %2211 = vmatprep.subr.bf16.mxu0 0
        %2212 = vmatpush1.bf16.xpose.msra.mxu0 0
        %2213 = vmatprep.subr.bf16.mxu0 0
        %2214 = vmatpush1.bf16.xpose.msra.mxu0 0
        %2215 = vmatprep.subr.bf16.mxu0 0
        %2216 = vmatpush1.bf16.xpose.msra.mxu0 0
        %2217 = vmatprep.subr.bf16.mxu0 0
        %2218 = vmatpush1.bf16.xpose.msra.mxu0 0
        %2219 = vmatprep.subr.bf16.mxu0 0
        %2220 = vmatpush1.bf16.xpose.msra.mxu0 0
        %2221 = vmatprep.subr.bf16.mxu0 0
        %2222 = vmatpush1.bf16.xpose.msra.mxu0 0
        %2223 = vmatprep.subr.bf16.mxu0 0
        %2224 = vmatpush1.bf16.xpose.msra.mxu0 0
        %2225 = vmatprep.subr.bf16.mxu0 0
        %2226 = vmatpush1.bf16.xpose.msra.mxu0 0
        %2227 = vmatprep.subr.bf16.mxu0 0
        %2228 = vmatpush1.bf16.xpose.msra.mxu0 0
        %2229 = vmatprep.subr.bf16.mxu0 0
        %2230 = vmatpush1.bf16.xpose.msra.mxu0 0
        %2231 = vmatprep.subr.bf16.mxu0 0
        %2232 = vmatpush1.bf16.xpose.msra.mxu0 0
        %2233 = vmatprep.subr.bf16.mxu0 0
        %2234 = vmatpush1.bf16.xpose.msra.mxu0 0
        %2235 = vmatprep.mubr.bf16.mxu0 0
        %2236 = vmatmul.mubr.bf16.gmra.mrb[0].mxu0 %v2198
        %v2237 = vpop.f32.mrb[0].mxu0
        %v2238 = vadd.f32 0.0, %v2237
        %v2239 = vpop.f32.mrb[0].mxu0
        %v2240 = vpop.f32.mrb[0].mxu0
        %v2241 = vadd.f32 0.0, %v2240
        %v2242 = vpop.f32.mrb[0].mxu0
        %2243 = vdwg.mxu0
        %2244 = vrot.lane.b32.xlu0 %v929, 120
        %v2245 = vpop.permute.xlu0 %2244
        %2246 = vrot.lane.b32.xlu0 %v929, 88
        %v2247 = vpop.permute.xlu0 %2246
        %v2249 = vsel %vm758, %v2245, 0
        %v2252 = vsel %vm758, %v2247, 0
        %2254 = vmatprep.subr.bf16.mxu0 0
        %2255 = vmatpush1.bf16.xpose.msra.mxu0 %v2252
        %2256 = vmatprep.subr.bf16.mxu0 0
        %2257 = vmatpush1.bf16.xpose.msra.mxu0 0
        %2258 = vmatprep.subr.bf16.mxu0 0
        %2259 = vmatpush1.bf16.xpose.msra.mxu0 0
        %2260 = vmatprep.subr.bf16.mxu0 0
        %2261 = vmatpush1.bf16.xpose.msra.mxu0 0
        %2262 = vmatprep.subr.bf16.mxu0 0
        %2263 = vmatpush1.bf16.xpose.msra.mxu0 0
        %2264 = vmatprep.subr.bf16.mxu0 0
        %2265 = vmatpush1.bf16.xpose.msra.mxu0 0
        %2266 = vmatprep.subr.bf16.mxu0 0
        %2267 = vmatpush1.bf16.xpose.msra.mxu0 0
        %2268 = vmatprep.subr.bf16.mxu0 0
        %2269 = vmatpush1.bf16.xpose.msra.mxu0 0
        %2270 = vmatprep.subr.bf16.mxu0 0
        %2271 = vmatpush1.bf16.xpose.msra.mxu0 0
        %2272 = vmatprep.subr.bf16.mxu0 0
        %2273 = vmatpush1.bf16.xpose.msra.mxu0 0
        %2274 = vmatprep.subr.bf16.mxu0 0
        %2275 = vmatpush1.bf16.xpose.msra.mxu0 0
        %2276 = vmatprep.subr.bf16.mxu0 0
        %2277 = vmatpush1.bf16.xpose.msra.mxu0 0
        %2278 = vmatprep.subr.bf16.mxu0 0
        %2279 = vmatpush1.bf16.xpose.msra.mxu0 0
        %2280 = vmatprep.subr.bf16.mxu0 0
        %2281 = vmatpush1.bf16.xpose.msra.mxu0 0
        %2282 = vmatprep.subr.bf16.mxu0 0
        %2283 = vmatpush1.bf16.xpose.msra.mxu0 0
        %2284 = vmatprep.subr.bf16.mxu0 0
        %2285 = vmatpush1.bf16.xpose.msra.mxu0 0
        %2286 = vmatprep.mubr.bf16.mxu0 0
        %2287 = vmatmul.mubr.bf16.gmra.mrb[0].mxu0 %v2249
        %v2288 = vpop.f32.mrb[0].mxu0
        %v2289 = vadd.f32 0.0, %v2288
        %v2290 = vpop.f32.mrb[0].mxu0
        %v2291 = vpop.f32.mrb[0].mxu0
        %v2292 = vadd.f32 0.0, %v2291
        %v2293 = vpop.f32.mrb[0].mxu0
        %2294 = vdwg.mxu0
        %2295 = vrot.lane.b32.xlu0 %v930, 120
        %v2296 = vpop.permute.xlu0 %2295
        %2297 = vrot.lane.b32.xlu0 %v930, 88
        %v2298 = vpop.permute.xlu0 %2297
        %v2300 = vsel %vm758, %v2296, 0
        %v2303 = vsel %vm758, %v2298, 0
        %2305 = vmatprep.subr.bf16.mxu0 0
        %2306 = vmatpush1.bf16.xpose.msra.mxu0 %v2303
        %2307 = vmatprep.subr.bf16.mxu0 0
        %2308 = vmatpush1.bf16.xpose.msra.mxu0 0
        %2309 = vmatprep.subr.bf16.mxu0 0
        %2310 = vmatpush1.bf16.xpose.msra.mxu0 0
        %2311 = vmatprep.subr.bf16.mxu0 0
        %2312 = vmatpush1.bf16.xpose.msra.mxu0 0
        %2313 = vmatprep.subr.bf16.mxu0 0
        %2314 = vmatpush1.bf16.xpose.msra.mxu0 0
        %2315 = vmatprep.subr.bf16.mxu0 0
        %2316 = vmatpush1.bf16.xpose.msra.mxu0 0
        %2317 = vmatprep.subr.bf16.mxu0 0
        %2318 = vmatpush1.bf16.xpose.msra.mxu0 0
        %2319 = vmatprep.subr.bf16.mxu0 0
        %2320 = vmatpush1.bf16.xpose.msra.mxu0 0
        %2321 = vmatprep.subr.bf16.mxu0 0
        %2322 = vmatpush1.bf16.xpose.msra.mxu0 0
        %2323 = vmatprep.subr.bf16.mxu0 0
        %2324 = vmatpush1.bf16.xpose.msra.mxu0 0
        %2325 = vmatprep.subr.bf16.mxu0 0
        %2326 = vmatpush1.bf16.xpose.msra.mxu0 0
        %2327 = vmatprep.subr.bf16.mxu0 0
        %2328 = vmatpush1.bf16.xpose.msra.mxu0 0
        %2329 = vmatprep.subr.bf16.mxu0 0
        %2330 = vmatpush1.bf16.xpose.msra.mxu0 0
        %2331 = vmatprep.subr.bf16.mxu0 0
        %2332 = vmatpush1.bf16.xpose.msra.mxu0 0
        %2333 = vmatprep.subr.bf16.mxu0 0
        %2334 = vmatpush1.bf16.xpose.msra.mxu0 0
        %2335 = vmatprep.subr.bf16.mxu0 0
        %2336 = vmatpush1.bf16.xpose.msra.mxu0 0
        %2337 = vmatprep.mubr.bf16.mxu0 0
        %2338 = vmatmul.mubr.bf16.gmra.mrb[0].mxu0 %v2300
        %v2339 = vpop.f32.mrb[0].mxu0
        %v2340 = vadd.f32 0.0, %v2339
        %v2341 = vpop.f32.mrb[0].mxu0
        %v2342 = vpop.f32.mrb[0].mxu0
        %v2343 = vadd.f32 0.0, %v2342
        %v2344 = vpop.f32.mrb[0].mxu0
        %2345 = vdwg.mxu0
        %s2346 = scalar_lea.vmem [#allocation5], 16
        %v2347 = vld [vmem:[%s2346] sm:$0xff]
        %v2348 = vld [vmem:[%s2346 + $0x8] sm:$0xff]
        %v2349 = vadd.f32 %v1983, %v2347
        %v2350 = vadd.f32 %v1986, %v2348
        %v2351 = vadd.f32 %v2034, %v2347
        %v2352 = vadd.f32 %v2037, %v2348
        %v2353 = vadd.f32 %v2085, %v2347
        %v2354 = vadd.f32 %v2088, %v2348
        %v2355 = vadd.f32 %v2136, %v2347
        %v2356 = vadd.f32 %v2139, %v2348
        %v2357 = vadd.f32 %v2187, %v2347
        %v2358 = vadd.f32 %v2190, %v2348
        %v2359 = vadd.f32 %v2238, %v2347
        %v2360 = vadd.f32 %v2241, %v2348
        %v2361 = vadd.f32 %v2289, %v2347
        %v2362 = vadd.f32 %v2292, %v2348
        %v2363 = vadd.f32 %v2340, %v2347
        %v2364 = vadd.f32 %v2343, %v2348
        %v2365 = vsel %vm1361, %v2349, -inf
        %2366 = vmax.xlane.f32.xlu0 %v2365
        %v2367 = vpop.xlane.xlu0 %2366
        %v2368 = vsel %vm1361, %v2350, -inf
        %2369 = vmax.xlane.f32.xlu0 %v2368
        %v2370 = vpop.xlane.xlu0 %2369
        %v2371 = vsel %vm1361, %v2351, -inf
        %2372 = vmax.xlane.f32.xlu0 %v2371
        %v2373 = vpop.xlane.xlu0 %2372
        %v2374 = vsel %vm1361, %v2352, -inf
        %2375 = vmax.xlane.f32.xlu0 %v2374
        %v2376 = vpop.xlane.xlu0 %2375
        %v2377 = vsel %vm1361, %v2353, -inf
        %2378 = vmax.xlane.f32.xlu0 %v2377
        %v2379 = vpop.xlane.xlu0 %2378
        %v2380 = vsel %vm1361, %v2354, -inf
        %2381 = vmax.xlane.f32.xlu0 %v2380
        %v2382 = vpop.xlane.xlu0 %2381
        %v2383 = vsel %vm1361, %v2355, -inf
        %2384 = vmax.xlane.f32.xlu0 %v2383
        %v2385 = vpop.xlane.xlu0 %2384
        %v2386 = vsel %vm1361, %v2356, -inf
        %2387 = vmax.xlane.f32.xlu0 %v2386
        %v2388 = vpop.xlane.xlu0 %2387
        %v2389 = vsel %vm1361, %v2357, -inf
        %2390 = vmax.xlane.f32.xlu0 %v2389
        %v2391 = vpop.xlane.xlu0 %2390
        %v2392 = vsel %vm1361, %v2358, -inf
        %2393 = vmax.xlane.f32.xlu0 %v2392
        %v2394 = vpop.xlane.xlu0 %2393
        %v2395 = vsel %vm1361, %v2359, -inf
        %2396 = vmax.xlane.f32.xlu0 %v2395
        %v2397 = vpop.xlane.xlu0 %2396
        %v2398 = vsel %vm1361, %v2360, -inf
        %2399 = vmax.xlane.f32.xlu0 %v2398
        %v2400 = vpop.xlane.xlu0 %2399
        %v2401 = vsel %vm1361, %v2361, -inf
        %2402 = vmax.xlane.f32.xlu0 %v2401
        %v2403 = vpop.xlane.xlu0 %2402
        %v2404 = vsel %vm1361, %v2362, -inf
        %2405 = vmax.xlane.f32.xlu0 %v2404
        %v2406 = vpop.xlane.xlu0 %2405
        %v2407 = vsel %vm1361, %v2363, -inf
        %2408 = vmax.xlane.f32.xlu0 %v2407
        %v2409 = vpop.xlane.xlu0 %2408
        %v2410 = vsel %vm1361, %v2364, -inf
        %2411 = vmax.xlane.f32.xlu0 %v2410
        %v2412 = vpop.xlane.xlu0 %2411
        %v2413 = vsub.f32 %v2349, %v2367
        %v2414 = vsub.f32 %v2350, %v2370
        %v2415 = vsub.f32 %v2351, %v2373
        %v2416 = vsub.f32 %v2352, %v2376
        %v2417 = vsub.f32 %v2353, %v2379
        %v2418 = vsub.f32 %v2354, %v2382
        %v2419 = vsub.f32 %v2355, %v2385
        %v2420 = vsub.f32 %v2356, %v2388
        %v2421 = vsub.f32 %v2357, %v2391
        %v2422 = vsub.f32 %v2358, %v2394
        %v2423 = vsub.f32 %v2359, %v2397
        %v2424 = vsub.f32 %v2360, %v2400
        %v2425 = vsub.f32 %v2361, %v2403
        %v2426 = vsub.f32 %v2362, %v2406
        %v2427 = vsub.f32 %v2363, %v2409
        %v2428 = vsub.f32 %v2364, %v2412
        %v2429 = vmul.f32 %v2413, 1.442695
        %v2430 = vpow.pop %v2429
        %v2431 = vmul.f32 %v2414, 1.442695
        %v2432 = vpow.pop %v2431
        %v2433 = vmul.f32 %v2415, 1.442695
        %v2434 = vpow.pop %v2433
        %v2435 = vmul.f32 %v2416, 1.442695
        %v2436 = vpow.pop %v2435
        %v2437 = vmul.f32 %v2417, 1.442695
        %v2438 = vpow.pop %v2437
        %v2439 = vmul.f32 %v2418, 1.442695
        %v2440 = vpow.pop %v2439
        %v2441 = vmul.f32 %v2419, 1.442695
        %v2442 = vpow.pop %v2441
        %v2443 = vmul.f32 %v2420, 1.442695
        %v2444 = vpow.pop %v2443
        %v2445 = vmul.f32 %v2421, 1.442695
        %v2446 = vpow.pop %v2445
        %v2447 = vmul.f32 %v2422, 1.442695
        %v2448 = vpow.pop %v2447
        %v2449 = vmul.f32 %v2423, 1.442695
        %v2450 = vpow.pop %v2449
        %v2451 = vmul.f32 %v2424, 1.442695
        %v2452 = vpow.pop %v2451
        %v2453 = vmul.f32 %v2425, 1.442695
        %v2454 = vpow.pop %v2453
        %v2455 = vmul.f32 %v2426, 1.442695
        %v2456 = vpow.pop %v2455
        %v2457 = vmul.f32 %v2427, 1.442695
        %v2458 = vpow.pop %v2457
        %v2459 = vmul.f32 %v2428, 1.442695
        %v2460 = vpow.pop %v2459
        %v2461 = vsel %vm1361, %v2430, 0.0
        %2462 = vadd.xlane.f32.xlu0 %v2461
        %v2463 = vpop.xlane.xlu0 %2462
        %v2464 = vsel %vm1361, %v2432, 0.0
        %2465 = vadd.xlane.f32.xlu0 %v2464
        %v2466 = vpop.xlane.xlu0 %2465
        %v2467 = vsel %vm1361, %v2434, 0.0
        %2468 = vadd.xlane.f32.xlu0 %v2467
        %v2469 = vpop.xlane.xlu0 %2468
        %v2470 = vsel %vm1361, %v2436, 0.0
        %2471 = vadd.xlane.f32.xlu0 %v2470
        %v2472 = vpop.xlane.xlu0 %2471
        %v2473 = vsel %vm1361, %v2438, 0.0
        %2474 = vadd.xlane.f32.xlu0 %v2473
        %v2475 = vpop.xlane.xlu0 %2474
        %v2476 = vsel %vm1361, %v2440, 0.0
        %2477 = vadd.xlane.f32.xlu0 %v2476
        %v2478 = vpop.xlane.xlu0 %2477
        %v2479 = vsel %vm1361, %v2442, 0.0
        %2480 = vadd.xlane.f32.xlu0 %v2479
        %v2481 = vpop.xlane.xlu0 %2480
        %v2482 = vsel %vm1361, %v2444, 0.0
        %2483 = vadd.xlane.f32.xlu0 %v2482
        %v2484 = vpop.xlane.xlu0 %2483
        %v2485 = vsel %vm1361, %v2446, 0.0
        %2486 = vadd.xlane.f32.xlu0 %v2485
        %v2487 = vpop.xlane.xlu0 %2486
        %v2488 = vsel %vm1361, %v2448, 0.0
        %2489 = vadd.xlane.f32.xlu0 %v2488
        %v2490 = vpop.xlane.xlu0 %2489
        %v2491 = vsel %vm1361, %v2450, 0.0
        %2492 = vadd.xlane.f32.xlu0 %v2491
        %v2493 = vpop.xlane.xlu0 %2492
        %v2494 = vsel %vm1361, %v2452, 0.0
        %2495 = vadd.xlane.f32.xlu0 %v2494
        %v2496 = vpop.xlane.xlu0 %2495
        %v2497 = vsel %vm1361, %v2454, 0.0
        %2498 = vadd.xlane.f32.xlu0 %v2497
        %v2499 = vpop.xlane.xlu0 %2498
        %v2500 = vsel %vm1361, %v2456, 0.0
        %2501 = vadd.xlane.f32.xlu0 %v2500
        %v2502 = vpop.xlane.xlu0 %2501
        %v2503 = vsel %vm1361, %v2458, 0.0
        %2504 = vadd.xlane.f32.xlu0 %v2503
        %v2505 = vpop.xlane.xlu0 %2504
        %v2506 = vsel %vm1361, %v2460, 0.0
        %2507 = vadd.xlane.f32.xlu0 %v2506
        %v2508 = vpop.xlane.xlu0 %2507
        %v2509 = vrcp.pop %v2463
        %v2510 = vrcp.pop %v2466
        %v2511 = vrcp.pop %v2469
        %v2512 = vrcp.pop %v2472
        %v2513 = vrcp.pop %v2475
        %v2514 = vrcp.pop %v2478
        %v2515 = vrcp.pop %v2481
        %v2516 = vrcp.pop %v2484
        %v2517 = vrcp.pop %v2487
        %v2518 = vrcp.pop %v2490
        %v2519 = vrcp.pop %v2493
        %v2520 = vrcp.pop %v2496
        %v2521 = vrcp.pop %v2499
        %v2522 = vrcp.pop %v2502
        %v2523 = vrcp.pop %v2505
        %v2524 = vrcp.pop %v2508
        %v2525 = vmul.f32 %v2430, %v2509
        %v2526 = vmul.f32 %v2432, %v2510
        %v2527 = vmul.f32 %v2434, %v2511
        %v2528 = vmul.f32 %v2436, %v2512
        %v2529 = vmul.f32 %v2438, %v2513
        %v2530 = vmul.f32 %v2440, %v2514
        %v2531 = vmul.f32 %v2442, %v2515
        %v2532 = vmul.f32 %v2444, %v2516
        %v2533 = vmul.f32 %v2446, %v2517
        %v2534 = vmul.f32 %v2448, %v2518
        %v2535 = vmul.f32 %v2450, %v2519
        %v2536 = vmul.f32 %v2452, %v2520
        %v2537 = vmul.f32 %v2454, %v2521
        %v2538 = vmul.f32 %v2456, %v2522
        %v2539 = vmul.f32 %v2458, %v2523
        %v2540 = vmul.f32 %v2460, %v2524
        %v2541 = vpack.c.bf16 %v2526, %v2525
        %v2542 = vpack.c.bf16 %v2528, %v2527
        %v2543 = vpack.c.bf16 %v2530, %v2529
        %v2544 = vpack.c.bf16 %v2532, %v2531
        %v2545 = vpack.c.bf16 %v2534, %v2533
        %v2546 = vpack.c.bf16 %v2536, %v2535
        %v2547 = vpack.c.bf16 %v2538, %v2537
        %v2548 = vpack.c.bf16 %v2540, %v2539
        %2549 = vrot.lane.b32.xlu0 %v931, 56
        %v2550 = vpop.permute.xlu0 %2549
        %v2553 = vsel %vm1361, %v2541, 0
        %2555 = vmatprep.subr.bf16.mxu0 0
        %2556 = vmatpush1.bf16.msra.mxu0 %v2550
        %2557 = vmatprep.subr.bf16.mxu0 0
        %2558 = vmatpush1.bf16.msra.mxu0 0
        %2559 = vmatprep.subr.bf16.mxu0 0
        %2560 = vmatpush1.bf16.msra.mxu0 0
        %2561 = vmatprep.subr.bf16.mxu0 0
        %2562 = vmatpush1.bf16.msra.mxu0 0
        %2563 = vmatprep.subr.bf16.mxu0 0
        %2564 = vmatpush1.bf16.msra.mxu0 0
        %2565 = vmatprep.subr.bf16.mxu0 0
        %2566 = vmatpush1.bf16.msra.mxu0 0
        %2567 = vmatprep.subr.bf16.mxu0 0
        %2568 = vmatpush1.bf16.msra.mxu0 0
        %2569 = vmatprep.subr.bf16.mxu0 0
        %2570 = vmatpush1.bf16.msra.mxu0 0
        %2571 = vmatprep.subr.bf16.mxu0 0
        %2572 = vmatpush1.bf16.msra.mxu0 0
        %2573 = vmatprep.subr.bf16.mxu0 0
        %2574 = vmatpush1.bf16.msra.mxu0 0
        %2575 = vmatprep.subr.bf16.mxu0 0
        %2576 = vmatpush1.bf16.msra.mxu0 0
        %2577 = vmatprep.subr.bf16.mxu0 0
        %2578 = vmatpush1.bf16.msra.mxu0 0
        %2579 = vmatprep.subr.bf16.mxu0 0
        %2580 = vmatpush1.bf16.msra.mxu0 0
        %2581 = vmatprep.subr.bf16.mxu0 0
        %2582 = vmatpush1.bf16.msra.mxu0 0
        %2583 = vmatprep.subr.bf16.mxu0 0
        %2584 = vmatpush1.bf16.msra.mxu0 0
        %2585 = vmatprep.subr.bf16.mxu0 0
        %2586 = vmatpush1.bf16.msra.mxu0 0
        %2587 = vmatprep.mubr.bf16.mxu0 0
        %2588 = vmatmul.mubr.bf16.gmra.mrb[0].mxu0 %v2553
        %v2589 = vpop.f32.mrb[0].mxu0
        %v2590 = vadd.f32 0.0, %v2589
        %v2591 = vpop.f32.mrb[0].mxu0
        %v2592 = vpop.f32.mrb[0].mxu0
        %v2593 = vadd.f32 0.0, %v2592
        %v2594 = vpop.f32.mrb[0].mxu0
        %2595 = vdwg.mxu0
        %2596 = vrot.lane.b32.xlu0 %v932, 56
        %v2597 = vpop.permute.xlu0 %2596
        %v2600 = vsel %vm1361, %v2542, 0
        %2602 = vmatprep.subr.bf16.mxu0 0
        %2603 = vmatpush1.bf16.msra.mxu0 %v2597
        %2604 = vmatprep.subr.bf16.mxu0 0
        %2605 = vmatpush1.bf16.msra.mxu0 0
        %2606 = vmatprep.subr.bf16.mxu0 0
        %2607 = vmatpush1.bf16.msra.mxu0 0
        %2608 = vmatprep.subr.bf16.mxu0 0
        %2609 = vmatpush1.bf16.msra.mxu0 0
        %2610 = vmatprep.subr.bf16.mxu0 0
        %2611 = vmatpush1.bf16.msra.mxu0 0
        %2612 = vmatprep.subr.bf16.mxu0 0
        %2613 = vmatpush1.bf16.msra.mxu0 0
        %2614 = vmatprep.subr.bf16.mxu0 0
        %2615 = vmatpush1.bf16.msra.mxu0 0
        %2616 = vmatprep.subr.bf16.mxu0 0
        %2617 = vmatpush1.bf16.msra.mxu0 0
        %2618 = vmatprep.subr.bf16.mxu0 0
        %2619 = vmatpush1.bf16.msra.mxu0 0
        %2620 = vmatprep.subr.bf16.mxu0 0
        %2621 = vmatpush1.bf16.msra.mxu0 0
        %2622 = vmatprep.subr.bf16.mxu0 0
        %2623 = vmatpush1.bf16.msra.mxu0 0
        %2624 = vmatprep.subr.bf16.mxu0 0
        %2625 = vmatpush1.bf16.msra.mxu0 0
        %2626 = vmatprep.subr.bf16.mxu0 0
        %2627 = vmatpush1.bf16.msra.mxu0 0
        %2628 = vmatprep.subr.bf16.mxu0 0
        %2629 = vmatpush1.bf16.msra.mxu0 0
        %2630 = vmatprep.subr.bf16.mxu0 0
        %2631 = vmatpush1.bf16.msra.mxu0 0
        %2632 = vmatprep.subr.bf16.mxu0 0
        %2633 = vmatpush1.bf16.msra.mxu0 0
        %2634 = vmatprep.mubr.bf16.mxu0 0
        %2635 = vmatmul.mubr.bf16.gmra.mrb[0].mxu0 %v2600
        %v2636 = vpop.f32.mrb[0].mxu0
        %v2637 = vadd.f32 0.0, %v2636
        %v2638 = vpop.f32.mrb[0].mxu0
        %v2639 = vpop.f32.mrb[0].mxu0
        %v2640 = vadd.f32 0.0, %v2639
        %v2641 = vpop.f32.mrb[0].mxu0
        %2642 = vdwg.mxu0
        %2643 = vrot.lane.b32.xlu0 %v933, 56
        %v2644 = vpop.permute.xlu0 %2643
        %v2647 = vsel %vm1361, %v2543, 0
        %2649 = vmatprep.subr.bf16.mxu0 0
        %2650 = vmatpush1.bf16.msra.mxu0 %v2644
        %2651 = vmatprep.subr.bf16.mxu0 0
        %2652 = vmatpush1.bf16.msra.mxu0 0
        %2653 = vmatprep.subr.bf16.mxu0 0
        %2654 = vmatpush1.bf16.msra.mxu0 0
        %2655 = vmatprep.subr.bf16.mxu0 0
        %2656 = vmatpush1.bf16.msra.mxu0 0
        %2657 = vmatprep.subr.bf16.mxu0 0
        %2658 = vmatpush1.bf16.msra.mxu0 0
        %2659 = vmatprep.subr.bf16.mxu0 0
        %2660 = vmatpush1.bf16.msra.mxu0 0
        %2661 = vmatprep.subr.bf16.mxu0 0
        %2662 = vmatpush1.bf16.msra.mxu0 0
        %2663 = vmatprep.subr.bf16.mxu0 0
        %2664 = vmatpush1.bf16.msra.mxu0 0
        %2665 = vmatprep.subr.bf16.mxu0 0
        %2666 = vmatpush1.bf16.msra.mxu0 0
        %2667 = vmatprep.subr.bf16.mxu0 0
        %2668 = vmatpush1.bf16.msra.mxu0 0
        %2669 = vmatprep.subr.bf16.mxu0 0
        %2670 = vmatpush1.bf16.msra.mxu0 0
        %2671 = vmatprep.subr.bf16.mxu0 0
        %2672 = vmatpush1.bf16.msra.mxu0 0
        %2673 = vmatprep.subr.bf16.mxu0 0
        %2674 = vmatpush1.bf16.msra.mxu0 0
        %2675 = vmatprep.subr.bf16.mxu0 0
        %2676 = vmatpush1.bf16.msra.mxu0 0
        %2677 = vmatprep.subr.bf16.mxu0 0
        %2678 = vmatpush1.bf16.msra.mxu0 0
        %2679 = vmatprep.subr.bf16.mxu0 0
        %2680 = vmatpush1.bf16.msra.mxu0 0
        %2681 = vmatprep.mubr.bf16.mxu0 0
        %2682 = vmatmul.mubr.bf16.gmra.mrb[0].mxu0 %v2647
        %v2683 = vpop.f32.mrb[0].mxu0
        %v2684 = vadd.f32 0.0, %v2683
        %v2685 = vpop.f32.mrb[0].mxu0
        %v2686 = vpop.f32.mrb[0].mxu0
        %v2687 = vadd.f32 0.0, %v2686
        %v2688 = vpop.f32.mrb[0].mxu0
        %2689 = vdwg.mxu0
        %2690 = vrot.lane.b32.xlu0 %v934, 56
        %v2691 = vpop.permute.xlu0 %2690
        %v2694 = vsel %vm1361, %v2544, 0
        %2696 = vmatprep.subr.bf16.mxu0 0
        %2697 = vmatpush1.bf16.msra.mxu0 %v2691
        %2698 = vmatprep.subr.bf16.mxu0 0
        %2699 = vmatpush1.bf16.msra.mxu0 0
        %2700 = vmatprep.subr.bf16.mxu0 0
        %2701 = vmatpush1.bf16.msra.mxu0 0
        %2702 = vmatprep.subr.bf16.mxu0 0
        %2703 = vmatpush1.bf16.msra.mxu0 0
        %2704 = vmatprep.subr.bf16.mxu0 0
        %2705 = vmatpush1.bf16.msra.mxu0 0
        %2706 = vmatprep.subr.bf16.mxu0 0
        %2707 = vmatpush1.bf16.msra.mxu0 0
        %2708 = vmatprep.subr.bf16.mxu0 0
        %2709 = vmatpush1.bf16.msra.mxu0 0
        %2710 = vmatprep.subr.bf16.mxu0 0
        %2711 = vmatpush1.bf16.msra.mxu0 0
        %2712 = vmatprep.subr.bf16.mxu0 0
        %2713 = vmatpush1.bf16.msra.mxu0 0
        %2714 = vmatprep.subr.bf16.mxu0 0
        %2715 = vmatpush1.bf16.msra.mxu0 0
        %2716 = vmatprep.subr.bf16.mxu0 0
        %2717 = vmatpush1.bf16.msra.mxu0 0
        %2718 = vmatprep.subr.bf16.mxu0 0
        %2719 = vmatpush1.bf16.msra.mxu0 0
        %2720 = vmatprep.subr.bf16.mxu0 0
        %2721 = vmatpush1.bf16.msra.mxu0 0
        %2722 = vmatprep.subr.bf16.mxu0 0
        %2723 = vmatpush1.bf16.msra.mxu0 0
        %2724 = vmatprep.subr.bf16.mxu0 0
        %2725 = vmatpush1.bf16.msra.mxu0 0
        %2726 = vmatprep.subr.bf16.mxu0 0
        %2727 = vmatpush1.bf16.msra.mxu0 0
        %2728 = vmatprep.mubr.bf16.mxu0 0
        %2729 = vmatmul.mubr.bf16.gmra.mrb[0].mxu0 %v2694
        %v2730 = vpop.f32.mrb[0].mxu0
        %v2731 = vadd.f32 0.0, %v2730
        %v2732 = vpop.f32.mrb[0].mxu0
        %v2733 = vpop.f32.mrb[0].mxu0
        %v2734 = vadd.f32 0.0, %v2733
        %v2735 = vpop.f32.mrb[0].mxu0
        %2736 = vdwg.mxu0
        %2737 = vrot.lane.b32.xlu0 %v935, 56
        %v2738 = vpop.permute.xlu0 %2737
        %v2741 = vsel %vm1361, %v2545, 0
        %2743 = vmatprep.subr.bf16.mxu0 0
        %2744 = vmatpush1.bf16.msra.mxu0 %v2738
        %2745 = vmatprep.subr.bf16.mxu0 0
        %2746 = vmatpush1.bf16.msra.mxu0 0
        %2747 = vmatprep.subr.bf16.mxu0 0
        %2748 = vmatpush1.bf16.msra.mxu0 0
        %2749 = vmatprep.subr.bf16.mxu0 0
        %2750 = vmatpush1.bf16.msra.mxu0 0
        %2751 = vmatprep.subr.bf16.mxu0 0
        %2752 = vmatpush1.bf16.msra.mxu0 0
        %2753 = vmatprep.subr.bf16.mxu0 0
        %2754 = vmatpush1.bf16.msra.mxu0 0
        %2755 = vmatprep.subr.bf16.mxu0 0
        %2756 = vmatpush1.bf16.msra.mxu0 0
        %2757 = vmatprep.subr.bf16.mxu0 0
        %2758 = vmatpush1.bf16.msra.mxu0 0
        %2759 = vmatprep.subr.bf16.mxu0 0
        %2760 = vmatpush1.bf16.msra.mxu0 0
        %2761 = vmatprep.subr.bf16.mxu0 0
        %2762 = vmatpush1.bf16.msra.mxu0 0
        %2763 = vmatprep.subr.bf16.mxu0 0
        %2764 = vmatpush1.bf16.msra.mxu0 0
        %2765 = vmatprep.subr.bf16.mxu0 0
        %2766 = vmatpush1.bf16.msra.mxu0 0
        %2767 = vmatprep.subr.bf16.mxu0 0
        %2768 = vmatpush1.bf16.msra.mxu0 0
        %2769 = vmatprep.subr.bf16.mxu0 0
        %2770 = vmatpush1.bf16.msra.mxu0 0
        %2771 = vmatprep.subr.bf16.mxu0 0
        %2772 = vmatpush1.bf16.msra.mxu0 0
        %2773 = vmatprep.subr.bf16.mxu0 0
        %2774 = vmatpush1.bf16.msra.mxu0 0
        %2775 = vmatprep.mubr.bf16.mxu0 0
        %2776 = vmatmul.mubr.bf16.gmra.mrb[0].mxu0 %v2741
        %v2777 = vpop.f32.mrb[0].mxu0
        %v2778 = vadd.f32 0.0, %v2777
        %v2779 = vpop.f32.mrb[0].mxu0
        %v2780 = vpop.f32.mrb[0].mxu0
        %v2781 = vadd.f32 0.0, %v2780
        %v2782 = vpop.f32.mrb[0].mxu0
        %2783 = vdwg.mxu0
        %2784 = vrot.lane.b32.xlu0 %v936, 56
        %v2785 = vpop.permute.xlu0 %2784
        %v2788 = vsel %vm1361, %v2546, 0
        %2790 = vmatprep.subr.bf16.mxu0 0
        %2791 = vmatpush1.bf16.msra.mxu0 %v2785
        %2792 = vmatprep.subr.bf16.mxu0 0
        %2793 = vmatpush1.bf16.msra.mxu0 0
        %2794 = vmatprep.subr.bf16.mxu0 0
        %2795 = vmatpush1.bf16.msra.mxu0 0
        %2796 = vmatprep.subr.bf16.mxu0 0
        %2797 = vmatpush1.bf16.msra.mxu0 0
        %2798 = vmatprep.subr.bf16.mxu0 0
        %2799 = vmatpush1.bf16.msra.mxu0 0
        %2800 = vmatprep.subr.bf16.mxu0 0
        %2801 = vmatpush1.bf16.msra.mxu0 0
        %2802 = vmatprep.subr.bf16.mxu0 0
        %2803 = vmatpush1.bf16.msra.mxu0 0
        %2804 = vmatprep.subr.bf16.mxu0 0
        %2805 = vmatpush1.bf16.msra.mxu0 0
        %2806 = vmatprep.subr.bf16.mxu0 0
        %2807 = vmatpush1.bf16.msra.mxu0 0
        %2808 = vmatprep.subr.bf16.mxu0 0
        %2809 = vmatpush1.bf16.msra.mxu0 0
        %2810 = vmatprep.subr.bf16.mxu0 0
        %2811 = vmatpush1.bf16.msra.mxu0 0
        %2812 = vmatprep.subr.bf16.mxu0 0
        %2813 = vmatpush1.bf16.msra.mxu0 0
        %2814 = vmatprep.subr.bf16.mxu0 0
        %2815 = vmatpush1.bf16.msra.mxu0 0
        %2816 = vmatprep.subr.bf16.mxu0 0
        %2817 = vmatpush1.bf16.msra.mxu0 0
        %2818 = vmatprep.subr.bf16.mxu0 0
        %2819 = vmatpush1.bf16.msra.mxu0 0
        %2820 = vmatprep.subr.bf16.mxu0 0
        %2821 = vmatpush1.bf16.msra.mxu0 0
        %2822 = vmatprep.mubr.bf16.mxu0 0
        %2823 = vmatmul.mubr.bf16.gmra.mrb[0].mxu0 %v2788
        %v2824 = vpop.f32.mrb[0].mxu0
        %v2825 = vadd.f32 0.0, %v2824
        %v2826 = vpop.f32.mrb[0].mxu0
        %v2827 = vpop.f32.mrb[0].mxu0
        %v2828 = vadd.f32 0.0, %v2827
        %v2829 = vpop.f32.mrb[0].mxu0
        %2830 = vdwg.mxu0
        %2831 = vrot.lane.b32.xlu0 %v937, 56
        %v2832 = vpop.permute.xlu0 %2831
        %v2835 = vsel %vm1361, %v2547, 0
        %2837 = vmatprep.subr.bf16.mxu0 0
        %2838 = vmatpush1.bf16.msra.mxu0 %v2832
        %2839 = vmatprep.subr.bf16.mxu0 0
        %2840 = vmatpush1.bf16.msra.mxu0 0
        %2841 = vmatprep.subr.bf16.mxu0 0
        %2842 = vmatpush1.bf16.msra.mxu0 0
        %2843 = vmatprep.subr.bf16.mxu0 0
        %2844 = vmatpush1.bf16.msra.mxu0 0
        %2845 = vmatprep.subr.bf16.mxu0 0
        %2846 = vmatpush1.bf16.msra.mxu0 0
        %2847 = vmatprep.subr.bf16.mxu0 0
        %2848 = vmatpush1.bf16.msra.mxu0 0
        %2849 = vmatprep.subr.bf16.mxu0 0
        %2850 = vmatpush1.bf16.msra.mxu0 0
        %2851 = vmatprep.subr.bf16.mxu0 0
        %2852 = vmatpush1.bf16.msra.mxu0 0
        %2853 = vmatprep.subr.bf16.mxu0 0
        %2854 = vmatpush1.bf16.msra.mxu0 0
        %2855 = vmatprep.subr.bf16.mxu0 0
        %2856 = vmatpush1.bf16.msra.mxu0 0
        %2857 = vmatprep.subr.bf16.mxu0 0
        %2858 = vmatpush1.bf16.msra.mxu0 0
        %2859 = vmatprep.subr.bf16.mxu0 0
        %2860 = vmatpush1.bf16.msra.mxu0 0
        %2861 = vmatprep.subr.bf16.mxu0 0
        %2862 = vmatpush1.bf16.msra.mxu0 0
        %2863 = vmatprep.subr.bf16.mxu0 0
        %2864 = vmatpush1.bf16.msra.mxu0 0
        %2865 = vmatprep.subr.bf16.mxu0 0
        %2866 = vmatpush1.bf16.msra.mxu0 0
        %2867 = vmatprep.subr.bf16.mxu0 0
        %2868 = vmatpush1.bf16.msra.mxu0 0
        %2869 = vmatprep.mubr.bf16.mxu0 0
        %2870 = vmatmul.mubr.bf16.gmra.mrb[0].mxu0 %v2835
        %v2871 = vpop.f32.mrb[0].mxu0
        %v2872 = vadd.f32 0.0, %v2871
        %v2873 = vpop.f32.mrb[0].mxu0
        %v2874 = vpop.f32.mrb[0].mxu0
        %v2875 = vadd.f32 0.0, %v2874
        %v2876 = vpop.f32.mrb[0].mxu0
        %2877 = vdwg.mxu0
        %2878 = vrot.lane.b32.xlu0 %v938, 56
        %v2879 = vpop.permute.xlu0 %2878
        %v2882 = vsel %vm1361, %v2548, 0
        %2884 = vmatprep.subr.bf16.mxu0 0
        %2885 = vmatpush1.bf16.msra.mxu0 %v2879
        %2886 = vmatprep.subr.bf16.mxu0 0
        %2887 = vmatpush1.bf16.msra.mxu0 0
        %2888 = vmatprep.subr.bf16.mxu0 0
        %2889 = vmatpush1.bf16.msra.mxu0 0
        %2890 = vmatprep.subr.bf16.mxu0 0
        %2891 = vmatpush1.bf16.msra.mxu0 0
        %2892 = vmatprep.subr.bf16.mxu0 0
        %2893 = vmatpush1.bf16.msra.mxu0 0
        %2894 = vmatprep.subr.bf16.mxu0 0
        %2895 = vmatpush1.bf16.msra.mxu0 0
        %2896 = vmatprep.subr.bf16.mxu0 0
        %2897 = vmatpush1.bf16.msra.mxu0 0
        %2898 = vmatprep.subr.bf16.mxu0 0
        %2899 = vmatpush1.bf16.msra.mxu0 0
        %2900 = vmatprep.subr.bf16.mxu0 0
        %2901 = vmatpush1.bf16.msra.mxu0 0
        %2902 = vmatprep.subr.bf16.mxu0 0
        %2903 = vmatpush1.bf16.msra.mxu0 0
        %2904 = vmatprep.subr.bf16.mxu0 0
        %2905 = vmatpush1.bf16.msra.mxu0 0
        %2906 = vmatprep.subr.bf16.mxu0 0
        %2907 = vmatpush1.bf16.msra.mxu0 0
        %2908 = vmatprep.subr.bf16.mxu0 0
        %2909 = vmatpush1.bf16.msra.mxu0 0
        %2910 = vmatprep.subr.bf16.mxu0 0
        %2911 = vmatpush1.bf16.msra.mxu0 0
        %2912 = vmatprep.subr.bf16.mxu0 0
        %2913 = vmatpush1.bf16.msra.mxu0 0
        %2914 = vmatprep.subr.bf16.mxu0 0
        %2915 = vmatpush1.bf16.msra.mxu0 0
        %2916 = vmatprep.mubr.bf16.mxu0 0
        %2917 = vmatmul.mubr.bf16.gmra.mrb[0].mxu0 %v2882
        %v2918 = vpop.f32.mrb[0].mxu0
        %v2919 = vadd.f32 0.0, %v2918
        %v2920 = vpop.f32.mrb[0].mxu0
        %v2921 = vpop.f32.mrb[0].mxu0
        %v2922 = vadd.f32 0.0, %v2921
        %v2923 = vpop.f32.mrb[0].mxu0
        %2924 = vdwg.mxu0
        %v2925 = vpack.c.bf16 %v2593, %v2590
        %v2926 = vpack.c.bf16 %v2640, %v2637
        %v2927 = vpack.c.bf16 %v2687, %v2684
        %v2928 = vpack.c.bf16 %v2734, %v2731
        %v2929 = vpack.c.bf16 %v2781, %v2778
        %v2930 = vpack.c.bf16 %v2828, %v2825
        %v2931 = vpack.c.bf16 %v2875, %v2872
        %v2932 = vpack.c.bf16 %v2922, %v2919
        %v2934 = vsel %vm758, %v2925, 0
        %v2937 = vsel %vm758, %v2926, 0
        %v2940 = vsel %vm758, %v2927, 0
        %v2943 = vsel %vm758, %v2928, 0
        %v2946 = vsel %vm758, %v2929, 0
        %v2949 = vsel %vm758, %v2930, 0
        %v2952 = vsel %vm758, %v2931, 0
        %v2955 = vsel %vm758, %v2932, 0
        %v2958 = vsel %vm783, %v940, 0
        %2960 = vmatprep.subr.bf16.mxu0 0
        %2961 = vmatpush1.bf16.msra.mxu0 %v2958
        %2962 = vmatprep.subr.bf16.mxu0 0
        %2963 = vmatpush1.bf16.msra.mxu0 0
        %2964 = vmatprep.subr.bf16.mxu0 0
        %2965 = vmatpush1.bf16.msra.mxu0 0
        %2966 = vmatprep.subr.bf16.mxu0 0
        %2967 = vmatpush1.bf16.msra.mxu0 0
        %2968 = vmatprep.subr.bf16.mxu0 0
        %2969 = vmatpush1.bf16.msra.mxu0 0
        %2970 = vmatprep.subr.bf16.mxu0 0
        %2971 = vmatpush1.bf16.msra.mxu0 0
        %2972 = vmatprep.subr.bf16.mxu0 0
        %2973 = vmatpush1.bf16.msra.mxu0 0
        %2974 = vmatprep.subr.bf16.mxu0 0
        %2975 = vmatpush1.bf16.msra.mxu0 0
        %2976 = vmatprep.subr.bf16.mxu0 0
        %2977 = vmatpush1.bf16.msra.mxu0 0
        %2978 = vmatprep.subr.bf16.mxu0 0
        %2979 = vmatpush1.bf16.msra.mxu0 0
        %2980 = vmatprep.subr.bf16.mxu0 0
        %2981 = vmatpush1.bf16.msra.mxu0 0
        %2982 = vmatprep.subr.bf16.mxu0 0
        %2983 = vmatpush1.bf16.msra.mxu0 0
        %2984 = vmatprep.subr.bf16.mxu0 0
        %2985 = vmatpush1.bf16.msra.mxu0 0
        %2986 = vmatprep.subr.bf16.mxu0 0
        %2987 = vmatpush1.bf16.msra.mxu0 0
        %2988 = vmatprep.subr.bf16.mxu0 0
        %2989 = vmatpush1.bf16.msra.mxu0 0
        %2990 = vmatprep.subr.bf16.mxu0 0
        %2991 = vmatpush1.bf16.msra.mxu0 0
        %2992 = vmatprep.mubr.bf16.mxu0 0
        %2993 = vmatmul.mubr.bf16.gmra.mrb[0].mxu0 %v2934
        %v2994 = vpop.f32.mrb[0].mxu0
        %v2995 = vadd.f32 0.0, %v2994
        %v2996 = vpop.f32.mrb[0].mxu0
        %v2997 = vpop.f32.mrb[0].mxu0
        %v2998 = vadd.f32 0.0, %v2997
        %v2999 = vpop.f32.mrb[0].mxu0
        %3000 = vmatprep.mubr.bf16.mxu0 0
        %3001 = vmatmul.mubr.bf16.gmra.mrb[0].mxu0 %v2937
        %v3002 = vpop.f32.mrb[0].mxu0
        %v3003 = vadd.f32 0.0, %v3002
        %v3004 = vpop.f32.mrb[0].mxu0
        %v3005 = vpop.f32.mrb[0].mxu0
        %v3006 = vadd.f32 0.0, %v3005
        %v3007 = vpop.f32.mrb[0].mxu0
        %3008 = vmatprep.mubr.bf16.mxu0 0
        %3009 = vmatmul.mubr.bf16.gmra.mrb[0].mxu0 %v2940
        %v3010 = vpop.f32.mrb[0].mxu0
        %v3011 = vadd.f32 0.0, %v3010
        %v3012 = vpop.f32.mrb[0].mxu0
        %v3013 = vpop.f32.mrb[0].mxu0
        %v3014 = vadd.f32 0.0, %v3013
        %v3015 = vpop.f32.mrb[0].mxu0
        %3016 = vmatprep.mubr.bf16.mxu0 0
        %3017 = vmatmul.mubr.bf16.gmra.mrb[0].mxu0 %v2943
        %v3018 = vpop.f32.mrb[0].mxu0
        %v3019 = vadd.f32 0.0, %v3018
        %v3020 = vpop.f32.mrb[0].mxu0
        %v3021 = vpop.f32.mrb[0].mxu0
        %v3022 = vadd.f32 0.0, %v3021
        %v3023 = vpop.f32.mrb[0].mxu0
        %3024 = vmatprep.mubr.bf16.mxu0 0
        %3025 = vmatmul.mubr.bf16.gmra.mrb[0].mxu0 %v2946
        %v3026 = vpop.f32.mrb[0].mxu0
        %v3027 = vadd.f32 0.0, %v3026
        %v3028 = vpop.f32.mrb[0].mxu0
        %v3029 = vpop.f32.mrb[0].mxu0
        %v3030 = vadd.f32 0.0, %v3029
        %v3031 = vpop.f32.mrb[0].mxu0
        %3032 = vmatprep.mubr.bf16.mxu0 0
        %3033 = vmatmul.mubr.bf16.gmra.mrb[0].mxu0 %v2949
        %v3034 = vpop.f32.mrb[0].mxu0
        %v3035 = vadd.f32 0.0, %v3034
        %v3036 = vpop.f32.mrb[0].mxu0
        %v3037 = vpop.f32.mrb[0].mxu0
        %v3038 = vadd.f32 0.0, %v3037
        %v3039 = vpop.f32.mrb[0].mxu0
        %3040 = vmatprep.mubr.bf16.mxu0 0
        %3041 = vmatmul.mubr.bf16.gmra.mrb[0].mxu0 %v2952
        %v3042 = vpop.f32.mrb[0].mxu0
        %v3043 = vadd.f32 0.0, %v3042
        %v3044 = vpop.f32.mrb[0].mxu0
        %v3045 = vpop.f32.mrb[0].mxu0
        %v3046 = vadd.f32 0.0, %v3045
        %v3047 = vpop.f32.mrb[0].mxu0
        %3048 = vmatprep.mubr.bf16.mxu0 0
        %3049 = vmatmul.mubr.bf16.gmra.mrb[0].mxu0 %v2955
        %v3050 = vpop.f32.mrb[0].mxu0
        %v3051 = vadd.f32 0.0, %v3050
        %v3052 = vpop.f32.mrb[0].mxu0
        %v3053 = vpop.f32.mrb[0].mxu0
        %v3054 = vadd.f32 0.0, %v3053
        %v3055 = vpop.f32.mrb[0].mxu0
        %3056 = vdwg.mxu0
        %v3058 = vsel %vm758, %v1930, 0
        %v3061 = vsel %vm758, %v1931, 0
        %v3064 = vsel %vm758, %v1932, 0
        %v3067 = vsel %vm758, %v1933, 0
        %v3070 = vsel %vm758, %v1934, 0
        %v3073 = vsel %vm758, %v1935, 0
        %v3076 = vsel %vm758, %v1936, 0
        %v3079 = vsel %vm758, %v1937, 0
        %v3082 = vsel %vm783, %v939, 0
        %3084 = vmatprep.subr.bf16.mxu0 0
        %3085 = vmatpush1.bf16.msra.mxu0 %v3082
        %3086 = vmatprep.subr.bf16.mxu0 0
        %3087 = vmatpush1.bf16.msra.mxu0 0
        %3088 = vmatprep.subr.bf16.mxu0 0
        %3089 = vmatpush1.bf16.msra.mxu0 0
        %3090 = vmatprep.subr.bf16.mxu0 0
        %3091 = vmatpush1.bf16.msra.mxu0 0
        %3092 = vmatprep.subr.bf16.mxu0 0
        %3093 = vmatpush1.bf16.msra.mxu0 0
        %3094 = vmatprep.subr.bf16.mxu0 0
        %3095 = vmatpush1.bf16.msra.mxu0 0
        %3096 = vmatprep.subr.bf16.mxu0 0
        %3097 = vmatpush1.bf16.msra.mxu0 0
        %3098 = vmatprep.subr.bf16.mxu0 0
        %3099 = vmatpush1.bf16.msra.mxu0 0
        %3100 = vmatprep.subr.bf16.mxu0 0
        %3101 = vmatpush1.bf16.msra.mxu0 0
        %3102 = vmatprep.subr.bf16.mxu0 0
        %3103 = vmatpush1.bf16.msra.mxu0 0
        %3104 = vmatprep.subr.bf16.mxu0 0
        %3105 = vmatpush1.bf16.msra.mxu0 0
        %3106 = vmatprep.subr.bf16.mxu0 0
        %3107 = vmatpush1.bf16.msra.mxu0 0
        %3108 = vmatprep.subr.bf16.mxu0 0
        %3109 = vmatpush1.bf16.msra.mxu0 0
        %3110 = vmatprep.subr.bf16.mxu0 0
        %3111 = vmatpush1.bf16.msra.mxu0 0
        %3112 = vmatprep.subr.bf16.mxu0 0
        %3113 = vmatpush1.bf16.msra.mxu0 0
        %3114 = vmatprep.subr.bf16.mxu0 0
        %3115 = vmatpush1.bf16.msra.mxu0 0
        %3116 = vmatprep.mubr.bf16.mxu0 0
        %3117 = vmatmul.mubr.bf16.gmra.mrb[0].mxu0 %v3058
        %v3118 = vpop.f32.mrb[0].mxu0
        %v3119 = vadd.f32 %v2995, %v3118
        %v3120 = vpop.f32.mrb[0].mxu0
        %v3121 = vpop.f32.mrb[0].mxu0
        %v3122 = vadd.f32 %v2998, %v3121
        %v3123 = vpop.f32.mrb[0].mxu0
        %3124 = vmatprep.mubr.bf16.mxu0 0
        %3125 = vmatmul.mubr.bf16.gmra.mrb[0].mxu0 %v3061
        %v3126 = vpop.f32.mrb[0].mxu0
        %v3127 = vadd.f32 %v3003, %v3126
        %v3128 = vpop.f32.mrb[0].mxu0
        %v3129 = vpop.f32.mrb[0].mxu0
        %v3130 = vadd.f32 %v3006, %v3129
        %v3131 = vpop.f32.mrb[0].mxu0
        %3132 = vmatprep.mubr.bf16.mxu0 0
        %3133 = vmatmul.mubr.bf16.gmra.mrb[0].mxu0 %v3064
        %v3134 = vpop.f32.mrb[0].mxu0
        %v3135 = vadd.f32 %v3011, %v3134
        %v3136 = vpop.f32.mrb[0].mxu0
        %v3137 = vpop.f32.mrb[0].mxu0
        %v3138 = vadd.f32 %v3014, %v3137
        %v3139 = vpop.f32.mrb[0].mxu0
        %3140 = vmatprep.mubr.bf16.mxu0 0
        %3141 = vmatmul.mubr.bf16.gmra.mrb[0].mxu0 %v3067
        %v3142 = vpop.f32.mrb[0].mxu0
        %v3143 = vadd.f32 %v3019, %v3142
        %v3144 = vpop.f32.mrb[0].mxu0
        %v3145 = vpop.f32.mrb[0].mxu0
        %v3146 = vadd.f32 %v3022, %v3145
        %v3147 = vpop.f32.mrb[0].mxu0
        %3148 = vmatprep.mubr.bf16.mxu0 0
        %3149 = vmatmul.mubr.bf16.gmra.mrb[0].mxu0 %v3070
        %v3150 = vpop.f32.mrb[0].mxu0
        %v3151 = vadd.f32 %v3027, %v3150
        %v3152 = vpop.f32.mrb[0].mxu0
        %v3153 = vpop.f32.mrb[0].mxu0
        %v3154 = vadd.f32 %v3030, %v3153
        %v3155 = vpop.f32.mrb[0].mxu0
        %3156 = vmatprep.mubr.bf16.mxu0 0
        %3157 = vmatmul.mubr.bf16.gmra.mrb[0].mxu0 %v3073
        %v3158 = vpop.f32.mrb[0].mxu0
        %v3159 = vadd.f32 %v3035, %v3158
        %v3160 = vpop.f32.mrb[0].mxu0
        %v3161 = vpop.f32.mrb[0].mxu0
        %v3162 = vadd.f32 %v3038, %v3161
        %v3163 = vpop.f32.mrb[0].mxu0
        %3164 = vmatprep.mubr.bf16.mxu0 0
        %3165 = vmatmul.mubr.bf16.gmra.mrb[0].mxu0 %v3076
        %v3166 = vpop.f32.mrb[0].mxu0
        %v3167 = vadd.f32 %v3043, %v3166
        %v3168 = vpop.f32.mrb[0].mxu0
        %v3169 = vpop.f32.mrb[0].mxu0
        %v3170 = vadd.f32 %v3046, %v3169
        %v3171 = vpop.f32.mrb[0].mxu0
        %3172 = vmatprep.mubr.bf16.mxu0 0
        %3173 = vmatmul.mubr.bf16.gmra.mrb[0].mxu0 %v3079
        %v3174 = vpop.f32.mrb[0].mxu0
        %v3175 = vadd.f32 %v3051, %v3174
        %v3176 = vpop.f32.mrb[0].mxu0
        %v3177 = vpop.f32.mrb[0].mxu0
        %v3178 = vadd.f32 %v3054, %v3177
        %v3179 = vpop.f32.mrb[0].mxu0
        %3180 = vdwg.mxu0
        %3181 = vrot.lane.b32.xlu0 %v923, 112
        %v3182 = vpop.permute.xlu0 %3181
        %3183 = vrot.lane.b32.xlu0 %v923, 80
        %v3184 = vpop.permute.xlu0 %3183
        %v3186 = vsel %vm758, %v3182, 0
        %v3189 = vsel %vm758, %v3184, 0
        %3191 = vmatprep.subr.bf16.mxu0 0
        %3192 = vmatpush1.bf16.xpose.msra.mxu0 %v3189
        %3193 = vmatprep.subr.bf16.mxu0 0
        %3194 = vmatpush1.bf16.xpose.msra.mxu0 0
        %3195 = vmatprep.subr.bf16.mxu0 0
        %3196 = vmatpush1.bf16.xpose.msra.mxu0 0
        %3197 = vmatprep.subr.bf16.mxu0 0
        %3198 = vmatpush1.bf16.xpose.msra.mxu0 0
        %3199 = vmatprep.subr.bf16.mxu0 0
        %3200 = vmatpush1.bf16.xpose.msra.mxu0 0
        %3201 = vmatprep.subr.bf16.mxu0 0
        %3202 = vmatpush1.bf16.xpose.msra.mxu0 0
        %3203 = vmatprep.subr.bf16.mxu0 0
        %3204 = vmatpush1.bf16.xpose.msra.mxu0 0
        %3205 = vmatprep.subr.bf16.mxu0 0
        %3206 = vmatpush1.bf16.xpose.msra.mxu0 0
        %3207 = vmatprep.subr.bf16.mxu0 0
        %3208 = vmatpush1.bf16.xpose.msra.mxu0 0
        %3209 = vmatprep.subr.bf16.mxu0 0
        %3210 = vmatpush1.bf16.xpose.msra.mxu0 0
        %3211 = vmatprep.subr.bf16.mxu0 0
        %3212 = vmatpush1.bf16.xpose.msra.mxu0 0
        %3213 = vmatprep.subr.bf16.mxu0 0
        %3214 = vmatpush1.bf16.xpose.msra.mxu0 0
        %3215 = vmatprep.subr.bf16.mxu0 0
        %3216 = vmatpush1.bf16.xpose.msra.mxu0 0
        %3217 = vmatprep.subr.bf16.mxu0 0
        %3218 = vmatpush1.bf16.xpose.msra.mxu0 0
        %3219 = vmatprep.subr.bf16.mxu0 0
        %3220 = vmatpush1.bf16.xpose.msra.mxu0 0
        %3221 = vmatprep.subr.bf16.mxu0 0
        %3222 = vmatpush1.bf16.xpose.msra.mxu0 0
        %3223 = vmatprep.mubr.bf16.mxu0 0
        %3224 = vmatmul.mubr.bf16.gmra.mrb[0].mxu0 %v3186
        %v3225 = vpop.f32.mrb[0].mxu0
        %v3226 = vadd.f32 0.0, %v3225
        %v3227 = vpop.f32.mrb[0].mxu0
        %v3228 = vpop.f32.mrb[0].mxu0
        %v3229 = vadd.f32 0.0, %v3228
        %v3230 = vpop.f32.mrb[0].mxu0
        %3231 = vdwg.mxu0
        %3232 = vrot.lane.b32.xlu0 %v924, 112
        %v3233 = vpop.permute.xlu0 %3232
        %3234 = vrot.lane.b32.xlu0 %v924, 80
        %v3235 = vpop.permute.xlu0 %3234
        %v3237 = vsel %vm758, %v3233, 0
        %v3240 = vsel %vm758, %v3235, 0
        %3242 = vmatprep.subr.bf16.mxu0 0
        %3243 = vmatpush1.bf16.xpose.msra.mxu0 %v3240
        %3244 = vmatprep.subr.bf16.mxu0 0
        %3245 = vmatpush1.bf16.xpose.msra.mxu0 0
        %3246 = vmatprep.subr.bf16.mxu0 0
        %3247 = vmatpush1.bf16.xpose.msra.mxu0 0
        %3248 = vmatprep.subr.bf16.mxu0 0
        %3249 = vmatpush1.bf16.xpose.msra.mxu0 0
        %3250 = vmatprep.subr.bf16.mxu0 0
        %3251 = vmatpush1.bf16.xpose.msra.mxu0 0
        %3252 = vmatprep.subr.bf16.mxu0 0
        %3253 = vmatpush1.bf16.xpose.msra.mxu0 0
        %3254 = vmatprep.subr.bf16.mxu0 0
        %3255 = vmatpush1.bf16.xpose.msra.mxu0 0
        %3256 = vmatprep.subr.bf16.mxu0 0
        %3257 = vmatpush1.bf16.xpose.msra.mxu0 0
        %3258 = vmatprep.subr.bf16.mxu0 0
        %3259 = vmatpush1.bf16.xpose.msra.mxu0 0
        %3260 = vmatprep.subr.bf16.mxu0 0
        %3261 = vmatpush1.bf16.xpose.msra.mxu0 0
        %3262 = vmatprep.subr.bf16.mxu0 0
        %3263 = vmatpush1.bf16.xpose.msra.mxu0 0
        %3264 = vmatprep.subr.bf16.mxu0 0
        %3265 = vmatpush1.bf16.xpose.msra.mxu0 0
        %3266 = vmatprep.subr.bf16.mxu0 0
        %3267 = vmatpush1.bf16.xpose.msra.mxu0 0
        %3268 = vmatprep.subr.bf16.mxu0 0
        %3269 = vmatpush1.bf16.xpose.msra.mxu0 0
        %3270 = vmatprep.subr.bf16.mxu0 0
        %3271 = vmatpush1.bf16.xpose.msra.mxu0 0
        %3272 = vmatprep.subr.bf16.mxu0 0
        %3273 = vmatpush1.bf16.xpose.msra.mxu0 0
        %3274 = vmatprep.mubr.bf16.mxu0 0
        %3275 = vmatmul.mubr.bf16.gmra.mrb[0].mxu0 %v3237
        %v3276 = vpop.f32.mrb[0].mxu0
        %v3277 = vadd.f32 0.0, %v3276
        %v3278 = vpop.f32.mrb[0].mxu0
        %v3279 = vpop.f32.mrb[0].mxu0
        %v3280 = vadd.f32 0.0, %v3279
        %v3281 = vpop.f32.mrb[0].mxu0
        %3282 = vdwg.mxu0
        %3283 = vrot.lane.b32.xlu0 %v925, 112
        %v3284 = vpop.permute.xlu0 %3283
        %3285 = vrot.lane.b32.xlu0 %v925, 80
        %v3286 = vpop.permute.xlu0 %3285
        %v3288 = vsel %vm758, %v3284, 0
        %v3291 = vsel %vm758, %v3286, 0
        %3293 = vmatprep.subr.bf16.mxu0 0
        %3294 = vmatpush1.bf16.xpose.msra.mxu0 %v3291
        %3295 = vmatprep.subr.bf16.mxu0 0
        %3296 = vmatpush1.bf16.xpose.msra.mxu0 0
        %3297 = vmatprep.subr.bf16.mxu0 0
        %3298 = vmatpush1.bf16.xpose.msra.mxu0 0
        %3299 = vmatprep.subr.bf16.mxu0 0
        %3300 = vmatpush1.bf16.xpose.msra.mxu0 0
        %3301 = vmatprep.subr.bf16.mxu0 0
        %3302 = vmatpush1.bf16.xpose.msra.mxu0 0
        %3303 = vmatprep.subr.bf16.mxu0 0
        %3304 = vmatpush1.bf16.xpose.msra.mxu0 0
        %3305 = vmatprep.subr.bf16.mxu0 0
        %3306 = vmatpush1.bf16.xpose.msra.mxu0 0
        %3307 = vmatprep.subr.bf16.mxu0 0
        %3308 = vmatpush1.bf16.xpose.msra.mxu0 0
        %3309 = vmatprep.subr.bf16.mxu0 0
        %3310 = vmatpush1.bf16.xpose.msra.mxu0 0
        %3311 = vmatprep.subr.bf16.mxu0 0
        %3312 = vmatpush1.bf16.xpose.msra.mxu0 0
        %3313 = vmatprep.subr.bf16.mxu0 0
        %3314 = vmatpush1.bf16.xpose.msra.mxu0 0
        %3315 = vmatprep.subr.bf16.mxu0 0
        %3316 = vmatpush1.bf16.xpose.msra.mxu0 0
        %3317 = vmatprep.subr.bf16.mxu0 0
        %3318 = vmatpush1.bf16.xpose.msra.mxu0 0
        %3319 = vmatprep.subr.bf16.mxu0 0
        %3320 = vmatpush1.bf16.xpose.msra.mxu0 0
        %3321 = vmatprep.subr.bf16.mxu0 0
        %3322 = vmatpush1.bf16.xpose.msra.mxu0 0
        %3323 = vmatprep.subr.bf16.mxu0 0
        %3324 = vmatpush1.bf16.xpose.msra.mxu0 0
        %3325 = vmatprep.mubr.bf16.mxu0 0
        %3326 = vmatmul.mubr.bf16.gmra.mrb[0].mxu0 %v3288
        %v3327 = vpop.f32.mrb[0].mxu0
        %v3328 = vadd.f32 0.0, %v3327
        %v3329 = vpop.f32.mrb[0].mxu0
        %v3330 = vpop.f32.mrb[0].mxu0
        %v3331 = vadd.f32 0.0, %v3330
        %v3332 = vpop.f32.mrb[0].mxu0
        %3333 = vdwg.mxu0
        %3334 = vrot.lane.b32.xlu0 %v926, 112
        %v3335 = vpop.permute.xlu0 %3334
        %3336 = vrot.lane.b32.xlu0 %v926, 80
        %v3337 = vpop.permute.xlu0 %3336
        %v3339 = vsel %vm758, %v3335, 0
        %v3342 = vsel %vm758, %v3337, 0
        %3344 = vmatprep.subr.bf16.mxu0 0
        %3345 = vmatpush1.bf16.xpose.msra.mxu0 %v3342
        %3346 = vmatprep.subr.bf16.mxu0 0
        %3347 = vmatpush1.bf16.xpose.msra.mxu0 0
        %3348 = vmatprep.subr.bf16.mxu0 0
        %3349 = vmatpush1.bf16.xpose.msra.mxu0 0
        %3350 = vmatprep.subr.bf16.mxu0 0
        %3351 = vmatpush1.bf16.xpose.msra.mxu0 0
        %3352 = vmatprep.subr.bf16.mxu0 0
        %3353 = vmatpush1.bf16.xpose.msra.mxu0 0
        %3354 = vmatprep.subr.bf16.mxu0 0
        %3355 = vmatpush1.bf16.xpose.msra.mxu0 0
        %3356 = vmatprep.subr.bf16.mxu0 0
        %3357 = vmatpush1.bf16.xpose.msra.mxu0 0
        %3358 = vmatprep.subr.bf16.mxu0 0
        %3359 = vmatpush1.bf16.xpose.msra.mxu0 0
        %3360 = vmatprep.subr.bf16.mxu0 0
        %3361 = vmatpush1.bf16.xpose.msra.mxu0 0
        %3362 = vmatprep.subr.bf16.mxu0 0
        %3363 = vmatpush1.bf16.xpose.msra.mxu0 0
        %3364 = vmatprep.subr.bf16.mxu0 0
        %3365 = vmatpush1.bf16.xpose.msra.mxu0 0
        %3366 = vmatprep.subr.bf16.mxu0 0
        %3367 = vmatpush1.bf16.xpose.msra.mxu0 0
        %3368 = vmatprep.subr.bf16.mxu0 0
        %3369 = vmatpush1.bf16.xpose.msra.mxu0 0
        %3370 = vmatprep.subr.bf16.mxu0 0
        %3371 = vmatpush1.bf16.xpose.msra.mxu0 0
        %3372 = vmatprep.subr.bf16.mxu0 0
        %3373 = vmatpush1.bf16.xpose.msra.mxu0 0
        %3374 = vmatprep.subr.bf16.mxu0 0
        %3375 = vmatpush1.bf16.xpose.msra.mxu0 0
        %3376 = vmatprep.mubr.bf16.mxu0 0
        %3377 = vmatmul.mubr.bf16.gmra.mrb[0].mxu0 %v3339
        %v3378 = vpop.f32.mrb[0].mxu0
        %v3379 = vadd.f32 0.0, %v3378
        %v3380 = vpop.f32.mrb[0].mxu0
        %v3381 = vpop.f32.mrb[0].mxu0
        %v3382 = vadd.f32 0.0, %v3381
        %v3383 = vpop.f32.mrb[0].mxu0
        %3384 = vdwg.mxu0
        %3385 = vrot.lane.b32.xlu0 %v927, 112
        %v3386 = vpop.permute.xlu0 %3385
        %3387 = vrot.lane.b32.xlu0 %v927, 80
        %v3388 = vpop.permute.xlu0 %3387
        %v3390 = vsel %vm758, %v3386, 0
        %v3393 = vsel %vm758, %v3388, 0
        %3395 = vmatprep.subr.bf16.mxu0 0
        %3396 = vmatpush1.bf16.xpose.msra.mxu0 %v3393
        %3397 = vmatprep.subr.bf16.mxu0 0
        %3398 = vmatpush1.bf16.xpose.msra.mxu0 0
        %3399 = vmatprep.subr.bf16.mxu0 0
        %3400 = vmatpush1.bf16.xpose.msra.mxu0 0
        %3401 = vmatprep.subr.bf16.mxu0 0
        %3402 = vmatpush1.bf16.xpose.msra.mxu0 0
        %3403 = vmatprep.subr.bf16.mxu0 0
        %3404 = vmatpush1.bf16.xpose.msra.mxu0 0
        %3405 = vmatprep.subr.bf16.mxu0 0
        %3406 = vmatpush1.bf16.xpose.msra.mxu0 0
        %3407 = vmatprep.subr.bf16.mxu0 0
        %3408 = vmatpush1.bf16.xpose.msra.mxu0 0
        %3409 = vmatprep.subr.bf16.mxu0 0
        %3410 = vmatpush1.bf16.xpose.msra.mxu0 0
        %3411 = vmatprep.subr.bf16.mxu0 0
        %3412 = vmatpush1.bf16.xpose.msra.mxu0 0
        %3413 = vmatprep.subr.bf16.mxu0 0
        %3414 = vmatpush1.bf16.xpose.msra.mxu0 0
        %3415 = vmatprep.subr.bf16.mxu0 0
        %3416 = vmatpush1.bf16.xpose.msra.mxu0 0
        %3417 = vmatprep.subr.bf16.mxu0 0
        %3418 = vmatpush1.bf16.xpose.msra.mxu0 0
        %3419 = vmatprep.subr.bf16.mxu0 0
        %3420 = vmatpush1.bf16.xpose.msra.mxu0 0
        %3421 = vmatprep.subr.bf16.mxu0 0
        %3422 = vmatpush1.bf16.xpose.msra.mxu0 0
        %3423 = vmatprep.subr.bf16.mxu0 0
        %3424 = vmatpush1.bf16.xpose.msra.mxu0 0
        %3425 = vmatprep.subr.bf16.mxu0 0
        %3426 = vmatpush1.bf16.xpose.msra.mxu0 0
        %3427 = vmatprep.mubr.bf16.mxu0 0
        %3428 = vmatmul.mubr.bf16.gmra.mrb[0].mxu0 %v3390
        %v3429 = vpop.f32.mrb[0].mxu0
        %v3430 = vadd.f32 0.0, %v3429
        %v3431 = vpop.f32.mrb[0].mxu0
        %v3432 = vpop.f32.mrb[0].mxu0
        %v3433 = vadd.f32 0.0, %v3432
        %v3434 = vpop.f32.mrb[0].mxu0
        %3435 = vdwg.mxu0
        %3436 = vrot.lane.b32.xlu0 %v928, 112
        %v3437 = vpop.permute.xlu0 %3436
        %3438 = vrot.lane.b32.xlu0 %v928, 80
        %v3439 = vpop.permute.xlu0 %3438
        %v3441 = vsel %vm758, %v3437, 0
        %v3444 = vsel %vm758, %v3439, 0
        %3446 = vmatprep.subr.bf16.mxu0 0
        %3447 = vmatpush1.bf16.xpose.msra.mxu0 %v3444
        %3448 = vmatprep.subr.bf16.mxu0 0
        %3449 = vmatpush1.bf16.xpose.msra.mxu0 0
        %3450 = vmatprep.subr.bf16.mxu0 0
        %3451 = vmatpush1.bf16.xpose.msra.mxu0 0
        %3452 = vmatprep.subr.bf16.mxu0 0
        %3453 = vmatpush1.bf16.xpose.msra.mxu0 0
        %3454 = vmatprep.subr.bf16.mxu0 0
        %3455 = vmatpush1.bf16.xpose.msra.mxu0 0
        %3456 = vmatprep.subr.bf16.mxu0 0
        %3457 = vmatpush1.bf16.xpose.msra.mxu0 0
        %3458 = vmatprep.subr.bf16.mxu0 0
        %3459 = vmatpush1.bf16.xpose.msra.mxu0 0
        %3460 = vmatprep.subr.bf16.mxu0 0
        %3461 = vmatpush1.bf16.xpose.msra.mxu0 0
        %3462 = vmatprep.subr.bf16.mxu0 0
        %3463 = vmatpush1.bf16.xpose.msra.mxu0 0
        %3464 = vmatprep.subr.bf16.mxu0 0
        %3465 = vmatpush1.bf16.xpose.msra.mxu0 0
        %3466 = vmatprep.subr.bf16.mxu0 0
        %3467 = vmatpush1.bf16.xpose.msra.mxu0 0
        %3468 = vmatprep.subr.bf16.mxu0 0
        %3469 = vmatpush1.bf16.xpose.msra.mxu0 0
        %3470 = vmatprep.subr.bf16.mxu0 0
        %3471 = vmatpush1.bf16.xpose.msra.mxu0 0
        %3472 = vmatprep.subr.bf16.mxu0 0
        %3473 = vmatpush1.bf16.xpose.msra.mxu0 0
        %3474 = vmatprep.subr.bf16.mxu0 0
        %3475 = vmatpush1.bf16.xpose.msra.mxu0 0
        %3476 = vmatprep.subr.bf16.mxu0 0
        %3477 = vmatpush1.bf16.xpose.msra.mxu0 0
        %3478 = vmatprep.mubr.bf16.mxu0 0
        %3479 = vmatmul.mubr.bf16.gmra.mrb[0].mxu0 %v3441
        %v3480 = vpop.f32.mrb[0].mxu0
        %v3481 = vadd.f32 0.0, %v3480
        %v3482 = vpop.f32.mrb[0].mxu0
        %v3483 = vpop.f32.mrb[0].mxu0
        %v3484 = vadd.f32 0.0, %v3483
        %v3485 = vpop.f32.mrb[0].mxu0
        %3486 = vdwg.mxu0
        %3487 = vrot.lane.b32.xlu0 %v929, 112
        %v3488 = vpop.permute.xlu0 %3487
        %3489 = vrot.lane.b32.xlu0 %v929, 80
        %v3490 = vpop.permute.xlu0 %3489
        %v3492 = vsel %vm758, %v3488, 0
        %v3495 = vsel %vm758, %v3490, 0
        %3497 = vmatprep.subr.bf16.mxu0 0
        %3498 = vmatpush1.bf16.xpose.msra.mxu0 %v3495
        %3499 = vmatprep.subr.bf16.mxu0 0
        %3500 = vmatpush1.bf16.xpose.msra.mxu0 0
        %3501 = vmatprep.subr.bf16.mxu0 0
        %3502 = vmatpush1.bf16.xpose.msra.mxu0 0
        %3503 = vmatprep.subr.bf16.mxu0 0
        %3504 = vmatpush1.bf16.xpose.msra.mxu0 0
        %3505 = vmatprep.subr.bf16.mxu0 0
        %3506 = vmatpush1.bf16.xpose.msra.mxu0 0
        %3507 = vmatprep.subr.bf16.mxu0 0
        %3508 = vmatpush1.bf16.xpose.msra.mxu0 0
        %3509 = vmatprep.subr.bf16.mxu0 0
        %3510 = vmatpush1.bf16.xpose.msra.mxu0 0
        %3511 = vmatprep.subr.bf16.mxu0 0
        %3512 = vmatpush1.bf16.xpose.msra.mxu0 0
        %3513 = vmatprep.subr.bf16.mxu0 0
        %3514 = vmatpush1.bf16.xpose.msra.mxu0 0
        %3515 = vmatprep.subr.bf16.mxu0 0
        %3516 = vmatpush1.bf16.xpose.msra.mxu0 0
        %3517 = vmatprep.subr.bf16.mxu0 0
        %3518 = vmatpush1.bf16.xpose.msra.mxu0 0
        %3519 = vmatprep.subr.bf16.mxu0 0
        %3520 = vmatpush1.bf16.xpose.msra.mxu0 0
        %3521 = vmatprep.subr.bf16.mxu0 0
        %3522 = vmatpush1.bf16.xpose.msra.mxu0 0
        %3523 = vmatprep.subr.bf16.mxu0 0
        %3524 = vmatpush1.bf16.xpose.msra.mxu0 0
        %3525 = vmatprep.subr.bf16.mxu0 0
        %3526 = vmatpush1.bf16.xpose.msra.mxu0 0
        %3527 = vmatprep.subr.bf16.mxu0 0
        %3528 = vmatpush1.bf16.xpose.msra.mxu0 0
        %3529 = vmatprep.mubr.bf16.mxu0 0
        %3530 = vmatmul.mubr.bf16.gmra.mrb[0].mxu0 %v3492
        %v3531 = vpop.f32.mrb[0].mxu0
        %v3532 = vadd.f32 0.0, %v3531
        %v3533 = vpop.f32.mrb[0].mxu0
        %v3534 = vpop.f32.mrb[0].mxu0
        %v3535 = vadd.f32 0.0, %v3534
        %v3536 = vpop.f32.mrb[0].mxu0
        %3537 = vdwg.mxu0
        %3538 = vrot.lane.b32.xlu0 %v930, 112
        %v3539 = vpop.permute.xlu0 %3538
        %3540 = vrot.lane.b32.xlu0 %v930, 80
        %v3541 = vpop.permute.xlu0 %3540
        %v3543 = vsel %vm758, %v3539, 0
        %v3546 = vsel %vm758, %v3541, 0
        %3548 = vmatprep.subr.bf16.mxu0 0
        %3549 = vmatpush1.bf16.xpose.msra.mxu0 %v3546
        %3550 = vmatprep.subr.bf16.mxu0 0
        %3551 = vmatpush1.bf16.xpose.msra.mxu0 0
        %3552 = vmatprep.subr.bf16.mxu0 0
        %3553 = vmatpush1.bf16.xpose.msra.mxu0 0
        %3554 = vmatprep.subr.bf16.mxu0 0
        %3555 = vmatpush1.bf16.xpose.msra.mxu0 0
        %3556 = vmatprep.subr.bf16.mxu0 0
        %3557 = vmatpush1.bf16.xpose.msra.mxu0 0
        %3558 = vmatprep.subr.bf16.mxu0 0
        %3559 = vmatpush1.bf16.xpose.msra.mxu0 0
        %3560 = vmatprep.subr.bf16.mxu0 0
        %3561 = vmatpush1.bf16.xpose.msra.mxu0 0
        %3562 = vmatprep.subr.bf16.mxu0 0
        %3563 = vmatpush1.bf16.xpose.msra.mxu0 0
        %3564 = vmatprep.subr.bf16.mxu0 0
        %3565 = vmatpush1.bf16.xpose.msra.mxu0 0
        %3566 = vmatprep.subr.bf16.mxu0 0
        %3567 = vmatpush1.bf16.xpose.msra.mxu0 0
        %3568 = vmatprep.subr.bf16.mxu0 0
        %3569 = vmatpush1.bf16.xpose.msra.mxu0 0
        %3570 = vmatprep.subr.bf16.mxu0 0
        %3571 = vmatpush1.bf16.xpose.msra.mxu0 0
        %3572 = vmatprep.subr.bf16.mxu0 0
        %3573 = vmatpush1.bf16.xpose.msra.mxu0 0
        %3574 = vmatprep.subr.bf16.mxu0 0
        %3575 = vmatpush1.bf16.xpose.msra.mxu0 0
        %3576 = vmatprep.subr.bf16.mxu0 0
        %3577 = vmatpush1.bf16.xpose.msra.mxu0 0
        %3578 = vmatprep.subr.bf16.mxu0 0
        %3579 = vmatpush1.bf16.xpose.msra.mxu0 0
        %3580 = vmatprep.mubr.bf16.mxu0 0
        %3581 = vmatmul.mubr.bf16.gmra.mrb[0].mxu0 %v3543
        %v3582 = vpop.f32.mrb[0].mxu0
        %v3583 = vadd.f32 0.0, %v3582
        %v3584 = vpop.f32.mrb[0].mxu0
        %v3585 = vpop.f32.mrb[0].mxu0
        %v3586 = vadd.f32 0.0, %v3585
        %v3587 = vpop.f32.mrb[0].mxu0
        %3588 = vdwg.mxu0
        %s3589 = scalar_lea.vmem [#allocation5], 32
        %v3590 = vld [vmem:[%s3589] sm:$0xff]
        %v3591 = vld [vmem:[%s3589 + $0x8] sm:$0xff]
        %v3592 = vadd.f32 %v3226, %v3590
        %v3593 = vadd.f32 %v3229, %v3591
        %v3594 = vadd.f32 %v3277, %v3590
        %v3595 = vadd.f32 %v3280, %v3591
        %v3596 = vadd.f32 %v3328, %v3590
        %v3597 = vadd.f32 %v3331, %v3591
        %v3598 = vadd.f32 %v3379, %v3590
        %v3599 = vadd.f32 %v3382, %v3591
        %v3600 = vadd.f32 %v3430, %v3590
        %v3601 = vadd.f32 %v3433, %v3591
        %v3602 = vadd.f32 %v3481, %v3590
        %v3603 = vadd.f32 %v3484, %v3591
        %v3604 = vadd.f32 %v3532, %v3590
        %v3605 = vadd.f32 %v3535, %v3591
        %v3606 = vadd.f32 %v3583, %v3590
        %v3607 = vadd.f32 %v3586, %v3591
        %v3608 = vsel %vm1361, %v3592, -inf
        %3609 = vmax.xlane.f32.xlu0 %v3608
        %v3610 = vpop.xlane.xlu0 %3609
        %v3611 = vsel %vm1361, %v3593, -inf
        %3612 = vmax.xlane.f32.xlu0 %v3611
        %v3613 = vpop.xlane.xlu0 %3612
        %v3614 = vsel %vm1361, %v3594, -inf
        %3615 = vmax.xlane.f32.xlu0 %v3614
        %v3616 = vpop.xlane.xlu0 %3615
        %v3617 = vsel %vm1361, %v3595, -inf
        %3618 = vmax.xlane.f32.xlu0 %v3617
        %v3619 = vpop.xlane.xlu0 %3618
        %v3620 = vsel %vm1361, %v3596, -inf
        %3621 = vmax.xlane.f32.xlu0 %v3620
        %v3622 = vpop.xlane.xlu0 %3621
        %v3623 = vsel %vm1361, %v3597, -inf
        %3624 = vmax.xlane.f32.xlu0 %v3623
        %v3625 = vpop.xlane.xlu0 %3624
        %v3626 = vsel %vm1361, %v3598, -inf
        %3627 = vmax.xlane.f32.xlu0 %v3626
        %v3628 = vpop.xlane.xlu0 %3627
        %v3629 = vsel %vm1361, %v3599, -inf
        %3630 = vmax.xlane.f32.xlu0 %v3629
        %v3631 = vpop.xlane.xlu0 %3630
        %v3632 = vsel %vm1361, %v3600, -inf
        %3633 = vmax.xlane.f32.xlu0 %v3632
        %v3634 = vpop.xlane.xlu0 %3633
        %v3635 = vsel %vm1361, %v3601, -inf
        %3636 = vmax.xlane.f32.xlu0 %v3635
        %v3637 = vpop.xlane.xlu0 %3636
        %v3638 = vsel %vm1361, %v3602, -inf
        %3639 = vmax.xlane.f32.xlu0 %v3638
        %v3640 = vpop.xlane.xlu0 %3639
        %v3641 = vsel %vm1361, %v3603, -inf
        %3642 = vmax.xlane.f32.xlu0 %v3641
        %v3643 = vpop.xlane.xlu0 %3642
        %v3644 = vsel %vm1361, %v3604, -inf
        %3645 = vmax.xlane.f32.xlu0 %v3644
        %v3646 = vpop.xlane.xlu0 %3645
        %v3647 = vsel %vm1361, %v3605, -inf
        %3648 = vmax.xlane.f32.xlu0 %v3647
        %v3649 = vpop.xlane.xlu0 %3648
        %v3650 = vsel %vm1361, %v3606, -inf
        %3651 = vmax.xlane.f32.xlu0 %v3650
        %v3652 = vpop.xlane.xlu0 %3651
        %v3653 = vsel %vm1361, %v3607, -inf
        %3654 = vmax.xlane.f32.xlu0 %v3653
        %v3655 = vpop.xlane.xlu0 %3654
        %v3656 = vsub.f32 %v3592, %v3610
        %v3657 = vsub.f32 %v3593, %v3613
        %v3658 = vsub.f32 %v3594, %v3616
        %v3659 = vsub.f32 %v3595, %v3619
        %v3660 = vsub.f32 %v3596, %v3622
        %v3661 = vsub.f32 %v3597, %v3625
        %v3662 = vsub.f32 %v3598, %v3628
        %v3663 = vsub.f32 %v3599, %v3631
        %v3664 = vsub.f32 %v3600, %v3634
        %v3665 = vsub.f32 %v3601, %v3637
        %v3666 = vsub.f32 %v3602, %v3640
        %v3667 = vsub.f32 %v3603, %v3643
        %v3668 = vsub.f32 %v3604, %v3646
        %v3669 = vsub.f32 %v3605, %v3649
        %v3670 = vsub.f32 %v3606, %v3652
        %v3671 = vsub.f32 %v3607, %v3655
        %v3672 = vmul.f32 %v3656, 1.442695
        %v3673 = vpow.pop %v3672
        %v3674 = vmul.f32 %v3657, 1.442695
        %v3675 = vpow.pop %v3674
        %v3676 = vmul.f32 %v3658, 1.442695
        %v3677 = vpow.pop %v3676
        %v3678 = vmul.f32 %v3659, 1.442695
        %v3679 = vpow.pop %v3678
        %v3680 = vmul.f32 %v3660, 1.442695
        %v3681 = vpow.pop %v3680
        %v3682 = vmul.f32 %v3661, 1.442695
        %v3683 = vpow.pop %v3682
        %v3684 = vmul.f32 %v3662, 1.442695
        %v3685 = vpow.pop %v3684
        %v3686 = vmul.f32 %v3663, 1.442695
        %v3687 = vpow.pop %v3686
        %v3688 = vmul.f32 %v3664, 1.442695
        %v3689 = vpow.pop %v3688
        %v3690 = vmul.f32 %v3665, 1.442695
        %v3691 = vpow.pop %v3690
        %v3692 = vmul.f32 %v3666, 1.442695
        %v3693 = vpow.pop %v3692
        %v3694 = vmul.f32 %v3667, 1.442695
        %v3695 = vpow.pop %v3694
        %v3696 = vmul.f32 %v3668, 1.442695
        %v3697 = vpow.pop %v3696
        %v3698 = vmul.f32 %v3669, 1.442695
        %v3699 = vpow.pop %v3698
        %v3700 = vmul.f32 %v3670, 1.442695
        %v3701 = vpow.pop %v3700
        %v3702 = vmul.f32 %v3671, 1.442695
        %v3703 = vpow.pop %v3702
        %v3704 = vsel %vm1361, %v3673, 0.0
        %3705 = vadd.xlane.f32.xlu0 %v3704
        %v3706 = vpop.xlane.xlu0 %3705
        %v3707 = vsel %vm1361, %v3675, 0.0
        %3708 = vadd.xlane.f32.xlu0 %v3707
        %v3709 = vpop.xlane.xlu0 %3708
        %v3710 = vsel %vm1361, %v3677, 0.0
        %3711 = vadd.xlane.f32.xlu0 %v3710
        %v3712 = vpop.xlane.xlu0 %3711
        %v3713 = vsel %vm1361, %v3679, 0.0
        %3714 = vadd.xlane.f32.xlu0 %v3713
        %v3715 = vpop.xlane.xlu0 %3714
        %v3716 = vsel %vm1361, %v3681, 0.0
        %3717 = vadd.xlane.f32.xlu0 %v3716
        %v3718 = vpop.xlane.xlu0 %3717
        %v3719 = vsel %vm1361, %v3683, 0.0
        %3720 = vadd.xlane.f32.xlu0 %v3719
        %v3721 = vpop.xlane.xlu0 %3720
        %v3722 = vsel %vm1361, %v3685, 0.0
        %3723 = vadd.xlane.f32.xlu0 %v3722
        %v3724 = vpop.xlane.xlu0 %3723
        %v3725 = vsel %vm1361, %v3687, 0.0
        %3726 = vadd.xlane.f32.xlu0 %v3725
        %v3727 = vpop.xlane.xlu0 %3726
        %v3728 = vsel %vm1361, %v3689, 0.0
        %3729 = vadd.xlane.f32.xlu0 %v3728
        %v3730 = vpop.xlane.xlu0 %3729
        %v3731 = vsel %vm1361, %v3691, 0.0
        %3732 = vadd.xlane.f32.xlu0 %v3731
        %v3733 = vpop.xlane.xlu0 %3732
        %v3734 = vsel %vm1361, %v3693, 0.0
        %3735 = vadd.xlane.f32.xlu0 %v3734
        %v3736 = vpop.xlane.xlu0 %3735
        %v3737 = vsel %vm1361, %v3695, 0.0
        %3738 = vadd.xlane.f32.xlu0 %v3737
        %v3739 = vpop.xlane.xlu0 %3738
        %v3740 = vsel %vm1361, %v3697, 0.0
        %3741 = vadd.xlane.f32.xlu0 %v3740
        %v3742 = vpop.xlane.xlu0 %3741
        %v3743 = vsel %vm1361, %v3699, 0.0
        %3744 = vadd.xlane.f32.xlu0 %v3743
        %v3745 = vpop.xlane.xlu0 %3744
        %v3746 = vsel %vm1361, %v3701, 0.0
        %3747 = vadd.xlane.f32.xlu0 %v3746
        %v3748 = vpop.xlane.xlu0 %3747
        %v3749 = vsel %vm1361, %v3703, 0.0
        %3750 = vadd.xlane.f32.xlu0 %v3749
        %v3751 = vpop.xlane.xlu0 %3750
        %v3752 = vrcp.pop %v3706
        %v3753 = vrcp.pop %v3709
        %v3754 = vrcp.pop %v3712
        %v3755 = vrcp.pop %v3715
        %v3756 = vrcp.pop %v3718
        %v3757 = vrcp.pop %v3721
        %v3758 = vrcp.pop %v3724
        %v3759 = vrcp.pop %v3727
        %v3760 = vrcp.pop %v3730
        %v3761 = vrcp.pop %v3733
        %v3762 = vrcp.pop %v3736
        %v3763 = vrcp.pop %v3739
        %v3764 = vrcp.pop %v3742
        %v3765 = vrcp.pop %v3745
        %v3766 = vrcp.pop %v3748
        %v3767 = vrcp.pop %v3751
        %v3768 = vmul.f32 %v3673, %v3752
        %v3769 = vmul.f32 %v3675, %v3753
        %v3770 = vmul.f32 %v3677, %v3754
        %v3771 = vmul.f32 %v3679, %v3755
        %v3772 = vmul.f32 %v3681, %v3756
        %v3773 = vmul.f32 %v3683, %v3757
        %v3774 = vmul.f32 %v3685, %v3758
        %v3775 = vmul.f32 %v3687, %v3759
        %v3776 = vmul.f32 %v3689, %v3760
        %v3777 = vmul.f32 %v3691, %v3761
        %v3778 = vmul.f32 %v3693, %v3762
        %v3779 = vmul.f32 %v3695, %v3763
        %v3780 = vmul.f32 %v3697, %v3764
        %v3781 = vmul.f32 %v3699, %v3765
        %v3782 = vmul.f32 %v3701, %v3766
        %v3783 = vmul.f32 %v3703, %v3767
        %v3784 = vpack.c.bf16 %v3769, %v3768
        %v3785 = vpack.c.bf16 %v3771, %v3770
        %v3786 = vpack.c.bf16 %v3773, %v3772
        %v3787 = vpack.c.bf16 %v3775, %v3774
        %v3788 = vpack.c.bf16 %v3777, %v3776
        %v3789 = vpack.c.bf16 %v3779, %v3778
        %v3790 = vpack.c.bf16 %v3781, %v3780
        %v3791 = vpack.c.bf16 %v3783, %v3782
        %3792 = vrot.lane.b32.xlu0 %v931, 48
        %v3793 = vpop.permute.xlu0 %3792
        %v3796 = vsel %vm1361, %v3784, 0
        %3798 = vmatprep.subr.bf16.mxu0 0
        %3799 = vmatpush1.bf16.msra.mxu0 %v3793
        %3800 = vmatprep.subr.bf16.mxu0 0
        %3801 = vmatpush1.bf16.msra.mxu0 0
        %3802 = vmatprep.subr.bf16.mxu0 0
        %3803 = vmatpush1.bf16.msra.mxu0 0
        %3804 = vmatprep.subr.bf16.mxu0 0
        %3805 = vmatpush1.bf16.msra.mxu0 0
        %3806 = vmatprep.subr.bf16.mxu0 0
        %3807 = vmatpush1.bf16.msra.mxu0 0
        %3808 = vmatprep.subr.bf16.mxu0 0
        %3809 = vmatpush1.bf16.msra.mxu0 0
        %3810 = vmatprep.subr.bf16.mxu0 0
        %3811 = vmatpush1.bf16.msra.mxu0 0
        %3812 = vmatprep.subr.bf16.mxu0 0
        %3813 = vmatpush1.bf16.msra.mxu0 0
        %3814 = vmatprep.subr.bf16.mxu0 0
        %3815 = vmatpush1.bf16.msra.mxu0 0
        %3816 = vmatprep.subr.bf16.mxu0 0
        %3817 = vmatpush1.bf16.msra.mxu0 0
        %3818 = vmatprep.subr.bf16.mxu0 0
        %3819 = vmatpush1.bf16.msra.mxu0 0
        %3820 = vmatprep.subr.bf16.mxu0 0
        %3821 = vmatpush1.bf16.msra.mxu0 0
        %3822 = vmatprep.subr.bf16.mxu0 0
        %3823 = vmatpush1.bf16.msra.mxu0 0
        %3824 = vmatprep.subr.bf16.mxu0 0
        %3825 = vmatpush1.bf16.msra.mxu0 0
        %3826 = vmatprep.subr.bf16.mxu0 0
        %3827 = vmatpush1.bf16.msra.mxu0 0
        %3828 = vmatprep.subr.bf16.mxu0 0
        %3829 = vmatpush1.bf16.msra.mxu0 0
        %3830 = vmatprep.mubr.bf16.mxu0 0
        %3831 = vmatmul.mubr.bf16.gmra.mrb[0].mxu0 %v3796
        %v3832 = vpop.f32.mrb[0].mxu0
        %v3833 = vadd.f32 0.0, %v3832
        %v3834 = vpop.f32.mrb[0].mxu0
        %v3835 = vpop.f32.mrb[0].mxu0
        %v3836 = vadd.f32 0.0, %v3835
        %v3837 = vpop.f32.mrb[0].mxu0
        %3838 = vdwg.mxu0
        %3839 = vrot.lane.b32.xlu0 %v932, 48
        %v3840 = vpop.permute.xlu0 %3839
        %v3843 = vsel %vm1361, %v3785, 0
        %3845 = vmatprep.subr.bf16.mxu0 0
        %3846 = vmatpush1.bf16.msra.mxu0 %v3840
        %3847 = vmatprep.subr.bf16.mxu0 0
        %3848 = vmatpush1.bf16.msra.mxu0 0
        %3849 = vmatprep.subr.bf16.mxu0 0
        %3850 = vmatpush1.bf16.msra.mxu0 0
        %3851 = vmatprep.subr.bf16.mxu0 0
        %3852 = vmatpush1.bf16.msra.mxu0 0
        %3853 = vmatprep.subr.bf16.mxu0 0
        %3854 = vmatpush1.bf16.msra.mxu0 0
        %3855 = vmatprep.subr.bf16.mxu0 0
        %3856 = vmatpush1.bf16.msra.mxu0 0
        %3857 = vmatprep.subr.bf16.mxu0 0
        %3858 = vmatpush1.bf16.msra.mxu0 0
        %3859 = vmatprep.subr.bf16.mxu0 0
        %3860 = vmatpush1.bf16.msra.mxu0 0
        %3861 = vmatprep.subr.bf16.mxu0 0
        %3862 = vmatpush1.bf16.msra.mxu0 0
        %3863 = vmatprep.subr.bf16.mxu0 0
        %3864 = vmatpush1.bf16.msra.mxu0 0
        %3865 = vmatprep.subr.bf16.mxu0 0
        %3866 = vmatpush1.bf16.msra.mxu0 0
        %3867 = vmatprep.subr.bf16.mxu0 0
        %3868 = vmatpush1.bf16.msra.mxu0 0
        %3869 = vmatprep.subr.bf16.mxu0 0
        %3870 = vmatpush1.bf16.msra.mxu0 0
        %3871 = vmatprep.subr.bf16.mxu0 0
        %3872 = vmatpush1.bf16.msra.mxu0 0
        %3873 = vmatprep.subr.bf16.mxu0 0
        %3874 = vmatpush1.bf16.msra.mxu0 0
        %3875 = vmatprep.subr.bf16.mxu0 0
        %3876 = vmatpush1.bf16.msra.mxu0 0
        %3877 = vmatprep.mubr.bf16.mxu0 0
        %3878 = vmatmul.mubr.bf16.gmra.mrb[0].mxu0 %v3843
        %v3879 = vpop.f32.mrb[0].mxu0
        %v3880 = vadd.f32 0.0, %v3879
        %v3881 = vpop.f32.mrb[0].mxu0
        %v3882 = vpop.f32.mrb[0].mxu0
        %v3883 = vadd.f32 0.0, %v3882
        %v3884 = vpop.f32.mrb[0].mxu0
        %3885 = vdwg.mxu0
        %3886 = vrot.lane.b32.xlu0 %v933, 48
        %v3887 = vpop.permute.xlu0 %3886
        %v3890 = vsel %vm1361, %v3786, 0
        %3892 = vmatprep.subr.bf16.mxu0 0
        %3893 = vmatpush1.bf16.msra.mxu0 %v3887
        %3894 = vmatprep.subr.bf16.mxu0 0
        %3895 = vmatpush1.bf16.msra.mxu0 0
        %3896 = vmatprep.subr.bf16.mxu0 0
        %3897 = vmatpush1.bf16.msra.mxu0 0
        %3898 = vmatprep.subr.bf16.mxu0 0
        %3899 = vmatpush1.bf16.msra.mxu0 0
        %3900 = vmatprep.subr.bf16.mxu0 0
        %3901 = vmatpush1.bf16.msra.mxu0 0
        %3902 = vmatprep.subr.bf16.mxu0 0
        %3903 = vmatpush1.bf16.msra.mxu0 0
        %3904 = vmatprep.subr.bf16.mxu0 0
        %3905 = vmatpush1.bf16.msra.mxu0 0
        %3906 = vmatprep.subr.bf16.mxu0 0
        %3907 = vmatpush1.bf16.msra.mxu0 0
        %3908 = vmatprep.subr.bf16.mxu0 0
        %3909 = vmatpush1.bf16.msra.mxu0 0
        %3910 = vmatprep.subr.bf16.mxu0 0
        %3911 = vmatpush1.bf16.msra.mxu0 0
        %3912 = vmatprep.subr.bf16.mxu0 0
        %3913 = vmatpush1.bf16.msra.mxu0 0
        %3914 = vmatprep.subr.bf16.mxu0 0
        %3915 = vmatpush1.bf16.msra.mxu0 0
        %3916 = vmatprep.subr.bf16.mxu0 0
        %3917 = vmatpush1.bf16.msra.mxu0 0
        %3918 = vmatprep.subr.bf16.mxu0 0
        %3919 = vmatpush1.bf16.msra.mxu0 0
        %3920 = vmatprep.subr.bf16.mxu0 0
        %3921 = vmatpush1.bf16.msra.mxu0 0
        %3922 = vmatprep.subr.bf16.mxu0 0
        %3923 = vmatpush1.bf16.msra.mxu0 0
        %3924 = vmatprep.mubr.bf16.mxu0 0
        %3925 = vmatmul.mubr.bf16.gmra.mrb[0].mxu0 %v3890
        %v3926 = vpop.f32.mrb[0].mxu0
        %v3927 = vadd.f32 0.0, %v3926
        %v3928 = vpop.f32.mrb[0].mxu0
        %v3929 = vpop.f32.mrb[0].mxu0
        %v3930 = vadd.f32 0.0, %v3929
        %v3931 = vpop.f32.mrb[0].mxu0
        %3932 = vdwg.mxu0
        %3933 = vrot.lane.b32.xlu0 %v934, 48
        %v3934 = vpop.permute.xlu0 %3933
        %v3937 = vsel %vm1361, %v3787, 0
        %3939 = vmatprep.subr.bf16.mxu0 0
        %3940 = vmatpush1.bf16.msra.mxu0 %v3934
        %3941 = vmatprep.subr.bf16.mxu0 0
        %3942 = vmatpush1.bf16.msra.mxu0 0
        %3943 = vmatprep.subr.bf16.mxu0 0
        %3944 = vmatpush1.bf16.msra.mxu0 0
        %3945 = vmatprep.subr.bf16.mxu0 0
        %3946 = vmatpush1.bf16.msra.mxu0 0
        %3947 = vmatprep.subr.bf16.mxu0 0
        %3948 = vmatpush1.bf16.msra.mxu0 0
        %3949 = vmatprep.subr.bf16.mxu0 0
        %3950 = vmatpush1.bf16.msra.mxu0 0
        %3951 = vmatprep.subr.bf16.mxu0 0
        %3952 = vmatpush1.bf16.msra.mxu0 0
        %3953 = vmatprep.subr.bf16.mxu0 0
        %3954 = vmatpush1.bf16.msra.mxu0 0
        %3955 = vmatprep.subr.bf16.mxu0 0
        %3956 = vmatpush1.bf16.msra.mxu0 0
        %3957 = vmatprep.subr.bf16.mxu0 0
        %3958 = vmatpush1.bf16.msra.mxu0 0
        %3959 = vmatprep.subr.bf16.mxu0 0
        %3960 = vmatpush1.bf16.msra.mxu0 0
        %3961 = vmatprep.subr.bf16.mxu0 0
        %3962 = vmatpush1.bf16.msra.mxu0 0
        %3963 = vmatprep.subr.bf16.mxu0 0
        %3964 = vmatpush1.bf16.msra.mxu0 0
        %3965 = vmatprep.subr.bf16.mxu0 0
        %3966 = vmatpush1.bf16.msra.mxu0 0
        %3967 = vmatprep.subr.bf16.mxu0 0
        %3968 = vmatpush1.bf16.msra.mxu0 0
        %3969 = vmatprep.subr.bf16.mxu0 0
        %3970 = vmatpush1.bf16.msra.mxu0 0
        %3971 = vmatprep.mubr.bf16.mxu0 0
        %3972 = vmatmul.mubr.bf16.gmra.mrb[0].mxu0 %v3937
        %v3973 = vpop.f32.mrb[0].mxu0
        %v3974 = vadd.f32 0.0, %v3973
        %v3975 = vpop.f32.mrb[0].mxu0
        %v3976 = vpop.f32.mrb[0].mxu0
        %v3977 = vadd.f32 0.0, %v3976
        %v3978 = vpop.f32.mrb[0].mxu0
        %3979 = vdwg.mxu0
        %3980 = vrot.lane.b32.xlu0 %v935, 48
        %v3981 = vpop.permute.xlu0 %3980
        %v3984 = vsel %vm1361, %v3788, 0
        %3986 = vmatprep.subr.bf16.mxu0 0
        %3987 = vmatpush1.bf16.msra.mxu0 %v3981
        %3988 = vmatprep.subr.bf16.mxu0 0
        %3989 = vmatpush1.bf16.msra.mxu0 0
        %3990 = vmatprep.subr.bf16.mxu0 0
        %3991 = vmatpush1.bf16.msra.mxu0 0
        %3992 = vmatprep.subr.bf16.mxu0 0
        %3993 = vmatpush1.bf16.msra.mxu0 0
        %3994 = vmatprep.subr.bf16.mxu0 0
        %3995 = vmatpush1.bf16.msra.mxu0 0
        %3996 = vmatprep.subr.bf16.mxu0 0
        %3997 = vmatpush1.bf16.msra.mxu0 0
        %3998 = vmatprep.subr.bf16.mxu0 0
        %3999 = vmatpush1.bf16.msra.mxu0 0
        %4000 = vmatprep.subr.bf16.mxu0 0
        %4001 = vmatpush1.bf16.msra.mxu0 0
        %4002 = vmatprep.subr.bf16.mxu0 0
        %4003 = vmatpush1.bf16.msra.mxu0 0
        %4004 = vmatprep.subr.bf16.mxu0 0
        %4005 = vmatpush1.bf16.msra.mxu0 0
        %4006 = vmatprep.subr.bf16.mxu0 0
        %4007 = vmatpush1.bf16.msra.mxu0 0
        %4008 = vmatprep.subr.bf16.mxu0 0
        %4009 = vmatpush1.bf16.msra.mxu0 0
        %4010 = vmatprep.subr.bf16.mxu0 0
        %4011 = vmatpush1.bf16.msra.mxu0 0
        %4012 = vmatprep.subr.bf16.mxu0 0
        %4013 = vmatpush1.bf16.msra.mxu0 0
        %4014 = vmatprep.subr.bf16.mxu0 0
        %4015 = vmatpush1.bf16.msra.mxu0 0
        %4016 = vmatprep.subr.bf16.mxu0 0
        %4017 = vmatpush1.bf16.msra.mxu0 0
        %4018 = vmatprep.mubr.bf16.mxu0 0
        %4019 = vmatmul.mubr.bf16.gmra.mrb[0].mxu0 %v3984
        %v4020 = vpop.f32.mrb[0].mxu0
        %v4021 = vadd.f32 0.0, %v4020
        %v4022 = vpop.f32.mrb[0].mxu0
        %v4023 = vpop.f32.mrb[0].mxu0
        %v4024 = vadd.f32 0.0, %v4023
        %v4025 = vpop.f32.mrb[0].mxu0
        %4026 = vdwg.mxu0
        %4027 = vrot.lane.b32.xlu0 %v936, 48
        %v4028 = vpop.permute.xlu0 %4027
        %v4031 = vsel %vm1361, %v3789, 0
        %4033 = vmatprep.subr.bf16.mxu0 0
        %4034 = vmatpush1.bf16.msra.mxu0 %v4028
        %4035 = vmatprep.subr.bf16.mxu0 0
        %4036 = vmatpush1.bf16.msra.mxu0 0
        %4037 = vmatprep.subr.bf16.mxu0 0
        %4038 = vmatpush1.bf16.msra.mxu0 0
        %4039 = vmatprep.subr.bf16.mxu0 0
        %4040 = vmatpush1.bf16.msra.mxu0 0
        %4041 = vmatprep.subr.bf16.mxu0 0
        %4042 = vmatpush1.bf16.msra.mxu0 0
        %4043 = vmatprep.subr.bf16.mxu0 0
        %4044 = vmatpush1.bf16.msra.mxu0 0
        %4045 = vmatprep.subr.bf16.mxu0 0
        %4046 = vmatpush1.bf16.msra.mxu0 0
        %4047 = vmatprep.subr.bf16.mxu0 0
        %4048 = vmatpush1.bf16.msra.mxu0 0
        %4049 = vmatprep.subr.bf16.mxu0 0
        %4050 = vmatpush1.bf16.msra.mxu0 0
        %4051 = vmatprep.subr.bf16.mxu0 0
        %4052 = vmatpush1.bf16.msra.mxu0 0
        %4053 = vmatprep.subr.bf16.mxu0 0
        %4054 = vmatpush1.bf16.msra.mxu0 0
        %4055 = vmatprep.subr.bf16.mxu0 0
        %4056 = vmatpush1.bf16.msra.mxu0 0
        %4057 = vmatprep.subr.bf16.mxu0 0
        %4058 = vmatpush1.bf16.msra.mxu0 0
        %4059 = vmatprep.subr.bf16.mxu0 0
        %4060 = vmatpush1.bf16.msra.mxu0 0
        %4061 = vmatprep.subr.bf16.mxu0 0
        %4062 = vmatpush1.bf16.msra.mxu0 0
        %4063 = vmatprep.subr.bf16.mxu0 0
        %4064 = vmatpush1.bf16.msra.mxu0 0
        %4065 = vmatprep.mubr.bf16.mxu0 0
        %4066 = vmatmul.mubr.bf16.gmra.mrb[0].mxu0 %v4031
        %v4067 = vpop.f32.mrb[0].mxu0
        %v4068 = vadd.f32 0.0, %v4067
        %v4069 = vpop.f32.mrb[0].mxu0
        %v4070 = vpop.f32.mrb[0].mxu0
        %v4071 = vadd.f32 0.0, %v4070
        %v4072 = vpop.f32.mrb[0].mxu0
        %4073 = vdwg.mxu0
        %4074 = vrot.lane.b32.xlu0 %v937, 48
        %v4075 = vpop.permute.xlu0 %4074
        %v4078 = vsel %vm1361, %v3790, 0
        %4080 = vmatprep.subr.bf16.mxu0 0
        %4081 = vmatpush1.bf16.msra.mxu0 %v4075
        %4082 = vmatprep.subr.bf16.mxu0 0
        %4083 = vmatpush1.bf16.msra.mxu0 0
        %4084 = vmatprep.subr.bf16.mxu0 0
        %4085 = vmatpush1.bf16.msra.mxu0 0
        %4086 = vmatprep.subr.bf16.mxu0 0
        %4087 = vmatpush1.bf16.msra.mxu0 0
        %4088 = vmatprep.subr.bf16.mxu0 0
        %4089 = vmatpush1.bf16.msra.mxu0 0
        %4090 = vmatprep.subr.bf16.mxu0 0
        %4091 = vmatpush1.bf16.msra.mxu0 0
        %4092 = vmatprep.subr.bf16.mxu0 0
        %4093 = vmatpush1.bf16.msra.mxu0 0
        %4094 = vmatprep.subr.bf16.mxu0 0
        %4095 = vmatpush1.bf16.msra.mxu0 0
        %4096 = vmatprep.subr.bf16.mxu0 0
        %4097 = vmatpush1.bf16.msra.mxu0 0
        %4098 = vmatprep.subr.bf16.mxu0 0
        %4099 = vmatpush1.bf16.msra.mxu0 0
        %4100 = vmatprep.subr.bf16.mxu0 0
        %4101 = vmatpush1.bf16.msra.mxu0 0
        %4102 = vmatprep.subr.bf16.mxu0 0
        %4103 = vmatpush1.bf16.msra.mxu0 0
        %4104 = vmatprep.subr.bf16.mxu0 0
        %4105 = vmatpush1.bf16.msra.mxu0 0
        %4106 = vmatprep.subr.bf16.mxu0 0
        %4107 = vmatpush1.bf16.msra.mxu0 0
        %4108 = vmatprep.subr.bf16.mxu0 0
        %4109 = vmatpush1.bf16.msra.mxu0 0
        %4110 = vmatprep.subr.bf16.mxu0 0
        %4111 = vmatpush1.bf16.msra.mxu0 0
        %4112 = vmatprep.mubr.bf16.mxu0 0
        %4113 = vmatmul.mubr.bf16.gmra.mrb[0].mxu0 %v4078
        %v4114 = vpop.f32.mrb[0].mxu0
        %v4115 = vadd.f32 0.0, %v4114
        %v4116 = vpop.f32.mrb[0].mxu0
        %v4117 = vpop.f32.mrb[0].mxu0
        %v4118 = vadd.f32 0.0, %v4117
        %v4119 = vpop.f32.mrb[0].mxu0
        %4120 = vdwg.mxu0
        %4121 = vrot.lane.b32.xlu0 %v938, 48
        %v4122 = vpop.permute.xlu0 %4121
        %v4125 = vsel %vm1361, %v3791, 0
        %4127 = vmatprep.subr.bf16.mxu0 0
        %4128 = vmatpush1.bf16.msra.mxu0 %v4122
        %4129 = vmatprep.subr.bf16.mxu0 0
        %4130 = vmatpush1.bf16.msra.mxu0 0
        %4131 = vmatprep.subr.bf16.mxu0 0
        %4132 = vmatpush1.bf16.msra.mxu0 0
        %4133 = vmatprep.subr.bf16.mxu0 0
        %4134 = vmatpush1.bf16.msra.mxu0 0
        %4135 = vmatprep.subr.bf16.mxu0 0
        %4136 = vmatpush1.bf16.msra.mxu0 0
        %4137 = vmatprep.subr.bf16.mxu0 0
        %4138 = vmatpush1.bf16.msra.mxu0 0
        %4139 = vmatprep.subr.bf16.mxu0 0
        %4140 = vmatpush1.bf16.msra.mxu0 0
        %4141 = vmatprep.subr.bf16.mxu0 0
        %4142 = vmatpush1.bf16.msra.mxu0 0
        %4143 = vmatprep.subr.bf16.mxu0 0
        %4144 = vmatpush1.bf16.msra.mxu0 0
        %4145 = vmatprep.subr.bf16.mxu0 0
        %4146 = vmatpush1.bf16.msra.mxu0 0
        %4147 = vmatprep.subr.bf16.mxu0 0
        %4148 = vmatpush1.bf16.msra.mxu0 0
        %4149 = vmatprep.subr.bf16.mxu0 0
        %4150 = vmatpush1.bf16.msra.mxu0 0
        %4151 = vmatprep.subr.bf16.mxu0 0
        %4152 = vmatpush1.bf16.msra.mxu0 0
        %4153 = vmatprep.subr.bf16.mxu0 0
        %4154 = vmatpush1.bf16.msra.mxu0 0
        %4155 = vmatprep.subr.bf16.mxu0 0
        %4156 = vmatpush1.bf16.msra.mxu0 0
        %4157 = vmatprep.subr.bf16.mxu0 0
        %4158 = vmatpush1.bf16.msra.mxu0 0
        %4159 = vmatprep.mubr.bf16.mxu0 0
        %4160 = vmatmul.mubr.bf16.gmra.mrb[0].mxu0 %v4125
        %v4161 = vpop.f32.mrb[0].mxu0
        %v4162 = vadd.f32 0.0, %v4161
        %v4163 = vpop.f32.mrb[0].mxu0
        %v4164 = vpop.f32.mrb[0].mxu0
        %v4165 = vadd.f32 0.0, %v4164
        %v4166 = vpop.f32.mrb[0].mxu0
        %4167 = vdwg.mxu0
        %v4168 = vpack.c.bf16 %v3836, %v3833
        %v4169 = vpack.c.bf16 %v3883, %v3880
        %v4170 = vpack.c.bf16 %v3930, %v3927
        %v4171 = vpack.c.bf16 %v3977, %v3974
        %v4172 = vpack.c.bf16 %v4024, %v4021
        %v4173 = vpack.c.bf16 %v4071, %v4068
        %v4174 = vpack.c.bf16 %v4118, %v4115
        %v4175 = vpack.c.bf16 %v4165, %v4162
        %v4177 = vsel %vm758, %v4168, 0
        %v4180 = vsel %vm758, %v4169, 0
        %v4183 = vsel %vm758, %v4170, 0
        %v4186 = vsel %vm758, %v4171, 0
        %v4189 = vsel %vm758, %v4172, 0
        %v4192 = vsel %vm758, %v4173, 0
        %v4195 = vsel %vm758, %v4174, 0
        %v4198 = vsel %vm758, %v4175, 0
        %v4201 = vsel %vm783, %v941, 0
        %4203 = vmatprep.subr.bf16.mxu0 0
        %4204 = vmatpush1.bf16.msra.mxu0 %v4201
        %4205 = vmatprep.subr.bf16.mxu0 0
        %4206 = vmatpush1.bf16.msra.mxu0 0
        %4207 = vmatprep.subr.bf16.mxu0 0
        %4208 = vmatpush1.bf16.msra.mxu0 0
        %4209 = vmatprep.subr.bf16.mxu0 0
        %4210 = vmatpush1.bf16.msra.mxu0 0
        %4211 = vmatprep.subr.bf16.mxu0 0
        %4212 = vmatpush1.bf16.msra.mxu0 0
        %4213 = vmatprep.subr.bf16.mxu0 0
        %4214 = vmatpush1.bf16.msra.mxu0 0
        %4215 = vmatprep.subr.bf16.mxu0 0
        %4216 = vmatpush1.bf16.msra.mxu0 0
        %4217 = vmatprep.subr.bf16.mxu0 0
        %4218 = vmatpush1.bf16.msra.mxu0 0
        %4219 = vmatprep.subr.bf16.mxu0 0
        %4220 = vmatpush1.bf16.msra.mxu0 0
        %4221 = vmatprep.subr.bf16.mxu0 0
        %4222 = vmatpush1.bf16.msra.mxu0 0
        %4223 = vmatprep.subr.bf16.mxu0 0
        %4224 = vmatpush1.bf16.msra.mxu0 0
        %4225 = vmatprep.subr.bf16.mxu0 0
        %4226 = vmatpush1.bf16.msra.mxu0 0
        %4227 = vmatprep.subr.bf16.mxu0 0
        %4228 = vmatpush1.bf16.msra.mxu0 0
        %4229 = vmatprep.subr.bf16.mxu0 0
        %4230 = vmatpush1.bf16.msra.mxu0 0
        %4231 = vmatprep.subr.bf16.mxu0 0
        %4232 = vmatpush1.bf16.msra.mxu0 0
        %4233 = vmatprep.subr.bf16.mxu0 0
        %4234 = vmatpush1.bf16.msra.mxu0 0
        %4235 = vmatprep.mubr.bf16.mxu0 0
        %4236 = vmatmul.mubr.bf16.gmra.mrb[0].mxu0 %v4177
        %v4237 = vpop.f32.mrb[0].mxu0
        %v4238 = vadd.f32 0.0, %v4237
        %v4239 = vpop.f32.mrb[0].mxu0
        %v4240 = vpop.f32.mrb[0].mxu0
        %v4241 = vadd.f32 0.0, %v4240
        %v4242 = vpop.f32.mrb[0].mxu0
        %4243 = vmatprep.mubr.bf16.mxu0 0
        %4244 = vmatmul.mubr.bf16.gmra.mrb[0].mxu0 %v4180
        %v4245 = vpop.f32.mrb[0].mxu0
        %v4246 = vadd.f32 0.0, %v4245
        %v4247 = vpop.f32.mrb[0].mxu0
        %v4248 = vpop.f32.mrb[0].mxu0
        %v4249 = vadd.f32 0.0, %v4248
        %v4250 = vpop.f32.mrb[0].mxu0
        %4251 = vmatprep.mubr.bf16.mxu0 0
        %4252 = vmatmul.mubr.bf16.gmra.mrb[0].mxu0 %v4183
        %v4253 = vpop.f32.mrb[0].mxu0
        %v4254 = vadd.f32 0.0, %v4253
        %v4255 = vpop.f32.mrb[0].mxu0
        %v4256 = vpop.f32.mrb[0].mxu0
        %v4257 = vadd.f32 0.0, %v4256
        %v4258 = vpop.f32.mrb[0].mxu0
        %4259 = vmatprep.mubr.bf16.mxu0 0
        %4260 = vmatmul.mubr.bf16.gmra.mrb[0].mxu0 %v4186
        %v4261 = vpop.f32.mrb[0].mxu0
        %v4262 = vadd.f32 0.0, %v4261
        %v4263 = vpop.f32.mrb[0].mxu0
        %v4264 = vpop.f32.mrb[0].mxu0
        %v4265 = vadd.f32 0.0, %v4264
        %v4266 = vpop.f32.mrb[0].mxu0
        %4267 = vmatprep.mubr.bf16.mxu0 0
        %4268 = vmatmul.mubr.bf16.gmra.mrb[0].mxu0 %v4189
        %v4269 = vpop.f32.mrb[0].mxu0
        %v4270 = vadd.f32 0.0, %v4269
        %v4271 = vpop.f32.mrb[0].mxu0
        %v4272 = vpop.f32.mrb[0].mxu0
        %v4273 = vadd.f32 0.0, %v4272
        %v4274 = vpop.f32.mrb[0].mxu0
        %4275 = vmatprep.mubr.bf16.mxu0 0
        %4276 = vmatmul.mubr.bf16.gmra.mrb[0].mxu0 %v4192
        %v4277 = vpop.f32.mrb[0].mxu0
        %v4278 = vadd.f32 0.0, %v4277
        %v4279 = vpop.f32.mrb[0].mxu0
        %v4280 = vpop.f32.mrb[0].mxu0
        %v4281 = vadd.f32 0.0, %v4280
        %v4282 = vpop.f32.mrb[0].mxu0
        %4283 = vmatprep.mubr.bf16.mxu0 0
        %4284 = vmatmul.mubr.bf16.gmra.mrb[0].mxu0 %v4195
        %v4285 = vpop.f32.mrb[0].mxu0
        %v4286 = vadd.f32 0.0, %v4285
        %v4287 = vpop.f32.mrb[0].mxu0
        %v4288 = vpop.f32.mrb[0].mxu0
        %v4289 = vadd.f32 0.0, %v4288
        %v4290 = vpop.f32.mrb[0].mxu0
        %4291 = vmatprep.mubr.bf16.mxu0 0
        %4292 = vmatmul.mubr.bf16.gmra.mrb[0].mxu0 %v4198
        %v4293 = vpop.f32.mrb[0].mxu0
        %v4294 = vadd.f32 0.0, %v4293
        %v4295 = vpop.f32.mrb[0].mxu0
        %v4296 = vpop.f32.mrb[0].mxu0
        %v4297 = vadd.f32 0.0, %v4296
        %v4298 = vpop.f32.mrb[0].mxu0
        %4299 = vdwg.mxu0
        %v4300 = vadd.f32 %v3119, %v4238
        %v4301 = vadd.f32 %v3122, %v4241
        %v4302 = vadd.f32 %v3127, %v4246
        %v4303 = vadd.f32 %v3130, %v4249
        %v4304 = vadd.f32 %v3135, %v4254
        %v4305 = vadd.f32 %v3138, %v4257
        %v4306 = vadd.f32 %v3143, %v4262
        %v4307 = vadd.f32 %v3146, %v4265
        %v4308 = vadd.f32 %v3151, %v4270
        %v4309 = vadd.f32 %v3154, %v4273
        %v4310 = vadd.f32 %v3159, %v4278
        %v4311 = vadd.f32 %v3162, %v4281
        %v4312 = vadd.f32 %v3167, %v4286
        %v4313 = vadd.f32 %v3170, %v4289
        %v4314 = vadd.f32 %v3175, %v4294
        %v4315 = vadd.f32 %v3178, %v4297
        %4316 = vrot.lane.b32.xlu0 %v923, 104
        %v4317 = vpop.permute.xlu0 %4316
        %4318 = vrot.lane.b32.xlu0 %v923, 72
        %v4319 = vpop.permute.xlu0 %4318
        %v4321 = vsel %vm758, %v4317, 0
        %v4324 = vsel %vm758, %v4319, 0
        %4326 = vmatprep.subr.bf16.mxu0 0
        %4327 = vmatpush1.bf16.xpose.msra.mxu0 %v4324
        %4328 = vmatprep.subr.bf16.mxu0 0
        %4329 = vmatpush1.bf16.xpose.msra.mxu0 0
        %4330 = vmatprep.subr.bf16.mxu0 0
        %4331 = vmatpush1.bf16.xpose.msra.mxu0 0
        %4332 = vmatprep.subr.bf16.mxu0 0
        %4333 = vmatpush1.bf16.xpose.msra.mxu0 0
        %4334 = vmatprep.subr.bf16.mxu0 0
        %4335 = vmatpush1.bf16.xpose.msra.mxu0 0
        %4336 = vmatprep.subr.bf16.mxu0 0
        %4337 = vmatpush1.bf16.xpose.msra.mxu0 0
        %4338 = vmatprep.subr.bf16.mxu0 0
        %4339 = vmatpush1.bf16.xpose.msra.mxu0 0
        %4340 = vmatprep.subr.bf16.mxu0 0
        %4341 = vmatpush1.bf16.xpose.msra.mxu0 0
        %4342 = vmatprep.subr.bf16.mxu0 0
        %4343 = vmatpush1.bf16.xpose.msra.mxu0 0
        %4344 = vmatprep.subr.bf16.mxu0 0
        %4345 = vmatpush1.bf16.xpose.msra.mxu0 0
        %4346 = vmatprep.subr.bf16.mxu0 0
        %4347 = vmatpush1.bf16.xpose.msra.mxu0 0
        %4348 = vmatprep.subr.bf16.mxu0 0
        %4349 = vmatpush1.bf16.xpose.msra.mxu0 0
        %4350 = vmatprep.subr.bf16.mxu0 0
        %4351 = vmatpush1.bf16.xpose.msra.mxu0 0
        %4352 = vmatprep.subr.bf16.mxu0 0
        %4353 = vmatpush1.bf16.xpose.msra.mxu0 0
        %4354 = vmatprep.subr.bf16.mxu0 0
        %4355 = vmatpush1.bf16.xpose.msra.mxu0 0
        %4356 = vmatprep.subr.bf16.mxu0 0
        %4357 = vmatpush1.bf16.xpose.msra.mxu0 0
        %4358 = vmatprep.mubr.bf16.mxu0 0
        %4359 = vmatmul.mubr.bf16.gmra.mrb[0].mxu0 %v4321
        %v4360 = vpop.f32.mrb[0].mxu0
        %v4361 = vadd.f32 0.0, %v4360
        %v4362 = vpop.f32.mrb[0].mxu0
        %v4363 = vpop.f32.mrb[0].mxu0
        %v4364 = vadd.f32 0.0, %v4363
        %v4365 = vpop.f32.mrb[0].mxu0
        %4366 = vdwg.mxu0
        %4367 = vrot.lane.b32.xlu0 %v924, 104
        %v4368 = vpop.permute.xlu0 %4367
        %4369 = vrot.lane.b32.xlu0 %v924, 72
        %v4370 = vpop.permute.xlu0 %4369
        %v4372 = vsel %vm758, %v4368, 0
        %v4375 = vsel %vm758, %v4370, 0
        %4377 = vmatprep.subr.bf16.mxu0 0
        %4378 = vmatpush1.bf16.xpose.msra.mxu0 %v4375
        %4379 = vmatprep.subr.bf16.mxu0 0
        %4380 = vmatpush1.bf16.xpose.msra.mxu0 0
        %4381 = vmatprep.subr.bf16.mxu0 0
        %4382 = vmatpush1.bf16.xpose.msra.mxu0 0
        %4383 = vmatprep.subr.bf16.mxu0 0
        %4384 = vmatpush1.bf16.xpose.msra.mxu0 0
        %4385 = vmatprep.subr.bf16.mxu0 0
        %4386 = vmatpush1.bf16.xpose.msra.mxu0 0
        %4387 = vmatprep.subr.bf16.mxu0 0
        %4388 = vmatpush1.bf16.xpose.msra.mxu0 0
        %4389 = vmatprep.subr.bf16.mxu0 0
        %4390 = vmatpush1.bf16.xpose.msra.mxu0 0
        %4391 = vmatprep.subr.bf16.mxu0 0
        %4392 = vmatpush1.bf16.xpose.msra.mxu0 0
        %4393 = vmatprep.subr.bf16.mxu0 0
        %4394 = vmatpush1.bf16.xpose.msra.mxu0 0
        %4395 = vmatprep.subr.bf16.mxu0 0
        %4396 = vmatpush1.bf16.xpose.msra.mxu0 0
        %4397 = vmatprep.subr.bf16.mxu0 0
        %4398 = vmatpush1.bf16.xpose.msra.mxu0 0
        %4399 = vmatprep.subr.bf16.mxu0 0
        %4400 = vmatpush1.bf16.xpose.msra.mxu0 0
        %4401 = vmatprep.subr.bf16.mxu0 0
        %4402 = vmatpush1.bf16.xpose.msra.mxu0 0
        %4403 = vmatprep.subr.bf16.mxu0 0
        %4404 = vmatpush1.bf16.xpose.msra.mxu0 0
        %4405 = vmatprep.subr.bf16.mxu0 0
        %4406 = vmatpush1.bf16.xpose.msra.mxu0 0
        %4407 = vmatprep.subr.bf16.mxu0 0
        %4408 = vmatpush1.bf16.xpose.msra.mxu0 0
        %4409 = vmatprep.mubr.bf16.mxu0 0
        %4410 = vmatmul.mubr.bf16.gmra.mrb[0].mxu0 %v4372
        %v4411 = vpop.f32.mrb[0].mxu0
        %v4412 = vadd.f32 0.0, %v4411
        %v4413 = vpop.f32.mrb[0].mxu0
        %v4414 = vpop.f32.mrb[0].mxu0
        %v4415 = vadd.f32 0.0, %v4414
        %v4416 = vpop.f32.mrb[0].mxu0
        %4417 = vdwg.mxu0
        %4418 = vrot.lane.b32.xlu0 %v925, 104
        %v4419 = vpop.permute.xlu0 %4418
        %4420 = vrot.lane.b32.xlu0 %v925, 72
        %v4421 = vpop.permute.xlu0 %4420
        %v4423 = vsel %vm758, %v4419, 0
        %v4426 = vsel %vm758, %v4421, 0
        %4428 = vmatprep.subr.bf16.mxu0 0
        %4429 = vmatpush1.bf16.xpose.msra.mxu0 %v4426
        %4430 = vmatprep.subr.bf16.mxu0 0
        %4431 = vmatpush1.bf16.xpose.msra.mxu0 0
        %4432 = vmatprep.subr.bf16.mxu0 0
        %4433 = vmatpush1.bf16.xpose.msra.mxu0 0
        %4434 = vmatprep.subr.bf16.mxu0 0
        %4435 = vmatpush1.bf16.xpose.msra.mxu0 0
        %4436 = vmatprep.subr.bf16.mxu0 0
        %4437 = vmatpush1.bf16.xpose.msra.mxu0 0
        %4438 = vmatprep.subr.bf16.mxu0 0
        %4439 = vmatpush1.bf16.xpose.msra.mxu0 0
        %4440 = vmatprep.subr.bf16.mxu0 0
        %4441 = vmatpush1.bf16.xpose.msra.mxu0 0
        %4442 = vmatprep.subr.bf16.mxu0 0
        %4443 = vmatpush1.bf16.xpose.msra.mxu0 0
        %4444 = vmatprep.subr.bf16.mxu0 0
        %4445 = vmatpush1.bf16.xpose.msra.mxu0 0
        %4446 = vmatprep.subr.bf16.mxu0 0
        %4447 = vmatpush1.bf16.xpose.msra.mxu0 0
        %4448 = vmatprep.subr.bf16.mxu0 0
        %4449 = vmatpush1.bf16.xpose.msra.mxu0 0
        %4450 = vmatprep.subr.bf16.mxu0 0
        %4451 = vmatpush1.bf16.xpose.msra.mxu0 0
        %4452 = vmatprep.subr.bf16.mxu0 0
        %4453 = vmatpush1.bf16.xpose.msra.mxu0 0
        %4454 = vmatprep.subr.bf16.mxu0 0
        %4455 = vmatpush1.bf16.xpose.msra.mxu0 0
        %4456 = vmatprep.subr.bf16.mxu0 0
        %4457 = vmatpush1.bf16.xpose.msra.mxu0 0
        %4458 = vmatprep.subr.bf16.mxu0 0
        %4459 = vmatpush1.bf16.xpose.msra.mxu0 0
        %4460 = vmatprep.mubr.bf16.mxu0 0
        %4461 = vmatmul.mubr.bf16.gmra.mrb[0].mxu0 %v4423
        %v4462 = vpop.f32.mrb[0].mxu0
        %v4463 = vadd.f32 0.0, %v4462
        %v4464 = vpop.f32.mrb[0].mxu0
        %v4465 = vpop.f32.mrb[0].mxu0
        %v4466 = vadd.f32 0.0, %v4465
        %v4467 = vpop.f32.mrb[0].mxu0
        %4468 = vdwg.mxu0
        %4469 = vrot.lane.b32.xlu0 %v926, 104
        %v4470 = vpop.permute.xlu0 %4469
        %4471 = vrot.lane.b32.xlu0 %v926, 72
        %v4472 = vpop.permute.xlu0 %4471
        %v4474 = vsel %vm758, %v4470, 0
        %v4477 = vsel %vm758, %v4472, 0
        %4479 = vmatprep.subr.bf16.mxu0 0
        %4480 = vmatpush1.bf16.xpose.msra.mxu0 %v4477
        %4481 = vmatprep.subr.bf16.mxu0 0
        %4482 = vmatpush1.bf16.xpose.msra.mxu0 0
        %4483 = vmatprep.subr.bf16.mxu0 0
        %4484 = vmatpush1.bf16.xpose.msra.mxu0 0
        %4485 = vmatprep.subr.bf16.mxu0 0
        %4486 = vmatpush1.bf16.xpose.msra.mxu0 0
        %4487 = vmatprep.subr.bf16.mxu0 0
        %4488 = vmatpush1.bf16.xpose.msra.mxu0 0
        %4489 = vmatprep.subr.bf16.mxu0 0
        %4490 = vmatpush1.bf16.xpose.msra.mxu0 0
        %4491 = vmatprep.subr.bf16.mxu0 0
        %4492 = vmatpush1.bf16.xpose.msra.mxu0 0
        %4493 = vmatprep.subr.bf16.mxu0 0
        %4494 = vmatpush1.bf16.xpose.msra.mxu0 0
        %4495 = vmatprep.subr.bf16.mxu0 0
        %4496 = vmatpush1.bf16.xpose.msra.mxu0 0
        %4497 = vmatprep.subr.bf16.mxu0 0
        %4498 = vmatpush1.bf16.xpose.msra.mxu0 0
        %4499 = vmatprep.subr.bf16.mxu0 0
        %4500 = vmatpush1.bf16.xpose.msra.mxu0 0
        %4501 = vmatprep.subr.bf16.mxu0 0
        %4502 = vmatpush1.bf16.xpose.msra.mxu0 0
        %4503 = vmatprep.subr.bf16.mxu0 0
        %4504 = vmatpush1.bf16.xpose.msra.mxu0 0
        %4505 = vmatprep.subr.bf16.mxu0 0
        %4506 = vmatpush1.bf16.xpose.msra.mxu0 0
        %4507 = vmatprep.subr.bf16.mxu0 0
        %4508 = vmatpush1.bf16.xpose.msra.mxu0 0
        %4509 = vmatprep.subr.bf16.mxu0 0
        %4510 = vmatpush1.bf16.xpose.msra.mxu0 0
        %4511 = vmatprep.mubr.bf16.mxu0 0
        %4512 = vmatmul.mubr.bf16.gmra.mrb[0].mxu0 %v4474
        %v4513 = vpop.f32.mrb[0].mxu0
        %v4514 = vadd.f32 0.0, %v4513
        %v4515 = vpop.f32.mrb[0].mxu0
        %v4516 = vpop.f32.mrb[0].mxu0
        %v4517 = vadd.f32 0.0, %v4516
        %v4518 = vpop.f32.mrb[0].mxu0
        %4519 = vdwg.mxu0
        %4520 = vrot.lane.b32.xlu0 %v927, 104
        %v4521 = vpop.permute.xlu0 %4520
        %4522 = vrot.lane.b32.xlu0 %v927, 72
        %v4523 = vpop.permute.xlu0 %4522
        %v4525 = vsel %vm758, %v4521, 0
        %v4528 = vsel %vm758, %v4523, 0
        %4530 = vmatprep.subr.bf16.mxu0 0
        %4531 = vmatpush1.bf16.xpose.msra.mxu0 %v4528
        %4532 = vmatprep.subr.bf16.mxu0 0
        %4533 = vmatpush1.bf16.xpose.msra.mxu0 0
        %4534 = vmatprep.subr.bf16.mxu0 0
        %4535 = vmatpush1.bf16.xpose.msra.mxu0 0
        %4536 = vmatprep.subr.bf16.mxu0 0
        %4537 = vmatpush1.bf16.xpose.msra.mxu0 0
        %4538 = vmatprep.subr.bf16.mxu0 0
        %4539 = vmatpush1.bf16.xpose.msra.mxu0 0
        %4540 = vmatprep.subr.bf16.mxu0 0
        %4541 = vmatpush1.bf16.xpose.msra.mxu0 0
        %4542 = vmatprep.subr.bf16.mxu0 0
        %4543 = vmatpush1.bf16.xpose.msra.mxu0 0
        %4544 = vmatprep.subr.bf16.mxu0 0
        %4545 = vmatpush1.bf16.xpose.msra.mxu0 0
        %4546 = vmatprep.subr.bf16.mxu0 0
        %4547 = vmatpush1.bf16.xpose.msra.mxu0 0
        %4548 = vmatprep.subr.bf16.mxu0 0
        %4549 = vmatpush1.bf16.xpose.msra.mxu0 0
        %4550 = vmatprep.subr.bf16.mxu0 0
        %4551 = vmatpush1.bf16.xpose.msra.mxu0 0
        %4552 = vmatprep.subr.bf16.mxu0 0
        %4553 = vmatpush1.bf16.xpose.msra.mxu0 0
        %4554 = vmatprep.subr.bf16.mxu0 0
        %4555 = vmatpush1.bf16.xpose.msra.mxu0 0
        %4556 = vmatprep.subr.bf16.mxu0 0
        %4557 = vmatpush1.bf16.xpose.msra.mxu0 0
        %4558 = vmatprep.subr.bf16.mxu0 0
        %4559 = vmatpush1.bf16.xpose.msra.mxu0 0
        %4560 = vmatprep.subr.bf16.mxu0 0
        %4561 = vmatpush1.bf16.xpose.msra.mxu0 0
        %4562 = vmatprep.mubr.bf16.mxu0 0
        %4563 = vmatmul.mubr.bf16.gmra.mrb[0].mxu0 %v4525
        %v4564 = vpop.f32.mrb[0].mxu0
        %v4565 = vadd.f32 0.0, %v4564
        %v4566 = vpop.f32.mrb[0].mxu0
        %v4567 = vpop.f32.mrb[0].mxu0
        %v4568 = vadd.f32 0.0, %v4567
        %v4569 = vpop.f32.mrb[0].mxu0
        %4570 = vdwg.mxu0
        %4571 = vrot.lane.b32.xlu0 %v928, 104
        %v4572 = vpop.permute.xlu0 %4571
        %4573 = vrot.lane.b32.xlu0 %v928, 72
        %v4574 = vpop.permute.xlu0 %4573
        %v4576 = vsel %vm758, %v4572, 0
        %v4579 = vsel %vm758, %v4574, 0
        %4581 = vmatprep.subr.bf16.mxu0 0
        %4582 = vmatpush1.bf16.xpose.msra.mxu0 %v4579
        %4583 = vmatprep.subr.bf16.mxu0 0
        %4584 = vmatpush1.bf16.xpose.msra.mxu0 0
        %4585 = vmatprep.subr.bf16.mxu0 0
        %4586 = vmatpush1.bf16.xpose.msra.mxu0 0
        %4587 = vmatprep.subr.bf16.mxu0 0
        %4588 = vmatpush1.bf16.xpose.msra.mxu0 0
        %4589 = vmatprep.subr.bf16.mxu0 0
        %4590 = vmatpush1.bf16.xpose.msra.mxu0 0
        %4591 = vmatprep.subr.bf16.mxu0 0
        %4592 = vmatpush1.bf16.xpose.msra.mxu0 0
        %4593 = vmatprep.subr.bf16.mxu0 0
        %4594 = vmatpush1.bf16.xpose.msra.mxu0 0
        %4595 = vmatprep.subr.bf16.mxu0 0
        %4596 = vmatpush1.bf16.xpose.msra.mxu0 0
        %4597 = vmatprep.subr.bf16.mxu0 0
        %4598 = vmatpush1.bf16.xpose.msra.mxu0 0
        %4599 = vmatprep.subr.bf16.mxu0 0
        %4600 = vmatpush1.bf16.xpose.msra.mxu0 0
        %4601 = vmatprep.subr.bf16.mxu0 0
        %4602 = vmatpush1.bf16.xpose.msra.mxu0 0
        %4603 = vmatprep.subr.bf16.mxu0 0
        %4604 = vmatpush1.bf16.xpose.msra.mxu0 0
        %4605 = vmatprep.subr.bf16.mxu0 0
        %4606 = vmatpush1.bf16.xpose.msra.mxu0 0
        %4607 = vmatprep.subr.bf16.mxu0 0
        %4608 = vmatpush1.bf16.xpose.msra.mxu0 0
        %4609 = vmatprep.subr.bf16.mxu0 0
        %4610 = vmatpush1.bf16.xpose.msra.mxu0 0
        %4611 = vmatprep.subr.bf16.mxu0 0
        %4612 = vmatpush1.bf16.xpose.msra.mxu0 0
        %4613 = vmatprep.mubr.bf16.mxu0 0
        %4614 = vmatmul.mubr.bf16.gmra.mrb[0].mxu0 %v4576
        %v4615 = vpop.f32.mrb[0].mxu0
        %v4616 = vadd.f32 0.0, %v4615
        %v4617 = vpop.f32.mrb[0].mxu0
        %v4618 = vpop.f32.mrb[0].mxu0
        %v4619 = vadd.f32 0.0, %v4618
        %v4620 = vpop.f32.mrb[0].mxu0
        %4621 = vdwg.mxu0
        %4622 = vrot.lane.b32.xlu0 %v929, 104
        %v4623 = vpop.permute.xlu0 %4622
        %4624 = vrot.lane.b32.xlu0 %v929, 72
        %v4625 = vpop.permute.xlu0 %4624
        %v4627 = vsel %vm758, %v4623, 0
        %v4630 = vsel %vm758, %v4625, 0
        %4632 = vmatprep.subr.bf16.mxu0 0
        %4633 = vmatpush1.bf16.xpose.msra.mxu0 %v4630
        %4634 = vmatprep.subr.bf16.mxu0 0
        %4635 = vmatpush1.bf16.xpose.msra.mxu0 0
        %4636 = vmatprep.subr.bf16.mxu0 0
        %4637 = vmatpush1.bf16.xpose.msra.mxu0 0
        %4638 = vmatprep.subr.bf16.mxu0 0
        %4639 = vmatpush1.bf16.xpose.msra.mxu0 0
        %4640 = vmatprep.subr.bf16.mxu0 0
        %4641 = vmatpush1.bf16.xpose.msra.mxu0 0
        %4642 = vmatprep.subr.bf16.mxu0 0
        %4643 = vmatpush1.bf16.xpose.msra.mxu0 0
        %4644 = vmatprep.subr.bf16.mxu0 0
        %4645 = vmatpush1.bf16.xpose.msra.mxu0 0
        %4646 = vmatprep.subr.bf16.mxu0 0
        %4647 = vmatpush1.bf16.xpose.msra.mxu0 0
        %4648 = vmatprep.subr.bf16.mxu0 0
        %4649 = vmatpush1.bf16.xpose.msra.mxu0 0
        %4650 = vmatprep.subr.bf16.mxu0 0
        %4651 = vmatpush1.bf16.xpose.msra.mxu0 0
        %4652 = vmatprep.subr.bf16.mxu0 0
        %4653 = vmatpush1.bf16.xpose.msra.mxu0 0
        %4654 = vmatprep.subr.bf16.mxu0 0
        %4655 = vmatpush1.bf16.xpose.msra.mxu0 0
        %4656 = vmatprep.subr.bf16.mxu0 0
        %4657 = vmatpush1.bf16.xpose.msra.mxu0 0
        %4658 = vmatprep.subr.bf16.mxu0 0
        %4659 = vmatpush1.bf16.xpose.msra.mxu0 0
        %4660 = vmatprep.subr.bf16.mxu0 0
        %4661 = vmatpush1.bf16.xpose.msra.mxu0 0
        %4662 = vmatprep.subr.bf16.mxu0 0
        %4663 = vmatpush1.bf16.xpose.msra.mxu0 0
        %4664 = vmatprep.mubr.bf16.mxu0 0
        %4665 = vmatmul.mubr.bf16.gmra.mrb[0].mxu0 %v4627
        %v4666 = vpop.f32.mrb[0].mxu0
        %v4667 = vadd.f32 0.0, %v4666
        %v4668 = vpop.f32.mrb[0].mxu0
        %v4669 = vpop.f32.mrb[0].mxu0
        %v4670 = vadd.f32 0.0, %v4669
        %v4671 = vpop.f32.mrb[0].mxu0
        %4672 = vdwg.mxu0
        %4673 = vrot.lane.b32.xlu0 %v930, 104
        %v4674 = vpop.permute.xlu0 %4673
        %4675 = vrot.lane.b32.xlu0 %v930, 72
        %v4676 = vpop.permute.xlu0 %4675
        %v4678 = vsel %vm758, %v4674, 0
        %v4681 = vsel %vm758, %v4676, 0
        %4683 = vmatprep.subr.bf16.mxu0 0
        %4684 = vmatpush1.bf16.xpose.msra.mxu0 %v4681
        %4685 = vmatprep.subr.bf16.mxu0 0
        %4686 = vmatpush1.bf16.xpose.msra.mxu0 0
        %4687 = vmatprep.subr.bf16.mxu0 0
        %4688 = vmatpush1.bf16.xpose.msra.mxu0 0
        %4689 = vmatprep.subr.bf16.mxu0 0
        %4690 = vmatpush1.bf16.xpose.msra.mxu0 0
        %4691 = vmatprep.subr.bf16.mxu0 0
        %4692 = vmatpush1.bf16.xpose.msra.mxu0 0
        %4693 = vmatprep.subr.bf16.mxu0 0
        %4694 = vmatpush1.bf16.xpose.msra.mxu0 0
        %4695 = vmatprep.subr.bf16.mxu0 0
        %4696 = vmatpush1.bf16.xpose.msra.mxu0 0
        %4697 = vmatprep.subr.bf16.mxu0 0
        %4698 = vmatpush1.bf16.xpose.msra.mxu0 0
        %4699 = vmatprep.subr.bf16.mxu0 0
        %4700 = vmatpush1.bf16.xpose.msra.mxu0 0
        %4701 = vmatprep.subr.bf16.mxu0 0
        %4702 = vmatpush1.bf16.xpose.msra.mxu0 0
        %4703 = vmatprep.subr.bf16.mxu0 0
        %4704 = vmatpush1.bf16.xpose.msra.mxu0 0
        %4705 = vmatprep.subr.bf16.mxu0 0
        %4706 = vmatpush1.bf16.xpose.msra.mxu0 0
        %4707 = vmatprep.subr.bf16.mxu0 0
        %4708 = vmatpush1.bf16.xpose.msra.mxu0 0
        %4709 = vmatprep.subr.bf16.mxu0 0
        %4710 = vmatpush1.bf16.xpose.msra.mxu0 0
        %4711 = vmatprep.subr.bf16.mxu0 0
        %4712 = vmatpush1.bf16.xpose.msra.mxu0 0
        %4713 = vmatprep.subr.bf16.mxu0 0
        %4714 = vmatpush1.bf16.xpose.msra.mxu0 0
        %4715 = vmatprep.mubr.bf16.mxu0 0
        %4716 = vmatmul.mubr.bf16.gmra.mrb[0].mxu0 %v4678
        %v4717 = vpop.f32.mrb[0].mxu0
        %v4718 = vadd.f32 0.0, %v4717
        %v4719 = vpop.f32.mrb[0].mxu0
        %v4720 = vpop.f32.mrb[0].mxu0
        %v4721 = vadd.f32 0.0, %v4720
        %v4722 = vpop.f32.mrb[0].mxu0
        %4723 = vdwg.mxu0
        %s4724 = scalar_lea.vmem [#allocation5], 48
        %v4725 = vld [vmem:[%s4724] sm:$0xff]
        %v4726 = vld [vmem:[%s4724 + $0x8] sm:$0xff]
        %v4727 = vadd.f32 %v4361, %v4725
        %v4728 = vadd.f32 %v4364, %v4726
        %v4729 = vadd.f32 %v4412, %v4725
        %v4730 = vadd.f32 %v4415, %v4726
        %v4731 = vadd.f32 %v4463, %v4725
        %v4732 = vadd.f32 %v4466, %v4726
        %v4733 = vadd.f32 %v4514, %v4725
        %v4734 = vadd.f32 %v4517, %v4726
        %v4735 = vadd.f32 %v4565, %v4725
        %v4736 = vadd.f32 %v4568, %v4726
        %v4737 = vadd.f32 %v4616, %v4725
        %v4738 = vadd.f32 %v4619, %v4726
        %v4739 = vadd.f32 %v4667, %v4725
        %v4740 = vadd.f32 %v4670, %v4726
        %v4741 = vadd.f32 %v4718, %v4725
        %v4742 = vadd.f32 %v4721, %v4726
        %v4743 = vsel %vm1361, %v4727, -inf
        %4744 = vmax.xlane.f32.xlu0 %v4743
        %v4745 = vpop.xlane.xlu0 %4744
        %v4746 = vsel %vm1361, %v4728, -inf
        %4747 = vmax.xlane.f32.xlu0 %v4746
        %v4748 = vpop.xlane.xlu0 %4747
        %v4749 = vsel %vm1361, %v4729, -inf
        %4750 = vmax.xlane.f32.xlu0 %v4749
        %v4751 = vpop.xlane.xlu0 %4750
        %v4752 = vsel %vm1361, %v4730, -inf
        %4753 = vmax.xlane.f32.xlu0 %v4752
        %v4754 = vpop.xlane.xlu0 %4753
        %v4755 = vsel %vm1361, %v4731, -inf
        %4756 = vmax.xlane.f32.xlu0 %v4755
        %v4757 = vpop.xlane.xlu0 %4756
        %v4758 = vsel %vm1361, %v4732, -inf
        %4759 = vmax.xlane.f32.xlu0 %v4758
        %v4760 = vpop.xlane.xlu0 %4759
        %v4761 = vsel %vm1361, %v4733, -inf
        %4762 = vmax.xlane.f32.xlu0 %v4761
        %v4763 = vpop.xlane.xlu0 %4762
        %v4764 = vsel %vm1361, %v4734, -inf
        %4765 = vmax.xlane.f32.xlu0 %v4764
        %v4766 = vpop.xlane.xlu0 %4765
        %v4767 = vsel %vm1361, %v4735, -inf
        %4768 = vmax.xlane.f32.xlu0 %v4767
        %v4769 = vpop.xlane.xlu0 %4768
        %v4770 = vsel %vm1361, %v4736, -inf
        %4771 = vmax.xlane.f32.xlu0 %v4770
        %v4772 = vpop.xlane.xlu0 %4771
        %v4773 = vsel %vm1361, %v4737, -inf
        %4774 = vmax.xlane.f32.xlu0 %v4773
        %v4775 = vpop.xlane.xlu0 %4774
        %v4776 = vsel %vm1361, %v4738, -inf
        %4777 = vmax.xlane.f32.xlu0 %v4776
        %v4778 = vpop.xlane.xlu0 %4777
        %v4779 = vsel %vm1361, %v4739, -inf
        %4780 = vmax.xlane.f32.xlu0 %v4779
        %v4781 = vpop.xlane.xlu0 %4780
        %v4782 = vsel %vm1361, %v4740, -inf
        %4783 = vmax.xlane.f32.xlu0 %v4782
        %v4784 = vpop.xlane.xlu0 %4783
        %v4785 = vsel %vm1361, %v4741, -inf
        %4786 = vmax.xlane.f32.xlu0 %v4785
        %v4787 = vpop.xlane.xlu0 %4786
        %v4788 = vsel %vm1361, %v4742, -inf
        %4789 = vmax.xlane.f32.xlu0 %v4788
        %v4790 = vpop.xlane.xlu0 %4789
        %v4791 = vsub.f32 %v4727, %v4745
        %v4792 = vsub.f32 %v4728, %v4748
        %v4793 = vsub.f32 %v4729, %v4751
        %v4794 = vsub.f32 %v4730, %v4754
        %v4795 = vsub.f32 %v4731, %v4757
        %v4796 = vsub.f32 %v4732, %v4760
        %v4797 = vsub.f32 %v4733, %v4763
        %v4798 = vsub.f32 %v4734, %v4766
        %v4799 = vsub.f32 %v4735, %v4769
        %v4800 = vsub.f32 %v4736, %v4772
        %v4801 = vsub.f32 %v4737, %v4775
        %v4802 = vsub.f32 %v4738, %v4778
        %v4803 = vsub.f32 %v4739, %v4781
        %v4804 = vsub.f32 %v4740, %v4784
        %v4805 = vsub.f32 %v4741, %v4787
        %v4806 = vsub.f32 %v4742, %v4790
        %v4807 = vmul.f32 %v4791, 1.442695
        %v4808 = vpow.pop %v4807
        %v4809 = vmul.f32 %v4792, 1.442695
        %v4810 = vpow.pop %v4809
        %v4811 = vmul.f32 %v4793, 1.442695
        %v4812 = vpow.pop %v4811
        %v4813 = vmul.f32 %v4794, 1.442695
        %v4814 = vpow.pop %v4813
        %v4815 = vmul.f32 %v4795, 1.442695
        %v4816 = vpow.pop %v4815
        %v4817 = vmul.f32 %v4796, 1.442695
        %v4818 = vpow.pop %v4817
        %v4819 = vmul.f32 %v4797, 1.442695
        %v4820 = vpow.pop %v4819
        %v4821 = vmul.f32 %v4798, 1.442695
        %v4822 = vpow.pop %v4821
        %v4823 = vmul.f32 %v4799, 1.442695
        %v4824 = vpow.pop %v4823
        %v4825 = vmul.f32 %v4800, 1.442695
        %v4826 = vpow.pop %v4825
        %v4827 = vmul.f32 %v4801, 1.442695
        %v4828 = vpow.pop %v4827
        %v4829 = vmul.f32 %v4802, 1.442695
        %v4830 = vpow.pop %v4829
        %v4831 = vmul.f32 %v4803, 1.442695
        %v4832 = vpow.pop %v4831
        %v4833 = vmul.f32 %v4804, 1.442695
        %v4834 = vpow.pop %v4833
        %v4835 = vmul.f32 %v4805, 1.442695
        %v4836 = vpow.pop %v4835
        %v4837 = vmul.f32 %v4806, 1.442695
        %v4838 = vpow.pop %v4837
        %v4839 = vsel %vm1361, %v4808, 0.0
        %4840 = vadd.xlane.f32.xlu0 %v4839
        %v4841 = vpop.xlane.xlu0 %4840
        %v4842 = vsel %vm1361, %v4810, 0.0
        %4843 = vadd.xlane.f32.xlu0 %v4842
        %v4844 = vpop.xlane.xlu0 %4843
        %v4845 = vsel %vm1361, %v4812, 0.0
        %4846 = vadd.xlane.f32.xlu0 %v4845
        %v4847 = vpop.xlane.xlu0 %4846
        %v4848 = vsel %vm1361, %v4814, 0.0
        %4849 = vadd.xlane.f32.xlu0 %v4848
        %v4850 = vpop.xlane.xlu0 %4849
        %v4851 = vsel %vm1361, %v4816, 0.0
        %4852 = vadd.xlane.f32.xlu0 %v4851
        %v4853 = vpop.xlane.xlu0 %4852
        %v4854 = vsel %vm1361, %v4818, 0.0
        %4855 = vadd.xlane.f32.xlu0 %v4854
        %v4856 = vpop.xlane.xlu0 %4855
        %v4857 = vsel %vm1361, %v4820, 0.0
        %4858 = vadd.xlane.f32.xlu0 %v4857
        %v4859 = vpop.xlane.xlu0 %4858
        %v4860 = vsel %vm1361, %v4822, 0.0
        %4861 = vadd.xlane.f32.xlu0 %v4860
        %v4862 = vpop.xlane.xlu0 %4861
        %v4863 = vsel %vm1361, %v4824, 0.0
        %4864 = vadd.xlane.f32.xlu0 %v4863
        %v4865 = vpop.xlane.xlu0 %4864
        %v4866 = vsel %vm1361, %v4826, 0.0
        %4867 = vadd.xlane.f32.xlu0 %v4866
        %v4868 = vpop.xlane.xlu0 %4867
        %v4869 = vsel %vm1361, %v4828, 0.0
        %4870 = vadd.xlane.f32.xlu0 %v4869
        %v4871 = vpop.xlane.xlu0 %4870
        %v4872 = vsel %vm1361, %v4830, 0.0
        %4873 = vadd.xlane.f32.xlu0 %v4872
        %v4874 = vpop.xlane.xlu0 %4873
        %v4875 = vsel %vm1361, %v4832, 0.0
        %4876 = vadd.xlane.f32.xlu0 %v4875
        %v4877 = vpop.xlane.xlu0 %4876
        %v4878 = vsel %vm1361, %v4834, 0.0
        %4879 = vadd.xlane.f32.xlu0 %v4878
        %v4880 = vpop.xlane.xlu0 %4879
        %v4881 = vsel %vm1361, %v4836, 0.0
        %4882 = vadd.xlane.f32.xlu0 %v4881
        %v4883 = vpop.xlane.xlu0 %4882
        %v4884 = vsel %vm1361, %v4838, 0.0
        %4885 = vadd.xlane.f32.xlu0 %v4884
        %v4886 = vpop.xlane.xlu0 %4885
        %v4887 = vrcp.pop %v4841
        %v4888 = vrcp.pop %v4844
        %v4889 = vrcp.pop %v4847
        %v4890 = vrcp.pop %v4850
        %v4891 = vrcp.pop %v4853
        %v4892 = vrcp.pop %v4856
        %v4893 = vrcp.pop %v4859
        %v4894 = vrcp.pop %v4862
        %v4895 = vrcp.pop %v4865
        %v4896 = vrcp.pop %v4868
        %v4897 = vrcp.pop %v4871
        %v4898 = vrcp.pop %v4874
        %v4899 = vrcp.pop %v4877
        %v4900 = vrcp.pop %v4880
        %v4901 = vrcp.pop %v4883
        %v4902 = vrcp.pop %v4886
        %v4903 = vmul.f32 %v4808, %v4887
        %v4904 = vmul.f32 %v4810, %v4888
        %v4905 = vmul.f32 %v4812, %v4889
        %v4906 = vmul.f32 %v4814, %v4890
        %v4907 = vmul.f32 %v4816, %v4891
        %v4908 = vmul.f32 %v4818, %v4892
        %v4909 = vmul.f32 %v4820, %v4893
        %v4910 = vmul.f32 %v4822, %v4894
        %v4911 = vmul.f32 %v4824, %v4895
        %v4912 = vmul.f32 %v4826, %v4896
        %v4913 = vmul.f32 %v4828, %v4897
        %v4914 = vmul.f32 %v4830, %v4898
        %v4915 = vmul.f32 %v4832, %v4899
        %v4916 = vmul.f32 %v4834, %v4900
        %v4917 = vmul.f32 %v4836, %v4901
        %v4918 = vmul.f32 %v4838, %v4902
        %v4919 = vpack.c.bf16 %v4904, %v4903
        %v4920 = vpack.c.bf16 %v4906, %v4905
        %v4921 = vpack.c.bf16 %v4908, %v4907
        %v4922 = vpack.c.bf16 %v4910, %v4909
        %v4923 = vpack.c.bf16 %v4912, %v4911
        %v4924 = vpack.c.bf16 %v4914, %v4913
        %v4925 = vpack.c.bf16 %v4916, %v4915
        %v4926 = vpack.c.bf16 %v4918, %v4917
        %4927 = vrot.lane.b32.xlu0 %v931, 40
        %v4928 = vpop.permute.xlu0 %4927
        %v4931 = vsel %vm1361, %v4919, 0
        %4933 = vmatprep.subr.bf16.mxu0 0
        %4934 = vmatpush1.bf16.msra.mxu0 %v4928
        %4935 = vmatprep.subr.bf16.mxu0 0
        %4936 = vmatpush1.bf16.msra.mxu0 0
        %4937 = vmatprep.subr.bf16.mxu0 0
        %4938 = vmatpush1.bf16.msra.mxu0 0
        %4939 = vmatprep.subr.bf16.mxu0 0
        %4940 = vmatpush1.bf16.msra.mxu0 0
        %4941 = vmatprep.subr.bf16.mxu0 0
        %4942 = vmatpush1.bf16.msra.mxu0 0
        %4943 = vmatprep.subr.bf16.mxu0 0
        %4944 = vmatpush1.bf16.msra.mxu0 0
        %4945 = vmatprep.subr.bf16.mxu0 0
        %4946 = vmatpush1.bf16.msra.mxu0 0
        %4947 = vmatprep.subr.bf16.mxu0 0
        %4948 = vmatpush1.bf16.msra.mxu0 0
        %4949 = vmatprep.subr.bf16.mxu0 0
        %4950 = vmatpush1.bf16.msra.mxu0 0
        %4951 = vmatprep.subr.bf16.mxu0 0
        %4952 = vmatpush1.bf16.msra.mxu0 0
        %4953 = vmatprep.subr.bf16.mxu0 0
        %4954 = vmatpush1.bf16.msra.mxu0 0
        %4955 = vmatprep.subr.bf16.mxu0 0
        %4956 = vmatpush1.bf16.msra.mxu0 0
        %4957 = vmatprep.subr.bf16.mxu0 0
        %4958 = vmatpush1.bf16.msra.mxu0 0
        %4959 = vmatprep.subr.bf16.mxu0 0
        %4960 = vmatpush1.bf16.msra.mxu0 0
        %4961 = vmatprep.subr.bf16.mxu0 0
        %4962 = vmatpush1.bf16.msra.mxu0 0
        %4963 = vmatprep.subr.bf16.mxu0 0
        %4964 = vmatpush1.bf16.msra.mxu0 0
        %4965 = vmatprep.mubr.bf16.mxu0 0
        %4966 = vmatmul.mubr.bf16.gmra.mrb[0].mxu0 %v4931
        %v4967 = vpop.f32.mrb[0].mxu0
        %v4968 = vadd.f32 0.0, %v4967
        %v4969 = vpop.f32.mrb[0].mxu0
        %v4970 = vpop.f32.mrb[0].mxu0
        %v4971 = vadd.f32 0.0, %v4970
        %v4972 = vpop.f32.mrb[0].mxu0
        %4973 = vdwg.mxu0
        %4974 = vrot.lane.b32.xlu0 %v932, 40
        %v4975 = vpop.permute.xlu0 %4974
        %v4978 = vsel %vm1361, %v4920, 0
        %4980 = vmatprep.subr.bf16.mxu0 0
        %4981 = vmatpush1.bf16.msra.mxu0 %v4975
        %4982 = vmatprep.subr.bf16.mxu0 0
        %4983 = vmatpush1.bf16.msra.mxu0 0
        %4984 = vmatprep.subr.bf16.mxu0 0
        %4985 = vmatpush1.bf16.msra.mxu0 0
        %4986 = vmatprep.subr.bf16.mxu0 0
        %4987 = vmatpush1.bf16.msra.mxu0 0
        %4988 = vmatprep.subr.bf16.mxu0 0
        %4989 = vmatpush1.bf16.msra.mxu0 0
        %4990 = vmatprep.subr.bf16.mxu0 0
        %4991 = vmatpush1.bf16.msra.mxu0 0
        %4992 = vmatprep.subr.bf16.mxu0 0
        %4993 = vmatpush1.bf16.msra.mxu0 0
        %4994 = vmatprep.subr.bf16.mxu0 0
        %4995 = vmatpush1.bf16.msra.mxu0 0
        %4996 = vmatprep.subr.bf16.mxu0 0
        %4997 = vmatpush1.bf16.msra.mxu0 0
        %4998 = vmatprep.subr.bf16.mxu0 0
        %4999 = vmatpush1.bf16.msra.mxu0 0
        %5000 = vmatprep.subr.bf16.mxu0 0
        %5001 = vmatpush1.bf16.msra.mxu0 0
        %5002 = vmatprep.subr.bf16.mxu0 0
        %5003 = vmatpush1.bf16.msra.mxu0 0
        %5004 = vmatprep.subr.bf16.mxu0 0
        %5005 = vmatpush1.bf16.msra.mxu0 0
        %5006 = vmatprep.subr.bf16.mxu0 0
        %5007 = vmatpush1.bf16.msra.mxu0 0
        %5008 = vmatprep.subr.bf16.mxu0 0
        %5009 = vmatpush1.bf16.msra.mxu0 0
        %5010 = vmatprep.subr.bf16.mxu0 0
        %5011 = vmatpush1.bf16.msra.mxu0 0
        %5012 = vmatprep.mubr.bf16.mxu0 0
        %5013 = vmatmul.mubr.bf16.gmra.mrb[0].mxu0 %v4978
        %v5014 = vpop.f32.mrb[0].mxu0
        %v5015 = vadd.f32 0.0, %v5014
        %v5016 = vpop.f32.mrb[0].mxu0
        %v5017 = vpop.f32.mrb[0].mxu0
        %v5018 = vadd.f32 0.0, %v5017
        %v5019 = vpop.f32.mrb[0].mxu0
        %5020 = vdwg.mxu0
        %5021 = vrot.lane.b32.xlu0 %v933, 40
        %v5022 = vpop.permute.xlu0 %5021
        %v5025 = vsel %vm1361, %v4921, 0
        %5027 = vmatprep.subr.bf16.mxu0 0
        %5028 = vmatpush1.bf16.msra.mxu0 %v5022
        %5029 = vmatprep.subr.bf16.mxu0 0
        %5030 = vmatpush1.bf16.msra.mxu0 0
        %5031 = vmatprep.subr.bf16.mxu0 0
        %5032 = vmatpush1.bf16.msra.mxu0 0
        %5033 = vmatprep.subr.bf16.mxu0 0
        %5034 = vmatpush1.bf16.msra.mxu0 0
        %5035 = vmatprep.subr.bf16.mxu0 0
        %5036 = vmatpush1.bf16.msra.mxu0 0
        %5037 = vmatprep.subr.bf16.mxu0 0
        %5038 = vmatpush1.bf16.msra.mxu0 0
        %5039 = vmatprep.subr.bf16.mxu0 0
        %5040 = vmatpush1.bf16.msra.mxu0 0
        %5041 = vmatprep.subr.bf16.mxu0 0
        %5042 = vmatpush1.bf16.msra.mxu0 0
        %5043 = vmatprep.subr.bf16.mxu0 0
        %5044 = vmatpush1.bf16.msra.mxu0 0
        %5045 = vmatprep.subr.bf16.mxu0 0
        %5046 = vmatpush1.bf16.msra.mxu0 0
        %5047 = vmatprep.subr.bf16.mxu0 0
        %5048 = vmatpush1.bf16.msra.mxu0 0
        %5049 = vmatprep.subr.bf16.mxu0 0
        %5050 = vmatpush1.bf16.msra.mxu0 0
        %5051 = vmatprep.subr.bf16.mxu0 0
        %5052 = vmatpush1.bf16.msra.mxu0 0
        %5053 = vmatprep.subr.bf16.mxu0 0
        %5054 = vmatpush1.bf16.msra.mxu0 0
        %5055 = vmatprep.subr.bf16.mxu0 0
        %5056 = vmatpush1.bf16.msra.mxu0 0
        %5057 = vmatprep.subr.bf16.mxu0 0
        %5058 = vmatpush1.bf16.msra.mxu0 0
        %5059 = vmatprep.mubr.bf16.mxu0 0
        %5060 = vmatmul.mubr.bf16.gmra.mrb[0].mxu0 %v5025
        %v5061 = vpop.f32.mrb[0].mxu0
        %v5062 = vadd.f32 0.0, %v5061
        %v5063 = vpop.f32.mrb[0].mxu0
        %v5064 = vpop.f32.mrb[0].mxu0
        %v5065 = vadd.f32 0.0, %v5064
        %v5066 = vpop.f32.mrb[0].mxu0
        %5067 = vdwg.mxu0
        %5068 = vrot.lane.b32.xlu0 %v934, 40
        %v5069 = vpop.permute.xlu0 %5068
        %v5072 = vsel %vm1361, %v4922, 0
        %5074 = vmatprep.subr.bf16.mxu0 0
        %5075 = vmatpush1.bf16.msra.mxu0 %v5069
        %5076 = vmatprep.subr.bf16.mxu0 0
        %5077 = vmatpush1.bf16.msra.mxu0 0
        %5078 = vmatprep.subr.bf16.mxu0 0
        %5079 = vmatpush1.bf16.msra.mxu0 0
        %5080 = vmatprep.subr.bf16.mxu0 0
        %5081 = vmatpush1.bf16.msra.mxu0 0
        %5082 = vmatprep.subr.bf16.mxu0 0
        %5083 = vmatpush1.bf16.msra.mxu0 0
        %5084 = vmatprep.subr.bf16.mxu0 0
        %5085 = vmatpush1.bf16.msra.mxu0 0
        %5086 = vmatprep.subr.bf16.mxu0 0
        %5087 = vmatpush1.bf16.msra.mxu0 0
        %5088 = vmatprep.subr.bf16.mxu0 0
        %5089 = vmatpush1.bf16.msra.mxu0 0
        %5090 = vmatprep.subr.bf16.mxu0 0
        %5091 = vmatpush1.bf16.msra.mxu0 0
        %5092 = vmatprep.subr.bf16.mxu0 0
        %5093 = vmatpush1.bf16.msra.mxu0 0
        %5094 = vmatprep.subr.bf16.mxu0 0
        %5095 = vmatpush1.bf16.msra.mxu0 0
        %5096 = vmatprep.subr.bf16.mxu0 0
        %5097 = vmatpush1.bf16.msra.mxu0 0
        %5098 = vmatprep.subr.bf16.mxu0 0
        %5099 = vmatpush1.bf16.msra.mxu0 0
        %5100 = vmatprep.subr.bf16.mxu0 0
        %5101 = vmatpush1.bf16.msra.mxu0 0
        %5102 = vmatprep.subr.bf16.mxu0 0
        %5103 = vmatpush1.bf16.msra.mxu0 0
        %5104 = vmatprep.subr.bf16.mxu0 0
        %5105 = vmatpush1.bf16.msra.mxu0 0
        %5106 = vmatprep.mubr.bf16.mxu0 0
        %5107 = vmatmul.mubr.bf16.gmra.mrb[0].mxu0 %v5072
        %v5108 = vpop.f32.mrb[0].mxu0
        %v5109 = vadd.f32 0.0, %v5108
        %v5110 = vpop.f32.mrb[0].mxu0
        %v5111 = vpop.f32.mrb[0].mxu0
        %v5112 = vadd.f32 0.0, %v5111
        %v5113 = vpop.f32.mrb[0].mxu0
        %5114 = vdwg.mxu0
        %5115 = vrot.lane.b32.xlu0 %v935, 40
        %v5116 = vpop.permute.xlu0 %5115
        %v5119 = vsel %vm1361, %v4923, 0
        %5121 = vmatprep.subr.bf16.mxu0 0
        %5122 = vmatpush1.bf16.msra.mxu0 %v5116
        %5123 = vmatprep.subr.bf16.mxu0 0
        %5124 = vmatpush1.bf16.msra.mxu0 0
        %5125 = vmatprep.subr.bf16.mxu0 0
        %5126 = vmatpush1.bf16.msra.mxu0 0
        %5127 = vmatprep.subr.bf16.mxu0 0
        %5128 = vmatpush1.bf16.msra.mxu0 0
        %5129 = vmatprep.subr.bf16.mxu0 0
        %5130 = vmatpush1.bf16.msra.mxu0 0
        %5131 = vmatprep.subr.bf16.mxu0 0
        %5132 = vmatpush1.bf16.msra.mxu0 0
        %5133 = vmatprep.subr.bf16.mxu0 0
        %5134 = vmatpush1.bf16.msra.mxu0 0
        %5135 = vmatprep.subr.bf16.mxu0 0
        %5136 = vmatpush1.bf16.msra.mxu0 0
        %5137 = vmatprep.subr.bf16.mxu0 0
        %5138 = vmatpush1.bf16.msra.mxu0 0
        %5139 = vmatprep.subr.bf16.mxu0 0
        %5140 = vmatpush1.bf16.msra.mxu0 0
        %5141 = vmatprep.subr.bf16.mxu0 0
        %5142 = vmatpush1.bf16.msra.mxu0 0
        %5143 = vmatprep.subr.bf16.mxu0 0
        %5144 = vmatpush1.bf16.msra.mxu0 0
        %5145 = vmatprep.subr.bf16.mxu0 0
        %5146 = vmatpush1.bf16.msra.mxu0 0
        %5147 = vmatprep.subr.bf16.mxu0 0
        %5148 = vmatpush1.bf16.msra.mxu0 0
        %5149 = vmatprep.subr.bf16.mxu0 0
        %5150 = vmatpush1.bf16.msra.mxu0 0
        %5151 = vmatprep.subr.bf16.mxu0 0
        %5152 = vmatpush1.bf16.msra.mxu0 0
        %5153 = vmatprep.mubr.bf16.mxu0 0
        %5154 = vmatmul.mubr.bf16.gmra.mrb[0].mxu0 %v5119
        %v5155 = vpop.f32.mrb[0].mxu0
        %v5156 = vadd.f32 0.0, %v5155
        %v5157 = vpop.f32.mrb[0].mxu0
        %v5158 = vpop.f32.mrb[0].mxu0
        %v5159 = vadd.f32 0.0, %v5158
        %v5160 = vpop.f32.mrb[0].mxu0
        %5161 = vdwg.mxu0
        %5162 = vrot.lane.b32.xlu0 %v936, 40
        %v5163 = vpop.permute.xlu0 %5162
        %v5166 = vsel %vm1361, %v4924, 0
        %5168 = vmatprep.subr.bf16.mxu0 0
        %5169 = vmatpush1.bf16.msra.mxu0 %v5163
        %5170 = vmatprep.subr.bf16.mxu0 0
        %5171 = vmatpush1.bf16.msra.mxu0 0
        %5172 = vmatprep.subr.bf16.mxu0 0
        %5173 = vmatpush1.bf16.msra.mxu0 0
        %5174 = vmatprep.subr.bf16.mxu0 0
        %5175 = vmatpush1.bf16.msra.mxu0 0
        %5176 = vmatprep.subr.bf16.mxu0 0
        %5177 = vmatpush1.bf16.msra.mxu0 0
        %5178 = vmatprep.subr.bf16.mxu0 0
        %5179 = vmatpush1.bf16.msra.mxu0 0
        %5180 = vmatprep.subr.bf16.mxu0 0
        %5181 = vmatpush1.bf16.msra.mxu0 0
        %5182 = vmatprep.subr.bf16.mxu0 0
        %5183 = vmatpush1.bf16.msra.mxu0 0
        %5184 = vmatprep.subr.bf16.mxu0 0
        %5185 = vmatpush1.bf16.msra.mxu0 0
        %5186 = vmatprep.subr.bf16.mxu0 0
        %5187 = vmatpush1.bf16.msra.mxu0 0
        %5188 = vmatprep.subr.bf16.mxu0 0
        %5189 = vmatpush1.bf16.msra.mxu0 0
        %5190 = vmatprep.subr.bf16.mxu0 0
        %5191 = vmatpush1.bf16.msra.mxu0 0
        %5192 = vmatprep.subr.bf16.mxu0 0
        %5193 = vmatpush1.bf16.msra.mxu0 0
        %5194 = vmatprep.subr.bf16.mxu0 0
        %5195 = vmatpush1.bf16.msra.mxu0 0
        %5196 = vmatprep.subr.bf16.mxu0 0
        %5197 = vmatpush1.bf16.msra.mxu0 0
        %5198 = vmatprep.subr.bf16.mxu0 0
        %5199 = vmatpush1.bf16.msra.mxu0 0
        %5200 = vmatprep.mubr.bf16.mxu0 0
        %5201 = vmatmul.mubr.bf16.gmra.mrb[0].mxu0 %v5166
        %v5202 = vpop.f32.mrb[0].mxu0
        %v5203 = vadd.f32 0.0, %v5202
        %v5204 = vpop.f32.mrb[0].mxu0
        %v5205 = vpop.f32.mrb[0].mxu0
        %v5206 = vadd.f32 0.0, %v5205
        %v5207 = vpop.f32.mrb[0].mxu0
        %5208 = vdwg.mxu0
        %5209 = vrot.lane.b32.xlu0 %v937, 40
        %v5210 = vpop.permute.xlu0 %5209
        %v5213 = vsel %vm1361, %v4925, 0
        %5215 = vmatprep.subr.bf16.mxu0 0
        %5216 = vmatpush1.bf16.msra.mxu0 %v5210
        %5217 = vmatprep.subr.bf16.mxu0 0
        %5218 = vmatpush1.bf16.msra.mxu0 0
        %5219 = vmatprep.subr.bf16.mxu0 0
        %5220 = vmatpush1.bf16.msra.mxu0 0
        %5221 = vmatprep.subr.bf16.mxu0 0
        %5222 = vmatpush1.bf16.msra.mxu0 0
        %5223 = vmatprep.subr.bf16.mxu0 0
        %5224 = vmatpush1.bf16.msra.mxu0 0
        %5225 = vmatprep.subr.bf16.mxu0 0
        %5226 = vmatpush1.bf16.msra.mxu0 0
        %5227 = vmatprep.subr.bf16.mxu0 0
        %5228 = vmatpush1.bf16.msra.mxu0 0
        %5229 = vmatprep.subr.bf16.mxu0 0
        %5230 = vmatpush1.bf16.msra.mxu0 0
        %5231 = vmatprep.subr.bf16.mxu0 0
        %5232 = vmatpush1.bf16.msra.mxu0 0
        %5233 = vmatprep.subr.bf16.mxu0 0
        %5234 = vmatpush1.bf16.msra.mxu0 0
        %5235 = vmatprep.subr.bf16.mxu0 0
        %5236 = vmatpush1.bf16.msra.mxu0 0
        %5237 = vmatprep.subr.bf16.mxu0 0
        %5238 = vmatpush1.bf16.msra.mxu0 0
        %5239 = vmatprep.subr.bf16.mxu0 0
        %5240 = vmatpush1.bf16.msra.mxu0 0
        %5241 = vmatprep.subr.bf16.mxu0 0
        %5242 = vmatpush1.bf16.msra.mxu0 0
        %5243 = vmatprep.subr.bf16.mxu0 0
        %5244 = vmatpush1.bf16.msra.mxu0 0
        %5245 = vmatprep.subr.bf16.mxu0 0
        %5246 = vmatpush1.bf16.msra.mxu0 0
        %5247 = vmatprep.mubr.bf16.mxu0 0
        %5248 = vmatmul.mubr.bf16.gmra.mrb[0].mxu0 %v5213
        %v5249 = vpop.f32.mrb[0].mxu0
        %v5250 = vadd.f32 0.0, %v5249
        %v5251 = vpop.f32.mrb[0].mxu0
        %v5252 = vpop.f32.mrb[0].mxu0
        %v5253 = vadd.f32 0.0, %v5252
        %v5254 = vpop.f32.mrb[0].mxu0
        %5255 = vdwg.mxu0
        %5256 = vrot.lane.b32.xlu0 %v938, 40
        %v5257 = vpop.permute.xlu0 %5256
        %v5260 = vsel %vm1361, %v4926, 0
        %5262 = vmatprep.subr.bf16.mxu0 0
        %5263 = vmatpush1.bf16.msra.mxu0 %v5257
        %5264 = vmatprep.subr.bf16.mxu0 0
        %5265 = vmatpush1.bf16.msra.mxu0 0
        %5266 = vmatprep.subr.bf16.mxu0 0
        %5267 = vmatpush1.bf16.msra.mxu0 0
        %5268 = vmatprep.subr.bf16.mxu0 0
        %5269 = vmatpush1.bf16.msra.mxu0 0
        %5270 = vmatprep.subr.bf16.mxu0 0
        %5271 = vmatpush1.bf16.msra.mxu0 0
        %5272 = vmatprep.subr.bf16.mxu0 0
        %5273 = vmatpush1.bf16.msra.mxu0 0
        %5274 = vmatprep.subr.bf16.mxu0 0
        %5275 = vmatpush1.bf16.msra.mxu0 0
        %5276 = vmatprep.subr.bf16.mxu0 0
        %5277 = vmatpush1.bf16.msra.mxu0 0
        %5278 = vmatprep.subr.bf16.mxu0 0
        %5279 = vmatpush1.bf16.msra.mxu0 0
        %5280 = vmatprep.subr.bf16.mxu0 0
        %5281 = vmatpush1.bf16.msra.mxu0 0
        %5282 = vmatprep.subr.bf16.mxu0 0
        %5283 = vmatpush1.bf16.msra.mxu0 0
        %5284 = vmatprep.subr.bf16.mxu0 0
        %5285 = vmatpush1.bf16.msra.mxu0 0
        %5286 = vmatprep.subr.bf16.mxu0 0
        %5287 = vmatpush1.bf16.msra.mxu0 0
        %5288 = vmatprep.subr.bf16.mxu0 0
        %5289 = vmatpush1.bf16.msra.mxu0 0
        %5290 = vmatprep.subr.bf16.mxu0 0
        %5291 = vmatpush1.bf16.msra.mxu0 0
        %5292 = vmatprep.subr.bf16.mxu0 0
        %5293 = vmatpush1.bf16.msra.mxu0 0
        %5294 = vmatprep.mubr.bf16.mxu0 0
        %5295 = vmatmul.mubr.bf16.gmra.mrb[0].mxu0 %v5260
        %v5296 = vpop.f32.mrb[0].mxu0
        %v5297 = vadd.f32 0.0, %v5296
        %v5298 = vpop.f32.mrb[0].mxu0
        %v5299 = vpop.f32.mrb[0].mxu0
        %v5300 = vadd.f32 0.0, %v5299
        %v5301 = vpop.f32.mrb[0].mxu0
        %5302 = vdwg.mxu0
        %v5303 = vpack.c.bf16 %v4971, %v4968
        %v5304 = vpack.c.bf16 %v5018, %v5015
        %v5305 = vpack.c.bf16 %v5065, %v5062
        %v5306 = vpack.c.bf16 %v5112, %v5109
        %v5307 = vpack.c.bf16 %v5159, %v5156
        %v5308 = vpack.c.bf16 %v5206, %v5203
        %v5309 = vpack.c.bf16 %v5253, %v5250
        %v5310 = vpack.c.bf16 %v5300, %v5297
        %v5312 = vsel %vm758, %v5303, 0
        %v5315 = vsel %vm758, %v5304, 0
        %v5318 = vsel %vm758, %v5305, 0
        %v5321 = vsel %vm758, %v5306, 0
        %v5324 = vsel %vm758, %v5307, 0
        %v5327 = vsel %vm758, %v5308, 0
        %v5330 = vsel %vm758, %v5309, 0
        %v5333 = vsel %vm758, %v5310, 0
        %v5336 = vsel %vm783, %v942, 0
        %5338 = vmatprep.subr.bf16.mxu0 0
        %5339 = vmatpush1.bf16.msra.mxu0 %v5336
        %5340 = vmatprep.subr.bf16.mxu0 0
        %5341 = vmatpush1.bf16.msra.mxu0 0
        %5342 = vmatprep.subr.bf16.mxu0 0
        %5343 = vmatpush1.bf16.msra.mxu0 0
        %5344 = vmatprep.subr.bf16.mxu0 0
        %5345 = vmatpush1.bf16.msra.mxu0 0
        %5346 = vmatprep.subr.bf16.mxu0 0
        %5347 = vmatpush1.bf16.msra.mxu0 0
        %5348 = vmatprep.subr.bf16.mxu0 0
        %5349 = vmatpush1.bf16.msra.mxu0 0
        %5350 = vmatprep.subr.bf16.mxu0 0
        %5351 = vmatpush1.bf16.msra.mxu0 0
        %5352 = vmatprep.subr.bf16.mxu0 0
        %5353 = vmatpush1.bf16.msra.mxu0 0
        %5354 = vmatprep.subr.bf16.mxu0 0
        %5355 = vmatpush1.bf16.msra.mxu0 0
        %5356 = vmatprep.subr.bf16.mxu0 0
        %5357 = vmatpush1.bf16.msra.mxu0 0
        %5358 = vmatprep.subr.bf16.mxu0 0
        %5359 = vmatpush1.bf16.msra.mxu0 0
        %5360 = vmatprep.subr.bf16.mxu0 0
        %5361 = vmatpush1.bf16.msra.mxu0 0
        %5362 = vmatprep.subr.bf16.mxu0 0
        %5363 = vmatpush1.bf16.msra.mxu0 0
        %5364 = vmatprep.subr.bf16.mxu0 0
        %5365 = vmatpush1.bf16.msra.mxu0 0
        %5366 = vmatprep.subr.bf16.mxu0 0
        %5367 = vmatpush1.bf16.msra.mxu0 0
        %5368 = vmatprep.subr.bf16.mxu0 0
        %5369 = vmatpush1.bf16.msra.mxu0 0
        %5370 = vmatprep.mubr.bf16.mxu0 0
        %5371 = vmatmul.mubr.bf16.gmra.mrb[0].mxu0 %v5312
        %v5372 = vpop.f32.mrb[0].mxu0
        %v5373 = vadd.f32 0.0, %v5372
        %v5374 = vpop.f32.mrb[0].mxu0
        %v5375 = vpop.f32.mrb[0].mxu0
        %v5376 = vadd.f32 0.0, %v5375
        %v5377 = vpop.f32.mrb[0].mxu0
        %5378 = vmatprep.mubr.bf16.mxu0 0
        %5379 = vmatmul.mubr.bf16.gmra.mrb[0].mxu0 %v5315
        %v5380 = vpop.f32.mrb[0].mxu0
        %v5381 = vadd.f32 0.0, %v5380
        %v5382 = vpop.f32.mrb[0].mxu0
        %v5383 = vpop.f32.mrb[0].mxu0
        %v5384 = vadd.f32 0.0, %v5383
        %v5385 = vpop.f32.mrb[0].mxu0
        %5386 = vmatprep.mubr.bf16.mxu0 0
        %5387 = vmatmul.mubr.bf16.gmra.mrb[0].mxu0 %v5318
        %v5388 = vpop.f32.mrb[0].mxu0
        %v5389 = vadd.f32 0.0, %v5388
        %v5390 = vpop.f32.mrb[0].mxu0
        %v5391 = vpop.f32.mrb[0].mxu0
        %v5392 = vadd.f32 0.0, %v5391
        %v5393 = vpop.f32.mrb[0].mxu0
        %5394 = vmatprep.mubr.bf16.mxu0 0
        %5395 = vmatmul.mubr.bf16.gmra.mrb[0].mxu0 %v5321
        %v5396 = vpop.f32.mrb[0].mxu0
        %v5397 = vadd.f32 0.0, %v5396
        %v5398 = vpop.f32.mrb[0].mxu0
        %v5399 = vpop.f32.mrb[0].mxu0
        %v5400 = vadd.f32 0.0, %v5399
        %v5401 = vpop.f32.mrb[0].mxu0
        %5402 = vmatprep.mubr.bf16.mxu0 0
        %5403 = vmatmul.mubr.bf16.gmra.mrb[0].mxu0 %v5324
        %v5404 = vpop.f32.mrb[0].mxu0
        %v5405 = vadd.f32 0.0, %v5404
        %v5406 = vpop.f32.mrb[0].mxu0
        %v5407 = vpop.f32.mrb[0].mxu0
        %v5408 = vadd.f32 0.0, %v5407
        %v5409 = vpop.f32.mrb[0].mxu0
        %5410 = vmatprep.mubr.bf16.mxu0 0
        %5411 = vmatmul.mubr.bf16.gmra.mrb[0].mxu0 %v5327
        %v5412 = vpop.f32.mrb[0].mxu0
        %v5413 = vadd.f32 0.0, %v5412
        %v5414 = vpop.f32.mrb[0].mxu0
        %v5415 = vpop.f32.mrb[0].mxu0
        %v5416 = vadd.f32 0.0, %v5415
        %v5417 = vpop.f32.mrb[0].mxu0
        %5418 = vmatprep.mubr.bf16.mxu0 0
        %5419 = vmatmul.mubr.bf16.gmra.mrb[0].mxu0 %v5330
        %v5420 = vpop.f32.mrb[0].mxu0
        %v5421 = vadd.f32 0.0, %v5420
        %v5422 = vpop.f32.mrb[0].mxu0
        %v5423 = vpop.f32.mrb[0].mxu0
        %v5424 = vadd.f32 0.0, %v5423
        %v5425 = vpop.f32.mrb[0].mxu0
        %5426 = vmatprep.mubr.bf16.mxu0 0
        %5427 = vmatmul.mubr.bf16.gmra.mrb[0].mxu0 %v5333
        %v5428 = vpop.f32.mrb[0].mxu0
        %v5429 = vadd.f32 0.0, %v5428
        %v5430 = vpop.f32.mrb[0].mxu0
        %v5431 = vpop.f32.mrb[0].mxu0
        %v5432 = vadd.f32 0.0, %v5431
        %v5433 = vpop.f32.mrb[0].mxu0
        %5434 = vdwg.mxu0
        %v5435 = vadd.f32 %v4300, %v5373
        %v5436 = vadd.f32 %v4301, %v5376
        %v5437 = vadd.f32 %v4302, %v5381
        %v5438 = vadd.f32 %v4303, %v5384
        %v5439 = vadd.f32 %v4304, %v5389
        %v5440 = vadd.f32 %v4305, %v5392
        %v5441 = vadd.f32 %v4306, %v5397
        %v5442 = vadd.f32 %v4307, %v5400
        %v5443 = vadd.f32 %v4308, %v5405
        %v5444 = vadd.f32 %v4309, %v5408
        %v5445 = vadd.f32 %v4310, %v5413
        %v5446 = vadd.f32 %v4311, %v5416
        %v5447 = vadd.f32 %v4312, %v5421
        %v5448 = vadd.f32 %v4313, %v5424
        %v5449 = vadd.f32 %v4314, %v5429
        %v5450 = vadd.f32 %v4315, %v5432
        %v5451 = vld [vmem:[%s8] sm:$0x1]
        %v5453 = vlaneseq
        %v5454 = vshrl.u32 %v5453, 7
        %v5455 = vsub.s32 0, %v5454
        %v5456 = vrot.slane %v5451, %v5455
        %v5458 = vadd.f32 %v5435, %v5456
        %v5459 = vadd.f32 %v5436, %v5456
        %v5460 = vadd.f32 %v5437, %v5456
        %v5461 = vadd.f32 %v5438, %v5456
        %v5462 = vadd.f32 %v5439, %v5456
        %v5463 = vadd.f32 %v5440, %v5456
        %v5464 = vadd.f32 %v5441, %v5456
        %v5465 = vadd.f32 %v5442, %v5456
        %v5466 = vadd.f32 %v5443, %v5456
        %v5467 = vadd.f32 %v5444, %v5456
        %v5468 = vadd.f32 %v5445, %v5456
        %v5469 = vadd.f32 %v5446, %v5456
        %v5470 = vadd.f32 %v5447, %v5456
        %v5471 = vadd.f32 %v5448, %v5456
        %v5472 = vadd.f32 %v5449, %v5456
        %v5473 = vadd.f32 %v5450, %v5456
        %v5474 = vpack.c.bf16 %v5459, %v5458
        %v5475 = vpack.c.bf16 %v5461, %v5460
        %v5476 = vpack.c.bf16 %v5463, %v5462
        %v5477 = vpack.c.bf16 %v5465, %v5464
        %v5478 = vpack.c.bf16 %v5467, %v5466
        %v5479 = vpack.c.bf16 %v5469, %v5468
        %v5480 = vpack.c.bf16 %v5471, %v5470
        %v5481 = vpack.c.bf16 %v5473, %v5472
        %v5490 = vunpack.c.l.b16 %v5474
        %v5491 = vunpack.c.h.b16 %v5474
        %v5492 = vunpack.c.l.b16 %v5475
        %v5493 = vunpack.c.h.b16 %v5475
        %v5494 = vunpack.c.l.b16 %v5476
        %v5495 = vunpack.c.h.b16 %v5476
        %v5496 = vunpack.c.l.b16 %v5477
        %v5497 = vunpack.c.h.b16 %v5477
        %v5498 = vunpack.c.l.b16 %v5478
        %v5499 = vunpack.c.h.b16 %v5478
        %v5500 = vunpack.c.l.b16 %v5479
        %v5501 = vunpack.c.h.b16 %v5479
        %v5502 = vunpack.c.l.b16 %v5480
        %v5503 = vunpack.c.h.b16 %v5480
        %v5504 = vunpack.c.l.b16 %v5481
        %v5505 = vunpack.c.h.b16 %v5481
        %v5506 = vpack.c.b16 %v5490, %v5490
        %v5507 = vpack.c.b16 %v5491, %v5491
        %v5508 = vpack.c.b16 %v5492, %v5492
        %v5509 = vpack.c.b16 %v5493, %v5493
        %v5510 = vpack.c.b16 %v5494, %v5494
        %v5511 = vpack.c.b16 %v5495, %v5495
        %v5512 = vpack.c.b16 %v5496, %v5496
        %v5513 = vpack.c.b16 %v5497, %v5497
        %v5514 = vpack.c.b16 %v5498, %v5498
        %v5515 = vpack.c.b16 %v5499, %v5499
        %v5516 = vpack.c.b16 %v5500, %v5500
        %v5517 = vpack.c.b16 %v5501, %v5501
        %v5518 = vpack.c.b16 %v5502, %v5502
        %v5519 = vpack.c.b16 %v5503, %v5503
        %v5520 = vpack.c.b16 %v5504, %v5504
        %v5521 = vpack.c.b16 %v5505, %v5505
        %vm5538 = vcmask 257024
        %5539 = vst.msk [vmem:[%s366] sm:$0xf] %vm5538, %v5506
        %5540 = vst.msk [vmem:[%s366 + $0x4] sm:$0xf] %vm5538, %v5507
        %5541 = vst.msk [vmem:[%s366 + $0x8] sm:$0xf] %vm5538, %v5508
        %5542 = vst.msk [vmem:[%s366 + $0xc] sm:$0xf] %vm5538, %v5509
        %5543 = vst.msk [vmem:[%s366 + $0x10] sm:$0xf] %vm5538, %v5510
        %5544 = vst.msk [vmem:[%s366 + $0x14] sm:$0xf] %vm5538, %v5511
        %5545 = vst.msk [vmem:[%s366 + $0x18] sm:$0xf] %vm5538, %v5512
        %5546 = vst.msk [vmem:[%s366 + $0x1c] sm:$0xf] %vm5538, %v5513
        %5547 = vst.msk [vmem:[%s366 + $0x20] sm:$0xf] %vm5538, %v5514
        %5548 = vst.msk [vmem:[%s366 + $0x24] sm:$0xf] %vm5538, %v5515
        %5549 = vst.msk [vmem:[%s366 + $0x28] sm:$0xf] %vm5538, %v5516
        %5550 = vst.msk [vmem:[%s366 + $0x2c] sm:$0xf] %vm5538, %v5517
        %5551 = vst.msk [vmem:[%s366 + $0x30] sm:$0xf] %vm5538, %v5518
        %5552 = vst.msk [vmem:[%s366 + $0x34] sm:$0xf] %vm5538, %v5519
        %5553 = vst.msk [vmem:[%s366 + $0x38] sm:$0xf] %vm5538, %v5520
        %5554 = vst.msk [vmem:[%s366 + $0x3c] sm:$0xf] %vm5538, %v5521
        %s5555 = sand.u32 %s229, 1
        %s5556 = scalar_lea.sflag [#allocation4], %s5555
        %s5557 = sand.u32 %s229, 1
        %s5558 = smul.addr %s5557, 64
        %s5559 = scalar_lea.vmem [#allocation7], %s5558
        // Predicated region
        $region65: #{tpu_custom_call.1} parent=55 // pred_check
          %p5560 = pneg %p239
        $region66: #{tpu_custom_call.1} parent=55 // pred_check_branch
          %5562 = sbr.rel (%p5560) target = $region68
        $region67: #{tpu_custom_call.1} parent=55 // pred_region
          %s5563 = smul.u32 8, %s27
          %s5565 = ssub.s32 1024, 1024
          %5566 = vsyncadd %s5556, %s5565
          %s5567 = smul.addr %s5563, 2
          %s5568 = smul.addr %s5567, 64
          %s5569 = scalar_lea.hbm %s9, %s5568
          %s5570 = sshll.u32 %s5559, 4
          %s5571 = int_to_ptr.vmem [resolvable:$true] %s5570
          %5576 = dma.vmem_to_hbm [thread:$0]  %s5571, 1024, %s5569, %s5556, 64, 64, 4
        $region68: #{tpu_custom_call.1} parent=55 // pred_fallthru
          _
      $region56: #{tpu_custom_call.1} parent=5 // pred_fallthru
        _
      %p5577 = scmp.le.s32.totalorder 2, %s22
      // Predicated region
      $region69: #{tpu_custom_call.1} parent=5 // pred_check
        %p5578 = pneg %p5577
      $region70: #{tpu_custom_call.1} parent=5 // pred_check_branch
        %5580 = sbr.rel (%p5578) target = $region72
      $region71: #{tpu_custom_call.1} parent=5 // pred_region
        %s5581 = ssub.s32 %s22, 2
        // Predicated region
        $region73: #{tpu_custom_call.1} parent=71 // pred_check
          %p5582 = pneg %p245
        $region74: #{tpu_custom_call.1} parent=71 // pred_check_branch
          %5584 = sbr.rel (%p5582) target = $region76
        $region75: #{tpu_custom_call.1} parent=71 // pred_region
          %s5585 = sand.u32 %s230, 1
          %s5586 = scalar_lea.sflag [#allocation4], %s5585
          %s5587 = sand.u32 %s230, 1
          %s5588 = smul.addr %s5587, 64
          %s5589 = scalar_lea.vmem [#allocation7], %s5588
          %5590 = dma.done %s5586, 1024
        $region76: #{tpu_custom_call.1} parent=71 // pred_fallthru
          _
      $region72: #{tpu_custom_call.1} parent=5 // pred_fallthru
        _
    $region6: #{tpu_custom_call.1} parent=1 // loop_footer
      %s26 = sadd.s32 1, %s22
    $region7: #{tpu_custom_call.1} parent=1 // loop_footer_branch
      %21 = sbr.rel target = $region3
    $region8: #{tpu_custom_call.1} parent=1 // loop_exit
      _
    %5591 = vsyncpa [#allocation3], 1
    %s5592 = scalar_lea.sflag [#allocation3], 1
    %5593 = vsyncpa %s5592, 1
    %5594 = vsyncpa [#allocation6], 1
    %5595 = vsyncpa [#allocation4], 1
    %s5596 = scalar_lea.sflag [#allocation4], 1
    %5597 = vsyncpa %s5596, 1

</llo_original>
